<compile_context>
chip_gen: v7x
topology: tpu7x:2x2x1
jax: 0.10.0
libtpu: 0.0.40
codegen_flags: <defaults>
</compile_context>

<pallas_src>
import functools

import jax
import jax.numpy as jnp
from jax.experimental import pallas as pl
from jax.experimental.pallas import tpu as pltpu

WINDOW = 7
PAD = WINDOW // 2
_LANE = 128


def _block_banded(total, block):
    """(total, total) f32: M[i, j] = 1 iff |i-j| <= PAD and i, j are in the
    same `block`-sized slot.  Generated in-kernel from iotas (no HBM input).
    Slot index is computed as floor((i + 0.5) / block) to avoid vector
    integer division."""
    ii = jax.lax.broadcasted_iota(jnp.int32, (total, total), 0)
    jj = jax.lax.broadcasted_iota(jnp.int32, (total, total), 1)
    band = jnp.abs(ii - jj) <= PAD
    inv = 1.0 / float(block)
    si = jnp.floor((ii.astype(jnp.float32) + 0.5) * inv)
    sj = jnp.floor((jj.astype(jnp.float32) + 0.5) * inv)
    return jnp.where(band & (si == sj), 1.0, 0.0).astype(jnp.float32)


def _lncc_kernel(x_ref, y_ref, out_ref, *, BB, H, W, Wp, CB):
    # x_ref, y_ref: (BB, H, Wp) lane-packed image blocks; out_ref: (8, 128).
    GH = CB * H            # rows per column-pass group (~128 when H < 128)
    G = BB // CB           # column-pass groups per grid step (<= ~16)
    K5 = 5 * Wp            # five maps side by side along lanes
    wn_inv = 1.0 / float(WINDOW * WINDOW)

    x = x_ref[...].reshape(BB * H, Wp)
    y = y_ref[...].reshape(BB * H, Wp)

    # Five maps lane-concatenated -> ONE row-pass matmul per grid step.
    maps = jnp.concatenate([x, y, x * x, y * y, x * y], axis=1)   # (BB*H, 5*Wp)

    # Filter matrices generated in-kernel.
    a5 = _block_banded(K5, W)     # (5*Wp, 5*Wp): banded within each W slot
    bg = _block_banded(GH, H)     # (GH,  GH):    banded within each H slot

    # Row pass (W-window sum): one MXU matmul, M = BB*H, K = N = 5*Wp.
    # precision=DEFAULT is an explicit choice (same as the conv reference).
    rs = jnp.dot(maps, a5, preferred_element_type=jnp.float32,
                 precision=jax.lax.Precision.DEFAULT)             # (BB*H, 5*Wp)

    acc = None
    for gi in range(G):           # bounded static unroll (G <= ~16)
        blk = rs[gi * GH:(gi + 1) * GH, :]                        # (GH, 5*Wp)
        # Column pass (H-window sum): N = 5*Wp lanes per matmul.
        cs = jnp.dot(bg, blk, preferred_element_type=jnp.float32,
                     precision=jax.lax.Precision.DEFAULT)         # (GH, 5*Wp)
        xs = cs[:, 0:Wp]
        ys = cs[:, Wp:2 * Wp]
        xxs = cs[:, 2 * Wp:3 * Wp]
        yys = cs[:, 3 * Wp:4 * Wp]
        xys = cs[:, 4 * Wp:5 * Wp]

        cov = xys - xs * ys * wn_inv
        x_var = xxs - xs * xs * wn_inv
        y_var = yys - ys * ys * wn_inv
        lncc = cov * cov / (x_var * y_var + 1e-5)
        acc = lncc if acc is None else acc + lncc

    partial = jnp.sum(acc)        # one cross-lane/sublane reduce per grid step

    # Lane-dense, unmasked (8, 128) store: partial at [0, 0], zeros elsewhere.
    row = jax.lax.broadcasted_iota(jnp.int32, (8, 128), 0)
    col = jax.lax.broadcasted_iota(jnp.int32, (8, 128), 1)
    out_ref[...] = jnp.where((row == 0) & (col == 0), partial, 0.0)


def lncc_loss(x, y):
    """x, y: (N, 1, H, W). Returns scalar -mean(lncc), matching LNCCLoss."""
    assert x.shape == y.shape and x.ndim == 4 and x.shape[1] == 1
    N, _, H, W = x.shape
    x2 = x[:, 0].astype(jnp.float32)
    y2 = y[:, 0].astype(jnp.float32)

    # Lane packing: g = 128 // W images side-by-side along lanes (all-zero pad
    # images contribute exactly 0 to the lncc sum).
    g = max(1, _LANE // W)
    Np = pl.cdiv(N, g) * g
    if Np != N:
        x2 = jnp.pad(x2, ((0, Np - N), (0, 0), (0, 0)))
        y2 = jnp.pad(y2, ((0, Np - N), (0, 0), (0, 0)))
    Ng, Wp = Np // g, g * W
    if g > 1:
        x2 = x2.reshape(Ng, g, H, W).transpose(0, 2, 1, 3).reshape(Ng, H, Wp)
        y2 = y2.reshape(Ng, g, H, W).transpose(0, 2, 1, 3).reshape(Ng, H, Wp)

    # Block sizing: ~0.5 MiB of input per operand per grid step, rounded to a
    # multiple of the column-pass group, and capped at ceil(Ng/2) so the grid
    # has >= 2 steps whenever possible (v7x megacore).
    CB0 = max(1, _LANE // H)
    row_bytes = H * Wp * 4
    bb_vmem = max(1, (512 * 1024) // row_bytes)
    bb_two = max(1, pl.cdiv(Ng, 2))
    BB = max(1, min(bb_vmem, bb_two))
    CB = max(1, min(CB0, BB))
    BB = (BB // CB) * CB
    num_blocks = pl.cdiv(Ng, BB)
    Ngp = num_blocks * BB
    if Ngp != Ng:
        x2 = jnp.pad(x2, ((0, Ngp - Ng), (0, 0), (0, 0)))
        y2 = jnp.pad(y2, ((0, Ngp - Ng), (0, 0), (0, 0)))

    kernel = functools.partial(_lncc_kernel, BB=BB, H=H, W=W, Wp=Wp, CB=CB)
    partials = pl.pallas_call(
        kernel,
        out_shape=jax.ShapeDtypeStruct((num_blocks * 8, 128), jnp.float32),
        grid_spec=pltpu.PrefetchScalarGridSpec(
            num_scalar_prefetch=0,
            grid=(num_blocks,),
            in_specs=[
                pl.BlockSpec((BB, H, Wp), lambda i: (i, 0, 0)),
                pl.BlockSpec((BB, H, Wp), lambda i: (i, 0, 0)),
            ],
            out_specs=pl.BlockSpec((8, 128), lambda i: (i, 0)),
        ),
        compiler_params=pltpu.CompilerParams(
            dimension_semantics=("parallel",),
            vmem_limit_bytes=48 * 1024 * 1024),
    )(x2, y2)

    return -jnp.sum(partials) / jnp.float32(N * H * W)


def _lncc_loss_ref(x, y):
    """Pure-JAX reference mirroring the PyTorch module."""
    filt = jnp.ones((1, 1, WINDOW, WINDOW), x.dtype)

    def conv(a):
        return jax.lax.conv_general_dilated(
            a, filt, window_strides=(1, 1), padding=((PAD, PAD), (PAD, PAD)),
            dimension_numbers=("NCHW", "OIHW", "NCHW"))

    xsq, ysq, xy = x * x, y * y, x * y
    x_sum, y_sum = conv(x), conv(y)
    xsq_sum, ysq_sum, xy_sum = conv(xsq), conv(ysq), conv(xy)
    wn = float(WINDOW * WINDOW)
    x_mu, y_mu = x_sum / wn, y_sum / wn
    cov = xy_sum - y_mu * x_sum - x_mu * y_sum + x_mu * y_mu * wn
    x_var = xsq_sum - 2 * x_mu * x_sum + x_mu * x_mu * wn
    y_var = ysq_sum - 2 * y_mu * y_sum + y_mu * y_mu * wn
    lncc = cov * cov / (x_var * y_var + 1e-5)
    return -jnp.mean(lncc)


if __name__ == "__main__":
    kx = jax.random.PRNGKey(0)
    ky = jax.random.PRNGKey(1)

    # small single-channel images, as the module implies; second case
    # exercises the multi-block ("parallel") grid and the grouped column pass.
    for shape in [(2, 1, 16, 16), (64, 1, 16, 16)]:
        kx, sx = jax.random.split(kx)
        ky, sy = jax.random.split(ky)
        x = jax.random.normal(sx, shape, dtype=jnp.float32)
        y = jax.random.normal(sy, shape, dtype=jnp.float32)

        loss = jax.block_until_ready(lncc_loss(x, y))
        ref = jax.block_until_ready(_lncc_loss_ref(x, y))
        assert jnp.allclose(loss, ref, rtol=2e-4, atol=1e-5), (shape, loss, ref)

    print("KERNEL_OK")
</pallas_src>

<mosaic_0001>
module attributes {stable_mosaic.version = 11 : i64} {
  func.func @_lncc_kernel(%arg0: i32, %arg1: memref<1x16x128xf32, #tpu.memory_space<vmem>>, %arg2: memref<1x16x128xf32, #tpu.memory_space<vmem>>, %arg3: memref<8x128xf32, #tpu.memory_space<vmem>>) attributes {dimension_semantics = [#tpu.dimension_semantics<parallel>], iteration_bounds = array<i64: 1>, scalar_prefetch = 0 : i64, scratch_operands = 0 : i64, tpu.core_type = #tpu.core_type<tc>, window_params = [{transform_indices = @transform_0, window_bounds = array<i64: 1, 16, 128>}, {transform_indices = @transform_1, window_bounds = array<i64: 1, 16, 128>}, {transform_indices = @transform_2, window_bounds = array<i64: 8, 128>}]} {
    %c0 = arith.constant 0 : index
    %c0_0 = arith.constant 0 : index
    %c0_1 = arith.constant 0 : index
    %0 = vector.load %arg1[%c0, %c0_0, %c0_1] : memref<1x16x128xf32, #tpu.memory_space<vmem>>, vector<1x16x128xf32>
    %1 = vector.shape_cast %0 : vector<1x16x128xf32> to vector<16x128xf32>
    %c0_2 = arith.constant 0 : index
    %c0_3 = arith.constant 0 : index
    %c0_4 = arith.constant 0 : index
    %2 = vector.load %arg2[%c0_2, %c0_3, %c0_4] : memref<1x16x128xf32, #tpu.memory_space<vmem>>, vector<1x16x128xf32>
    %3 = vector.shape_cast %2 : vector<1x16x128xf32> to vector<16x128xf32>
    %4 = arith.mulf %1, %1 : vector<16x128xf32>
    %5 = arith.mulf %3, %3 : vector<16x128xf32>
    %6 = arith.mulf %1, %3 : vector<16x128xf32>
    %7 = tpu.concatenate %1, %3, %4, %5, %6 in 1 : vector<16x128xf32>, vector<16x128xf32>, vector<16x128xf32>, vector<16x128xf32>, vector<16x128xf32> -> vector<16x640xf32>
    %8 = tpu.iota {dimensions = array<i32: 0>} : vector<640x640xi32>
    %9 = tpu.iota {dimensions = array<i32: 1>} : vector<640x640xi32>
    %10 = arith.subi %8, %9 : vector<640x640xi32>
    %11 = math.absi %10 : vector<640x640xi32>
    %c3_i32 = arith.constant 3 : i32
    %12 = vector.broadcast %c3_i32 : i32 to vector<640x640xi32>
    %13 = arith.cmpi sle, %11, %12 : vector<640x640xi32>
    %14 = arith.sitofp %8 : vector<640x640xi32> to vector<640x640xf32>
    %cst = arith.constant 5.000000e-01 : f32
    %15 = vector.broadcast %cst : f32 to vector<640x640xf32>
    %16 = arith.addf %14, %15 : vector<640x640xf32>
    %cst_5 = arith.constant 6.250000e-02 : f32
    %17 = vector.broadcast %cst_5 : f32 to vector<640x640xf32>
    %18 = arith.mulf %16, %17 : vector<640x640xf32>
    %19 = math.floor %18 : vector<640x640xf32>
    %20 = arith.sitofp %9 : vector<640x640xi32> to vector<640x640xf32>
    %cst_6 = arith.constant 5.000000e-01 : f32
    %21 = vector.broadcast %cst_6 : f32 to vector<640x640xf32>
    %22 = arith.addf %20, %21 : vector<640x640xf32>
    %cst_7 = arith.constant 6.250000e-02 : f32
    %23 = vector.broadcast %cst_7 : f32 to vector<640x640xf32>
    %24 = arith.mulf %22, %23 : vector<640x640xf32>
    %25 = math.floor %24 : vector<640x640xf32>
    %26 = arith.cmpf oeq, %19, %25 : vector<640x640xf32>
    %27 = arith.andi %13, %26 : vector<640x640xi1>
    %cst_8 = arith.constant 1.000000e+00 : f32
    %cst_9 = arith.constant 0.000000e+00 : f32
    %28 = vector.broadcast %cst_8 : f32 to vector<640x640xf32>
    %29 = vector.broadcast %cst_9 : f32 to vector<640x640xf32>
    %30 = arith.select %27, %28, %29 : vector<640x640xi1>, vector<640x640xf32>
    %31 = tpu.iota {dimensions = array<i32: 0>} : vector<16x16xi32>
    %32 = tpu.iota {dimensions = array<i32: 1>} : vector<16x16xi32>
    %33 = arith.subi %31, %32 : vector<16x16xi32>
    %34 = math.absi %33 : vector<16x16xi32>
    %c3_i32_10 = arith.constant 3 : i32
    %35 = vector.broadcast %c3_i32_10 : i32 to vector<16x16xi32>
    %36 = arith.cmpi sle, %34, %35 : vector<16x16xi32>
    %37 = arith.sitofp %31 : vector<16x16xi32> to vector<16x16xf32>
    %cst_11 = arith.constant 5.000000e-01 : f32
    %38 = vector.broadcast %cst_11 : f32 to vector<16x16xf32>
    %39 = arith.addf %37, %38 : vector<16x16xf32>
    %cst_12 = arith.constant 6.250000e-02 : f32
    %40 = vector.broadcast %cst_12 : f32 to vector<16x16xf32>
    %41 = arith.mulf %39, %40 : vector<16x16xf32>
    %42 = math.floor %41 : vector<16x16xf32>
    %43 = arith.sitofp %32 : vector<16x16xi32> to vector<16x16xf32>
    %cst_13 = arith.constant 5.000000e-01 : f32
    %44 = vector.broadcast %cst_13 : f32 to vector<16x16xf32>
    %45 = arith.addf %43, %44 : vector<16x16xf32>
    %cst_14 = arith.constant 6.250000e-02 : f32
    %46 = vector.broadcast %cst_14 : f32 to vector<16x16xf32>
    %47 = arith.mulf %45, %46 : vector<16x16xf32>
    %48 = math.floor %47 : vector<16x16xf32>
    %49 = arith.cmpf oeq, %42, %48 : vector<16x16xf32>
    %50 = arith.andi %36, %49 : vector<16x16xi1>
    %cst_15 = arith.constant 1.000000e+00 : f32
    %cst_16 = arith.constant 0.000000e+00 : f32
    %51 = vector.broadcast %cst_15 : f32 to vector<16x16xf32>
    %52 = vector.broadcast %cst_16 : f32 to vector<16x16xf32>
    %53 = arith.select %50, %51, %52 : vector<16x16xi1>, vector<16x16xf32>
    %cst_17 = arith.constant dense<0.000000e+00> : vector<16x640xf32>
    %54 = tpu.matmul %7, %30, %cst_17 {dimension_numbers = #tpu.dot_dimension_numbers<[1], [0], [0], [1], [0, 0, 1, 1], [], []>} : vector<16x640xf32>, vector<640x640xf32>, vector<16x640xf32> -> vector<16x640xf32>
    %cst_18 = arith.constant dense<0.000000e+00> : vector<16x640xf32>
    %55 = tpu.matmul %53, %54, %cst_18 {dimension_numbers = #tpu.dot_dimension_numbers<[1], [0], [0], [1], [0, 0, 1, 1], [], []>} : vector<16x16xf32>, vector<16x640xf32>, vector<16x640xf32> -> vector<16x640xf32>
    %56 = vector.extract_strided_slice %55 {offsets = [0, 0], sizes = [16, 128], strides = [1, 1]} : vector<16x640xf32> to vector<16x128xf32>
    %57 = vector.extract_strided_slice %55 {offsets = [0, 128], sizes = [16, 128], strides = [1, 1]} : vector<16x640xf32> to vector<16x128xf32>
    %58 = vector.extract_strided_slice %55 {offsets = [0, 256], sizes = [16, 128], strides = [1, 1]} : vector<16x640xf32> to vector<16x128xf32>
    %59 = vector.extract_strided_slice %55 {offsets = [0, 384], sizes = [16, 128], strides = [1, 1]} : vector<16x640xf32> to vector<16x128xf32>
    %60 = vector.extract_strided_slice %55 {offsets = [0, 512], sizes = [16, 128], strides = [1, 1]} : vector<16x640xf32> to vector<16x128xf32>
    %61 = arith.mulf %56, %57 : vector<16x128xf32>
    %cst_19 = arith.constant 0.0204081628 : f32
    %62 = vector.broadcast %cst_19 : f32 to vector<16x128xf32>
    %63 = arith.mulf %61, %62 : vector<16x128xf32>
    %64 = arith.subf %60, %63 : vector<16x128xf32>
    %65 = arith.mulf %56, %56 : vector<16x128xf32>
    %cst_20 = arith.constant 0.0204081628 : f32
    %66 = vector.broadcast %cst_20 : f32 to vector<16x128xf32>
    %67 = arith.mulf %65, %66 : vector<16x128xf32>
    %68 = arith.subf %58, %67 : vector<16x128xf32>
    %69 = arith.mulf %57, %57 : vector<16x128xf32>
    %cst_21 = arith.constant 0.0204081628 : f32
    %70 = vector.broadcast %cst_21 : f32 to vector<16x128xf32>
    %71 = arith.mulf %69, %70 : vector<16x128xf32>
    %72 = arith.subf %59, %71 : vector<16x128xf32>
    %73 = arith.mulf %64, %64 : vector<16x128xf32>
    %74 = arith.mulf %68, %72 : vector<16x128xf32>
    %cst_22 = arith.constant 9.99999974E-6 : f32
    %75 = vector.broadcast %cst_22 : f32 to vector<16x128xf32>
    %76 = arith.addf %74, %75 : vector<16x128xf32>
    %77 = arith.divf %73, %76 : vector<16x128xf32>
    %78 = vector.shape_cast %77 : vector<16x128xf32> to vector<1x16x128xf32>
    %cst_23 = arith.constant dense<0.000000e+00> : vector<1xf32>
    %79 = vector.multi_reduction <add>, %78, %cst_23 [1, 2] : vector<1x16x128xf32> to vector<1xf32>
    %80 = vector.shape_cast %79 : vector<1xf32> to vector<1x1x1xf32>
    %81 = vector.extract %80[0, 0, 0] : f32 from vector<1x1x1xf32>
    %82 = tpu.iota {dimensions = array<i32: 0>} : vector<8x128xi32>
    %83 = tpu.iota {dimensions = array<i32: 1>} : vector<8x128xi32>
    %c0_i32 = arith.constant 0 : i32
    %84 = vector.broadcast %c0_i32 : i32 to vector<8x128xi32>
    %85 = arith.cmpi eq, %82, %84 : vector<8x128xi32>
    %c0_i32_24 = arith.constant 0 : i32
    %86 = vector.broadcast %c0_i32_24 : i32 to vector<8x128xi32>
    %87 = arith.cmpi eq, %83, %86 : vector<8x128xi32>
    %88 = arith.andi %85, %87 : vector<8x128xi1>
    %cst_25 = arith.constant 0.000000e+00 : f32
    %89 = vector.broadcast %81 : f32 to vector<8x128xf32>
    %90 = vector.broadcast %cst_25 : f32 to vector<8x128xf32>
    %91 = arith.select %88, %89, %90 : vector<8x128xi1>, vector<8x128xf32>
    %c0_26 = arith.constant 0 : index
    %c0_27 = arith.constant 0 : index
    %92 = vector.load %arg3[%c0_26, %c0_27] : memref<8x128xf32, #tpu.memory_space<vmem>>, vector<8x128xf32>
    tpu.vector_store %arg3[%c0_26, %c0_27], %91 {strides = array<i32>} : memref<8x128xf32, #tpu.memory_space<vmem>>, vector<8x128xf32>,
    return
  }
  func.func @transform_0(%arg0: i32) -> (i32, i32, i32) {
    %c0_i32 = arith.constant 0 : i32
    %c0_i32_0 = arith.constant 0 : i32
    %c0_i32_1 = arith.constant 0 : i32
    return %arg0, %c0_i32, %c0_i32_0 : i32, i32, i32
  }
  func.func @transform_1(%arg0: i32) -> (i32, i32, i32) {
    %c0_i32 = arith.constant 0 : i32
    %c0_i32_0 = arith.constant 0 : i32
    %c0_i32_1 = arith.constant 0 : i32
    return %arg0, %c0_i32, %c0_i32_0 : i32, i32, i32
  }
  func.func @transform_2(%arg0: i32) -> (i32, i32) {
    %c0_i32 = arith.constant 0 : i32
    %c0_i32_0 = arith.constant 0 : i32
    return %arg0, %c0_i32 : i32, i32
  }
}

</mosaic_0001>

<llo_original>
// kernel: tpu_custom_call.1
$region0: #{tpu_custom_call.1}
  #allocation0 [shape = 'u32[]', space=smem, size = 0x4, offset = 0x4, fixed_abs, tag = 'smem constant byte address 0x4 - core index']
  #allocation1 [shape = 'u32[144,128]{1,0:T(1,128)}', space=vmem, size = 0x12000, scoped, tag = 'internal scratch']
  %s0 = inlined_call_operand.hbm [shape: f32[1,16,128], index: 0, kind: input, shape index: {}]
  %s1 = inlined_call_operand.hbm [shape: f32[1,16,128], index: 1, kind: input, shape index: {}]
  %s2 = inlined_call_operand.hbm [shape: f32[8,128], index: 2, kind: output, shape index: {}]
  %s3 = sld [smem:[#allocation0]]
  $region26: #{tpu_custom_call.1} parent=0
    _
  %s5 = ssub.s32 1, %s3
  %s6 = scalar_select 0, %s5, %s3
  $region1: #{tpu_custom_call.1} parent=0
    #allocation2 [shape = 'u8[8192]{0}', space=vmem, size = 0x2000, scoped, tag = 'input window, operand 0, single buffered']
    #allocation3 [shape = 's32[1]{0}', space=sflag, size = 0x4, scoped, tag = 'scoped memory for tpu_custom_call.1']
    #allocation4 [shape = 's32[1]{0}', space=sflag, size = 0x4, scoped, tag = 'scoped memory for tpu_custom_call.1']
    #allocation5 [shape = 'u8[8192]{0}', space=vmem, size = 0x2000, scoped, tag = 'input window, operand 1, single buffered']
    #allocation6 [shape = 's32[1]{0}', space=sflag, size = 0x4, scoped, tag = 'scoped memory for tpu_custom_call.1']
    #allocation7 [shape = 'u8[4096]{0}', space=vmem, size = 0x1000, scoped, tag = 'output window, operand 0, single buffered']
    %7 = vsyncpa [#allocation3], 0
    %8 = vsyncpa [#allocation6], 0
    %9 = vsyncpa [#allocation4], 0
    // Predicated region
    $region2: #{tpu_custom_call.1} parent=1 // pred_check
      _
    $region3: #{tpu_custom_call.1} parent=1 // pred_check_branch
      %11 = sbr.rel (0) target = $region5
    $region4: #{tpu_custom_call.1} parent=1 // pred_region
      %s13 = ssub.s32 256, 256
      %14 = vsyncadd [#allocation3], %s13
      %s15 = sshll.u32 [#allocation2], 4
      %s16 = int_to_ptr.vmem [resolvable:$true] %s15
      %21 = dma.hbm_to_vmem [thread:$0]  %s0, 256, %s16, [#allocation3], 128, 128, 8
    $region5: #{tpu_custom_call.1} parent=1 // pred_fallthru
      _
    // Predicated region
    $region6: #{tpu_custom_call.1} parent=1 // pred_check
      _
    $region7: #{tpu_custom_call.1} parent=1 // pred_check_branch
      %23 = sbr.rel (0) target = $region9
    $region8: #{tpu_custom_call.1} parent=1 // pred_region
      %s25 = ssub.s32 256, 256
      %26 = vsyncadd [#allocation6], %s25
      %s27 = sshll.u32 [#allocation5], 4
      %s28 = int_to_ptr.vmem [resolvable:$true] %s27
      %33 = dma.hbm_to_vmem [thread:$0]  %s1, 256, %s28, [#allocation6], 128, 128, 8
    $region9: #{tpu_custom_call.1} parent=1 // pred_fallthru
      _
    // Predicated region
    $region10: #{tpu_custom_call.1} parent=1 // pred_check
      _
    $region11: #{tpu_custom_call.1} parent=1 // pred_check_branch
      %35 = sbr.rel (0) target = $region13
    $region12: #{tpu_custom_call.1} parent=1 // pred_region
      %36 = dma.done [#allocation3], 256
    $region13: #{tpu_custom_call.1} parent=1 // pred_fallthru
      _
    // Predicated region
    $region14: #{tpu_custom_call.1} parent=1 // pred_check
      _
    $region15: #{tpu_custom_call.1} parent=1 // pred_check_branch
      %38 = sbr.rel (0) target = $region17
    $region16: #{tpu_custom_call.1} parent=1 // pred_region
      %39 = dma.done [#allocation6], 256
    $region17: #{tpu_custom_call.1} parent=1 // pred_fallthru
      _
    %v40 = vld [vmem:[#allocation2] sm:$0xff]
    %v41 = vld [vmem:[#allocation2 + $0x8] sm:$0xff]
    %v42 = vld [vmem:[#allocation5] sm:$0xff]
    %v43 = vld [vmem:[#allocation5 + $0x8] sm:$0xff]
    %v44 = vmul.f32 %v40, %v40
    %v45 = vmul.f32 %v41, %v41
    %v46 = vmul.f32 %v42, %v42
    %v47 = vmul.f32 %v43, %v43
    %v48 = vmul.f32 %v40, %v42
    %v49 = vmul.f32 %v41, %v43
    %v50 = vlaneseq
    %v51 = vshrl.u32 %v50, 7
    %v52 = vadd.s32 %v51, 8
    %v53 = vadd.s32 %v51, 16
    %v54 = vadd.s32 %v51, 24
    %v55 = vadd.s32 %v51, 32
    %v56 = vadd.s32 %v51, 40
    %v57 = vadd.s32 %v51, 48
    %v58 = vadd.s32 %v51, 56
    %v59 = vadd.s32 %v51, 64
    %v60 = vadd.s32 %v51, 72
    %v61 = vadd.s32 %v51, 80
    %v62 = vadd.s32 %v51, 88
    %v63 = vadd.s32 %v51, 96
    %v64 = vadd.s32 %v51, 104
    %v65 = vadd.s32 %v51, 112
    %v66 = vadd.s32 %v51, 120
    %v67 = vadd.s32 %v51, 128
    %v68 = vadd.s32 %v51, 136
    %v69 = vadd.s32 %v51, 144
    %v70 = vadd.s32 %v51, 152
    %v71 = vadd.s32 %v51, 160
    %v72 = vadd.s32 %v51, 168
    %v73 = vadd.s32 %v51, 176
    %v74 = vadd.s32 %v51, 184
    %v75 = vadd.s32 %v51, 192
    %v76 = vadd.s32 %v51, 200
    %v77 = vadd.s32 %v51, 208
    %v78 = vadd.s32 %v51, 216
    %v79 = vadd.s32 %v51, 224
    %v80 = vadd.s32 %v51, 232
    %v81 = vadd.s32 %v51, 240
    %v82 = vadd.s32 %v51, 248
    %v83 = vadd.s32 %v51, 256
    %v84 = vadd.s32 %v51, 264
    %v85 = vadd.s32 %v51, 272
    %v86 = vadd.s32 %v51, 280
    %v87 = vadd.s32 %v51, 288
    %v88 = vadd.s32 %v51, 296
    %v89 = vadd.s32 %v51, 304
    %v90 = vadd.s32 %v51, 312
    %v91 = vadd.s32 %v51, 320
    %v92 = vadd.s32 %v51, 328
    %v93 = vadd.s32 %v51, 336
    %v94 = vadd.s32 %v51, 344
    %v95 = vadd.s32 %v51, 352
    %v96 = vadd.s32 %v51, 360
    %v97 = vadd.s32 %v51, 368
    %v98 = vadd.s32 %v51, 376
    %v99 = vadd.s32 %v51, 384
    %v100 = vadd.s32 %v51, 392
    %v101 = vadd.s32 %v51, 400
    %v102 = vadd.s32 %v51, 408
    %v103 = vadd.s32 %v51, 416
    %v104 = vadd.s32 %v51, 424
    %v105 = vadd.s32 %v51, 432
    %v106 = vadd.s32 %v51, 440
    %v107 = vadd.s32 %v51, 448
    %v108 = vadd.s32 %v51, 456
    %v109 = vadd.s32 %v51, 464
    %v110 = vadd.s32 %v51, 472
    %v111 = vadd.s32 %v51, 480
    %v112 = vadd.s32 %v51, 488
    %v113 = vadd.s32 %v51, 496
    %v114 = vadd.s32 %v51, 504
    %v115 = vadd.s32 %v51, 512
    %v116 = vadd.s32 %v51, 520
    %v117 = vadd.s32 %v51, 528
    %v118 = vadd.s32 %v51, 536
    %v119 = vadd.s32 %v51, 544
    %v120 = vadd.s32 %v51, 552
    %v121 = vadd.s32 %v51, 560
    %v122 = vadd.s32 %v51, 568
    %v123 = vadd.s32 %v51, 576
    %v124 = vadd.s32 %v51, 584
    %v125 = vadd.s32 %v51, 592
    %v126 = vadd.s32 %v51, 600
    %v127 = vadd.s32 %v51, 608
    %v128 = vadd.s32 %v51, 616
    %v129 = vadd.s32 %v51, 624
    %v130 = vadd.s32 %v51, 632
    %v131 = vlaneseq
    %v132 = vand.u32 %v131, 127
    %v133 = vadd.s32 %v132, 128
    %v134 = vadd.s32 %v132, 256
    %v135 = vadd.s32 %v132, 384
    %v136 = vadd.s32 %v132, 512
    %v137 = vsub.s32 %v51, %v132
    %v138 = vsub.s32 %v51, %v133
    %v139 = vsub.s32 %v51, %v134
    %v140 = vsub.s32 %v51, %v135
    %v141 = vsub.s32 %v51, %v136
    %v142 = vsub.s32 %v52, %v132
    %v143 = vsub.s32 %v52, %v133
    %v144 = vsub.s32 %v52, %v134
    %v145 = vsub.s32 %v52, %v135
    %v146 = vsub.s32 %v52, %v136
    %v147 = vsub.s32 %v53, %v132
    %v148 = vsub.s32 %v53, %v133
    %v149 = vsub.s32 %v53, %v134
    %v150 = vsub.s32 %v53, %v135
    %v151 = vsub.s32 %v53, %v136
    %v152 = vsub.s32 %v54, %v132
    %v153 = vsub.s32 %v54, %v133
    %v154 = vsub.s32 %v54, %v134
    %v155 = vsub.s32 %v54, %v135
    %v156 = vsub.s32 %v54, %v136
    %v157 = vsub.s32 %v55, %v132
    %v158 = vsub.s32 %v55, %v133
    %v159 = vsub.s32 %v55, %v134
    %v160 = vsub.s32 %v55, %v135
    %v161 = vsub.s32 %v55, %v136
    %v162 = vsub.s32 %v56, %v132
    %v163 = vsub.s32 %v56, %v133
    %v164 = vsub.s32 %v56, %v134
    %v165 = vsub.s32 %v56, %v135
    %v166 = vsub.s32 %v56, %v136
    %v167 = vsub.s32 %v57, %v132
    %v168 = vsub.s32 %v57, %v133
    %v169 = vsub.s32 %v57, %v134
    %v170 = vsub.s32 %v57, %v135
    %v171 = vsub.s32 %v57, %v136
    %v172 = vsub.s32 %v58, %v132
    %v173 = vsub.s32 %v58, %v133
    %v174 = vsub.s32 %v58, %v134
    %v175 = vsub.s32 %v58, %v135
    %v176 = vsub.s32 %v58, %v136
    %v177 = vsub.s32 %v59, %v132
    %v178 = vsub.s32 %v59, %v133
    %v179 = vsub.s32 %v59, %v134
    %v180 = vsub.s32 %v59, %v135
    %v181 = vsub.s32 %v59, %v136
    %v182 = vsub.s32 %v60, %v132
    %v183 = vsub.s32 %v60, %v133
    %v184 = vsub.s32 %v60, %v134
    %v185 = vsub.s32 %v60, %v135
    %v186 = vsub.s32 %v60, %v136
    %v187 = vsub.s32 %v61, %v132
    %v188 = vsub.s32 %v61, %v133
    %v189 = vsub.s32 %v61, %v134
    %v190 = vsub.s32 %v61, %v135
    %v191 = vsub.s32 %v61, %v136
    %v192 = vsub.s32 %v62, %v132
    %v193 = vsub.s32 %v62, %v133
    %v194 = vsub.s32 %v62, %v134
    %v195 = vsub.s32 %v62, %v135
    %v196 = vsub.s32 %v62, %v136
    %v197 = vsub.s32 %v63, %v132
    %v198 = vsub.s32 %v63, %v133
    %v199 = vsub.s32 %v63, %v134
    %v200 = vsub.s32 %v63, %v135
    %v201 = vsub.s32 %v63, %v136
    %v202 = vsub.s32 %v64, %v132
    %v203 = vsub.s32 %v64, %v133
    %v204 = vsub.s32 %v64, %v134
    %v205 = vsub.s32 %v64, %v135
    %v206 = vsub.s32 %v64, %v136
    %v207 = vsub.s32 %v65, %v132
    %v208 = vsub.s32 %v65, %v133
    %v209 = vsub.s32 %v65, %v134
    %v210 = vsub.s32 %v65, %v135
    %v211 = vsub.s32 %v65, %v136
    %v212 = vsub.s32 %v66, %v132
    %v213 = vsub.s32 %v66, %v133
    %v214 = vsub.s32 %v66, %v134
    %v215 = vsub.s32 %v66, %v135
    %v216 = vsub.s32 %v66, %v136
    %v217 = vsub.s32 %v67, %v132
    %v218 = vsub.s32 %v67, %v133
    %v219 = vsub.s32 %v67, %v134
    %v220 = vsub.s32 %v67, %v135
    %v221 = vsub.s32 %v67, %v136
    %v222 = vsub.s32 %v68, %v132
    %v223 = vsub.s32 %v68, %v133
    %v224 = vsub.s32 %v68, %v134
    %v225 = vsub.s32 %v68, %v135
    %v226 = vsub.s32 %v68, %v136
    %v227 = vsub.s32 %v69, %v132
    %v228 = vsub.s32 %v69, %v133
    %v229 = vsub.s32 %v69, %v134
    %v230 = vsub.s32 %v69, %v135
    %v231 = vsub.s32 %v69, %v136
    %v232 = vsub.s32 %v70, %v132
    %v233 = vsub.s32 %v70, %v133
    %v234 = vsub.s32 %v70, %v134
    %v235 = vsub.s32 %v70, %v135
    %v236 = vsub.s32 %v70, %v136
    %v237 = vsub.s32 %v71, %v132
    %v238 = vsub.s32 %v71, %v133
    %v239 = vsub.s32 %v71, %v134
    %v240 = vsub.s32 %v71, %v135
    %v241 = vsub.s32 %v71, %v136
    %v242 = vsub.s32 %v72, %v132
    %v243 = vsub.s32 %v72, %v133
    %v244 = vsub.s32 %v72, %v134
    %v245 = vsub.s32 %v72, %v135
    %v246 = vsub.s32 %v72, %v136
    %v247 = vsub.s32 %v73, %v132
    %v248 = vsub.s32 %v73, %v133
    %v249 = vsub.s32 %v73, %v134
    %v250 = vsub.s32 %v73, %v135
    %v251 = vsub.s32 %v73, %v136
    %v252 = vsub.s32 %v74, %v132
    %v253 = vsub.s32 %v74, %v133
    %v254 = vsub.s32 %v74, %v134
    %v255 = vsub.s32 %v74, %v135
    %v256 = vsub.s32 %v74, %v136
    %v257 = vsub.s32 %v75, %v132
    %v258 = vsub.s32 %v75, %v133
    %v259 = vsub.s32 %v75, %v134
    %v260 = vsub.s32 %v75, %v135
    %v261 = vsub.s32 %v75, %v136
    %v262 = vsub.s32 %v76, %v132
    %v263 = vsub.s32 %v76, %v133
    %v264 = vsub.s32 %v76, %v134
    %v265 = vsub.s32 %v76, %v135
    %v266 = vsub.s32 %v76, %v136
    %v267 = vsub.s32 %v77, %v132
    %v268 = vsub.s32 %v77, %v133
    %v269 = vsub.s32 %v77, %v134
    %v270 = vsub.s32 %v77, %v135
    %v271 = vsub.s32 %v77, %v136
    %v272 = vsub.s32 %v78, %v132
    %v273 = vsub.s32 %v78, %v133
    %v274 = vsub.s32 %v78, %v134
    %v275 = vsub.s32 %v78, %v135
    %v276 = vsub.s32 %v78, %v136
    %v277 = vsub.s32 %v79, %v132
    %v278 = vsub.s32 %v79, %v133
    %v279 = vsub.s32 %v79, %v134
    %v280 = vsub.s32 %v79, %v135
    %v281 = vsub.s32 %v79, %v136
    %v282 = vsub.s32 %v80, %v132
    %v283 = vsub.s32 %v80, %v133
    %v284 = vsub.s32 %v80, %v134
    %v285 = vsub.s32 %v80, %v135
    %v286 = vsub.s32 %v80, %v136
    %v287 = vsub.s32 %v81, %v132
    %v288 = vsub.s32 %v81, %v133
    %v289 = vsub.s32 %v81, %v134
    %v290 = vsub.s32 %v81, %v135
    %v291 = vsub.s32 %v81, %v136
    %v292 = vsub.s32 %v82, %v132
    %v293 = vsub.s32 %v82, %v133
    %v294 = vsub.s32 %v82, %v134
    %v295 = vsub.s32 %v82, %v135
    %v296 = vsub.s32 %v82, %v136
    %v297 = vsub.s32 %v83, %v132
    %v298 = vsub.s32 %v83, %v133
    %v299 = vsub.s32 %v83, %v134
    %v300 = vsub.s32 %v83, %v135
    %v301 = vsub.s32 %v83, %v136
    %v302 = vsub.s32 %v84, %v132
    %v303 = vsub.s32 %v84, %v133
    %v304 = vsub.s32 %v84, %v134
    %v305 = vsub.s32 %v84, %v135
    %v306 = vsub.s32 %v84, %v136
    %v307 = vsub.s32 %v85, %v132
    %v308 = vsub.s32 %v85, %v133
    %v309 = vsub.s32 %v85, %v134
    %v310 = vsub.s32 %v85, %v135
    %v311 = vsub.s32 %v85, %v136
    %v312 = vsub.s32 %v86, %v132
    %v313 = vsub.s32 %v86, %v133
    %v314 = vsub.s32 %v86, %v134
    %v315 = vsub.s32 %v86, %v135
    %v316 = vsub.s32 %v86, %v136
    %v317 = vsub.s32 %v87, %v132
    %v318 = vsub.s32 %v87, %v133
    %v319 = vsub.s32 %v87, %v134
    %v320 = vsub.s32 %v87, %v135
    %v321 = vsub.s32 %v87, %v136
    %v322 = vsub.s32 %v88, %v132
    %v323 = vsub.s32 %v88, %v133
    %v324 = vsub.s32 %v88, %v134
    %v325 = vsub.s32 %v88, %v135
    %v326 = vsub.s32 %v88, %v136
    %v327 = vsub.s32 %v89, %v132
    %v328 = vsub.s32 %v89, %v133
    %v329 = vsub.s32 %v89, %v134
    %v330 = vsub.s32 %v89, %v135
    %v331 = vsub.s32 %v89, %v136
    %v332 = vsub.s32 %v90, %v132
    %v333 = vsub.s32 %v90, %v133
    %v334 = vsub.s32 %v90, %v134
    %v335 = vsub.s32 %v90, %v135
    %v336 = vsub.s32 %v90, %v136
    %v337 = vsub.s32 %v91, %v132
    %v338 = vsub.s32 %v91, %v133
    %v339 = vsub.s32 %v91, %v134
    %v340 = vsub.s32 %v91, %v135
    %v341 = vsub.s32 %v91, %v136
    %v342 = vsub.s32 %v92, %v132
    %v343 = vsub.s32 %v92, %v133
    %v344 = vsub.s32 %v92, %v134
    %v345 = vsub.s32 %v92, %v135
    %v346 = vsub.s32 %v92, %v136
    %v347 = vsub.s32 %v93, %v132
    %v348 = vsub.s32 %v93, %v133
    %v349 = vsub.s32 %v93, %v134
    %v350 = vsub.s32 %v93, %v135
    %v351 = vsub.s32 %v93, %v136
    %v352 = vsub.s32 %v94, %v132
    %v353 = vsub.s32 %v94, %v133
    %v354 = vsub.s32 %v94, %v134
    %v355 = vsub.s32 %v94, %v135
    %v356 = vsub.s32 %v94, %v136
    %v357 = vsub.s32 %v95, %v132
    %v358 = vsub.s32 %v95, %v133
    %v359 = vsub.s32 %v95, %v134
    %v360 = vsub.s32 %v95, %v135
    %v361 = vsub.s32 %v95, %v136
    %v362 = vsub.s32 %v96, %v132
    %v363 = vsub.s32 %v96, %v133
    %v364 = vsub.s32 %v96, %v134
    %v365 = vsub.s32 %v96, %v135
    %v366 = vsub.s32 %v96, %v136
    %v367 = vsub.s32 %v97, %v132
    %v368 = vsub.s32 %v97, %v133
    %v369 = vsub.s32 %v97, %v134
    %v370 = vsub.s32 %v97, %v135
    %v371 = vsub.s32 %v97, %v136
    %v372 = vsub.s32 %v98, %v132
    %v373 = vsub.s32 %v98, %v133
    %v374 = vsub.s32 %v98, %v134
    %v375 = vsub.s32 %v98, %v135
    %v376 = vsub.s32 %v98, %v136
    %v377 = vsub.s32 %v99, %v132
    %v378 = vsub.s32 %v99, %v133
    %v379 = vsub.s32 %v99, %v134
    %v380 = vsub.s32 %v99, %v135
    %v381 = vsub.s32 %v99, %v136
    %v382 = vsub.s32 %v100, %v132
    %v383 = vsub.s32 %v100, %v133
    %v384 = vsub.s32 %v100, %v134
    %v385 = vsub.s32 %v100, %v135
    %v386 = vsub.s32 %v100, %v136
    %v387 = vsub.s32 %v101, %v132
    %v388 = vsub.s32 %v101, %v133
    %v389 = vsub.s32 %v101, %v134
    %v390 = vsub.s32 %v101, %v135
    %v391 = vsub.s32 %v101, %v136
    %v392 = vsub.s32 %v102, %v132
    %v393 = vsub.s32 %v102, %v133
    %v394 = vsub.s32 %v102, %v134
    %v395 = vsub.s32 %v102, %v135
    %v396 = vsub.s32 %v102, %v136
    %v397 = vsub.s32 %v103, %v132
    %v398 = vsub.s32 %v103, %v133
    %v399 = vsub.s32 %v103, %v134
    %v400 = vsub.s32 %v103, %v135
    %v401 = vsub.s32 %v103, %v136
    %v402 = vsub.s32 %v104, %v132
    %v403 = vsub.s32 %v104, %v133
    %v404 = vsub.s32 %v104, %v134
    %v405 = vsub.s32 %v104, %v135
    %v406 = vsub.s32 %v104, %v136
    %v407 = vsub.s32 %v105, %v132
    %v408 = vsub.s32 %v105, %v133
    %v409 = vsub.s32 %v105, %v134
    %v410 = vsub.s32 %v105, %v135
    %v411 = vsub.s32 %v105, %v136
    %v412 = vsub.s32 %v106, %v132
    %v413 = vsub.s32 %v106, %v133
    %v414 = vsub.s32 %v106, %v134
    %v415 = vsub.s32 %v106, %v135
    %v416 = vsub.s32 %v106, %v136
    %v417 = vsub.s32 %v107, %v132
    %v418 = vsub.s32 %v107, %v133
    %v419 = vsub.s32 %v107, %v134
    %v420 = vsub.s32 %v107, %v135
    %v421 = vsub.s32 %v107, %v136
    %v422 = vsub.s32 %v108, %v132
    %v423 = vsub.s32 %v108, %v133
    %v424 = vsub.s32 %v108, %v134
    %v425 = vsub.s32 %v108, %v135
    %v426 = vsub.s32 %v108, %v136
    %v427 = vsub.s32 %v109, %v132
    %v428 = vsub.s32 %v109, %v133
    %v429 = vsub.s32 %v109, %v134
    %v430 = vsub.s32 %v109, %v135
    %v431 = vsub.s32 %v109, %v136
    %v432 = vsub.s32 %v110, %v132
    %v433 = vsub.s32 %v110, %v133
    %v434 = vsub.s32 %v110, %v134
    %v435 = vsub.s32 %v110, %v135
    %v436 = vsub.s32 %v110, %v136
    %v437 = vsub.s32 %v111, %v132
    %v438 = vsub.s32 %v111, %v133
    %v439 = vsub.s32 %v111, %v134
    %v440 = vsub.s32 %v111, %v135
    %v441 = vsub.s32 %v111, %v136
    %v442 = vsub.s32 %v112, %v132
    %v443 = vsub.s32 %v112, %v133
    %v444 = vsub.s32 %v112, %v134
    %v445 = vsub.s32 %v112, %v135
    %v446 = vsub.s32 %v112, %v136
    %v447 = vsub.s32 %v113, %v132
    %v448 = vsub.s32 %v113, %v133
    %v449 = vsub.s32 %v113, %v134
    %v450 = vsub.s32 %v113, %v135
    %v451 = vsub.s32 %v113, %v136
    %v452 = vsub.s32 %v114, %v132
    %v453 = vsub.s32 %v114, %v133
    %v454 = vsub.s32 %v114, %v134
    %v455 = vsub.s32 %v114, %v135
    %v456 = vsub.s32 %v114, %v136
    %v457 = vsub.s32 %v115, %v132
    %v458 = vsub.s32 %v115, %v133
    %v459 = vsub.s32 %v115, %v134
    %v460 = vsub.s32 %v115, %v135
    %v461 = vsub.s32 %v115, %v136
    %v462 = vsub.s32 %v116, %v132
    %v463 = vsub.s32 %v116, %v133
    %v464 = vsub.s32 %v116, %v134
    %v465 = vsub.s32 %v116, %v135
    %v466 = vsub.s32 %v116, %v136
    %v467 = vsub.s32 %v117, %v132
    %v468 = vsub.s32 %v117, %v133
    %v469 = vsub.s32 %v117, %v134
    %v470 = vsub.s32 %v117, %v135
    %v471 = vsub.s32 %v117, %v136
    %v472 = vsub.s32 %v118, %v132
    %v473 = vsub.s32 %v118, %v133
    %v474 = vsub.s32 %v118, %v134
    %v475 = vsub.s32 %v118, %v135
    %v476 = vsub.s32 %v118, %v136
    %v477 = vsub.s32 %v119, %v132
    %v478 = vsub.s32 %v119, %v133
    %v479 = vsub.s32 %v119, %v134
    %v480 = vsub.s32 %v119, %v135
    %v481 = vsub.s32 %v119, %v136
    %v482 = vsub.s32 %v120, %v132
    %v483 = vsub.s32 %v120, %v133
    %v484 = vsub.s32 %v120, %v134
    %v485 = vsub.s32 %v120, %v135
    %v486 = vsub.s32 %v120, %v136
    %v487 = vsub.s32 %v121, %v132
    %v488 = vsub.s32 %v121, %v133
    %v489 = vsub.s32 %v121, %v134
    %v490 = vsub.s32 %v121, %v135
    %v491 = vsub.s32 %v121, %v136
    %v492 = vsub.s32 %v122, %v132
    %v493 = vsub.s32 %v122, %v133
    %v494 = vsub.s32 %v122, %v134
    %v495 = vsub.s32 %v122, %v135
    %v496 = vsub.s32 %v122, %v136
    %v497 = vsub.s32 %v123, %v132
    %v498 = vsub.s32 %v123, %v133
    %v499 = vsub.s32 %v123, %v134
    %v500 = vsub.s32 %v123, %v135
    %v501 = vsub.s32 %v123, %v136
    %v502 = vsub.s32 %v124, %v132
    %v503 = vsub.s32 %v124, %v133
    %v504 = vsub.s32 %v124, %v134
    %v505 = vsub.s32 %v124, %v135
    %v506 = vsub.s32 %v124, %v136
    %v507 = vsub.s32 %v125, %v132
    %v508 = vsub.s32 %v125, %v133
    %v509 = vsub.s32 %v125, %v134
    %v510 = vsub.s32 %v125, %v135
    %v511 = vsub.s32 %v125, %v136
    %v512 = vsub.s32 %v126, %v132
    %v513 = vsub.s32 %v126, %v133
    %v514 = vsub.s32 %v126, %v134
    %v515 = vsub.s32 %v126, %v135
    %v516 = vsub.s32 %v126, %v136
    %v517 = vsub.s32 %v127, %v132
    %v518 = vsub.s32 %v127, %v133
    %v519 = vsub.s32 %v127, %v134
    %v520 = vsub.s32 %v127, %v135
    %v521 = vsub.s32 %v127, %v136
    %v522 = vsub.s32 %v128, %v132
    %v523 = vsub.s32 %v128, %v133
    %v524 = vsub.s32 %v128, %v134
    %v525 = vsub.s32 %v128, %v135
    %v526 = vsub.s32 %v128, %v136
    %v527 = vsub.s32 %v129, %v132
    %v528 = vsub.s32 %v129, %v133
    %v529 = vsub.s32 %v129, %v134
    %v530 = vsub.s32 %v129, %v135
    %v531 = vsub.s32 %v129, %v136
    %v532 = vsub.s32 %v130, %v132
    %v533 = vsub.s32 %v130, %v133
    %v534 = vsub.s32 %v130, %v134
    %v535 = vsub.s32 %v130, %v135
    %v536 = vsub.s32 %v130, %v136
    %vm537 = vcmp.lt.s32.totalorder %v137, 0
    %v538 = vsub.s32 0, %v137
    %v539 = vsel %vm537, %v538, %v137
    %vm540 = vcmp.lt.s32.totalorder %v138, 0
    %v541 = vsub.s32 0, %v138
    %v542 = vsel %vm540, %v541, %v138
    %vm543 = vcmp.lt.s32.totalorder %v139, 0
    %v544 = vsub.s32 0, %v139
    %v545 = vsel %vm543, %v544, %v139
    %vm546 = vcmp.lt.s32.totalorder %v140, 0
    %v547 = vsub.s32 0, %v140
    %v548 = vsel %vm546, %v547, %v140
    %vm549 = vcmp.lt.s32.totalorder %v141, 0
    %v550 = vsub.s32 0, %v141
    %v551 = vsel %vm549, %v550, %v141
    %vm552 = vcmp.lt.s32.totalorder %v142, 0
    %v553 = vsub.s32 0, %v142
    %v554 = vsel %vm552, %v553, %v142
    %vm555 = vcmp.lt.s32.totalorder %v143, 0
    %v556 = vsub.s32 0, %v143
    %v557 = vsel %vm555, %v556, %v143
    %vm558 = vcmp.lt.s32.totalorder %v144, 0
    %v559 = vsub.s32 0, %v144
    %v560 = vsel %vm558, %v559, %v144
    %vm561 = vcmp.lt.s32.totalorder %v145, 0
    %v562 = vsub.s32 0, %v145
    %v563 = vsel %vm561, %v562, %v145
    %vm564 = vcmp.lt.s32.totalorder %v146, 0
    %v565 = vsub.s32 0, %v146
    %v566 = vsel %vm564, %v565, %v146
    %vm567 = vcmp.lt.s32.totalorder %v147, 0
    %v568 = vsub.s32 0, %v147
    %v569 = vsel %vm567, %v568, %v147
    %vm570 = vcmp.lt.s32.totalorder %v148, 0
    %v571 = vsub.s32 0, %v148
    %v572 = vsel %vm570, %v571, %v148
    %vm573 = vcmp.lt.s32.totalorder %v149, 0
    %v574 = vsub.s32 0, %v149
    %v575 = vsel %vm573, %v574, %v149
    %vm576 = vcmp.lt.s32.totalorder %v150, 0
    %v577 = vsub.s32 0, %v150
    %v578 = vsel %vm576, %v577, %v150
    %vm579 = vcmp.lt.s32.totalorder %v151, 0
    %v580 = vsub.s32 0, %v151
    %v581 = vsel %vm579, %v580, %v151
    %vm582 = vcmp.lt.s32.totalorder %v152, 0
    %v583 = vsub.s32 0, %v152
    %v584 = vsel %vm582, %v583, %v152
    %vm585 = vcmp.lt.s32.totalorder %v153, 0
    %v586 = vsub.s32 0, %v153
    %v587 = vsel %vm585, %v586, %v153
    %vm588 = vcmp.lt.s32.totalorder %v154, 0
    %v589 = vsub.s32 0, %v154
    %v590 = vsel %vm588, %v589, %v154
    %vm591 = vcmp.lt.s32.totalorder %v155, 0
    %v592 = vsub.s32 0, %v155
    %v593 = vsel %vm591, %v592, %v155
    %vm594 = vcmp.lt.s32.totalorder %v156, 0
    %v595 = vsub.s32 0, %v156
    %v596 = vsel %vm594, %v595, %v156
    %vm597 = vcmp.lt.s32.totalorder %v157, 0
    %v598 = vsub.s32 0, %v157
    %v599 = vsel %vm597, %v598, %v157
    %vm600 = vcmp.lt.s32.totalorder %v158, 0
    %v601 = vsub.s32 0, %v158
    %v602 = vsel %vm600, %v601, %v158
    %vm603 = vcmp.lt.s32.totalorder %v159, 0
    %v604 = vsub.s32 0, %v159
    %v605 = vsel %vm603, %v604, %v159
    %vm606 = vcmp.lt.s32.totalorder %v160, 0
    %v607 = vsub.s32 0, %v160
    %v608 = vsel %vm606, %v607, %v160
    %vm609 = vcmp.lt.s32.totalorder %v161, 0
    %v610 = vsub.s32 0, %v161
    %v611 = vsel %vm609, %v610, %v161
    %vm612 = vcmp.lt.s32.totalorder %v162, 0
    %v613 = vsub.s32 0, %v162
    %v614 = vsel %vm612, %v613, %v162
    %vm615 = vcmp.lt.s32.totalorder %v163, 0
    %v616 = vsub.s32 0, %v163
    %v617 = vsel %vm615, %v616, %v163
    %vm618 = vcmp.lt.s32.totalorder %v164, 0
    %v619 = vsub.s32 0, %v164
    %v620 = vsel %vm618, %v619, %v164
    %vm621 = vcmp.lt.s32.totalorder %v165, 0
    %v622 = vsub.s32 0, %v165
    %v623 = vsel %vm621, %v622, %v165
    %vm624 = vcmp.lt.s32.totalorder %v166, 0
    %v625 = vsub.s32 0, %v166
    %v626 = vsel %vm624, %v625, %v166
    %vm627 = vcmp.lt.s32.totalorder %v167, 0
    %v628 = vsub.s32 0, %v167
    %v629 = vsel %vm627, %v628, %v167
    %vm630 = vcmp.lt.s32.totalorder %v168, 0
    %v631 = vsub.s32 0, %v168
    %v632 = vsel %vm630, %v631, %v168
    %vm633 = vcmp.lt.s32.totalorder %v169, 0
    %v634 = vsub.s32 0, %v169
    %v635 = vsel %vm633, %v634, %v169
    %vm636 = vcmp.lt.s32.totalorder %v170, 0
    %v637 = vsub.s32 0, %v170
    %v638 = vsel %vm636, %v637, %v170
    %vm639 = vcmp.lt.s32.totalorder %v171, 0
    %v640 = vsub.s32 0, %v171
    %v641 = vsel %vm639, %v640, %v171
    %vm642 = vcmp.lt.s32.totalorder %v172, 0
    %v643 = vsub.s32 0, %v172
    %v644 = vsel %vm642, %v643, %v172
    %vm645 = vcmp.lt.s32.totalorder %v173, 0
    %v646 = vsub.s32 0, %v173
    %v647 = vsel %vm645, %v646, %v173
    %vm648 = vcmp.lt.s32.totalorder %v174, 0
    %v649 = vsub.s32 0, %v174
    %v650 = vsel %vm648, %v649, %v174
    %vm651 = vcmp.lt.s32.totalorder %v175, 0
    %v652 = vsub.s32 0, %v175
    %v653 = vsel %vm651, %v652, %v175
    %vm654 = vcmp.lt.s32.totalorder %v176, 0
    %v655 = vsub.s32 0, %v176
    %v656 = vsel %vm654, %v655, %v176
    %vm657 = vcmp.lt.s32.totalorder %v177, 0
    %v658 = vsub.s32 0, %v177
    %v659 = vsel %vm657, %v658, %v177
    %vm660 = vcmp.lt.s32.totalorder %v178, 0
    %v661 = vsub.s32 0, %v178
    %v662 = vsel %vm660, %v661, %v178
    %vm663 = vcmp.lt.s32.totalorder %v179, 0
    %v664 = vsub.s32 0, %v179
    %v665 = vsel %vm663, %v664, %v179
    %vm666 = vcmp.lt.s32.totalorder %v180, 0
    %v667 = vsub.s32 0, %v180
    %v668 = vsel %vm666, %v667, %v180
    %vm669 = vcmp.lt.s32.totalorder %v181, 0
    %v670 = vsub.s32 0, %v181
    %v671 = vsel %vm669, %v670, %v181
    %vm672 = vcmp.lt.s32.totalorder %v182, 0
    %v673 = vsub.s32 0, %v182
    %v674 = vsel %vm672, %v673, %v182
    %vm675 = vcmp.lt.s32.totalorder %v183, 0
    %v676 = vsub.s32 0, %v183
    %v677 = vsel %vm675, %v676, %v183
    %vm678 = vcmp.lt.s32.totalorder %v184, 0
    %v679 = vsub.s32 0, %v184
    %v680 = vsel %vm678, %v679, %v184
    %vm681 = vcmp.lt.s32.totalorder %v185, 0
    %v682 = vsub.s32 0, %v185
    %v683 = vsel %vm681, %v682, %v185
    %vm684 = vcmp.lt.s32.totalorder %v186, 0
    %v685 = vsub.s32 0, %v186
    %v686 = vsel %vm684, %v685, %v186
    %vm687 = vcmp.lt.s32.totalorder %v187, 0
    %v688 = vsub.s32 0, %v187
    %v689 = vsel %vm687, %v688, %v187
    %vm690 = vcmp.lt.s32.totalorder %v188, 0
    %v691 = vsub.s32 0, %v188
    %v692 = vsel %vm690, %v691, %v188
    %vm693 = vcmp.lt.s32.totalorder %v189, 0
    %v694 = vsub.s32 0, %v189
    %v695 = vsel %vm693, %v694, %v189
    %vm696 = vcmp.lt.s32.totalorder %v190, 0
    %v697 = vsub.s32 0, %v190
    %v698 = vsel %vm696, %v697, %v190
    %vm699 = vcmp.lt.s32.totalorder %v191, 0
    %v700 = vsub.s32 0, %v191
    %v701 = vsel %vm699, %v700, %v191
    %vm702 = vcmp.lt.s32.totalorder %v192, 0
    %v703 = vsub.s32 0, %v192
    %v704 = vsel %vm702, %v703, %v192
    %vm705 = vcmp.lt.s32.totalorder %v193, 0
    %v706 = vsub.s32 0, %v193
    %v707 = vsel %vm705, %v706, %v193
    %vm708 = vcmp.lt.s32.totalorder %v194, 0
    %v709 = vsub.s32 0, %v194
    %v710 = vsel %vm708, %v709, %v194
    %vm711 = vcmp.lt.s32.totalorder %v195, 0
    %v712 = vsub.s32 0, %v195
    %v713 = vsel %vm711, %v712, %v195
    %vm714 = vcmp.lt.s32.totalorder %v196, 0
    %v715 = vsub.s32 0, %v196
    %v716 = vsel %vm714, %v715, %v196
    %vm717 = vcmp.lt.s32.totalorder %v197, 0
    %v718 = vsub.s32 0, %v197
    %v719 = vsel %vm717, %v718, %v197
    %vm720 = vcmp.lt.s32.totalorder %v198, 0
    %v721 = vsub.s32 0, %v198
    %v722 = vsel %vm720, %v721, %v198
    %vm723 = vcmp.lt.s32.totalorder %v199, 0
    %v724 = vsub.s32 0, %v199
    %v725 = vsel %vm723, %v724, %v199
    %vm726 = vcmp.lt.s32.totalorder %v200, 0
    %v727 = vsub.s32 0, %v200
    %v728 = vsel %vm726, %v727, %v200
    %vm729 = vcmp.lt.s32.totalorder %v201, 0
    %v730 = vsub.s32 0, %v201
    %v731 = vsel %vm729, %v730, %v201
    %vm732 = vcmp.lt.s32.totalorder %v202, 0
    %v733 = vsub.s32 0, %v202
    %v734 = vsel %vm732, %v733, %v202
    %vm735 = vcmp.lt.s32.totalorder %v203, 0
    %v736 = vsub.s32 0, %v203
    %v737 = vsel %vm735, %v736, %v203
    %vm738 = vcmp.lt.s32.totalorder %v204, 0
    %v739 = vsub.s32 0, %v204
    %v740 = vsel %vm738, %v739, %v204
    %vm741 = vcmp.lt.s32.totalorder %v205, 0
    %v742 = vsub.s32 0, %v205
    %v743 = vsel %vm741, %v742, %v205
    %vm744 = vcmp.lt.s32.totalorder %v206, 0
    %v745 = vsub.s32 0, %v206
    %v746 = vsel %vm744, %v745, %v206
    %vm747 = vcmp.lt.s32.totalorder %v207, 0
    %v748 = vsub.s32 0, %v207
    %v749 = vsel %vm747, %v748, %v207
    %vm750 = vcmp.lt.s32.totalorder %v208, 0
    %v751 = vsub.s32 0, %v208
    %v752 = vsel %vm750, %v751, %v208
    %vm753 = vcmp.lt.s32.totalorder %v209, 0
    %v754 = vsub.s32 0, %v209
    %v755 = vsel %vm753, %v754, %v209
    %vm756 = vcmp.lt.s32.totalorder %v210, 0
    %v757 = vsub.s32 0, %v210
    %v758 = vsel %vm756, %v757, %v210
    %vm759 = vcmp.lt.s32.totalorder %v211, 0
    %v760 = vsub.s32 0, %v211
    %v761 = vsel %vm759, %v760, %v211
    %vm762 = vcmp.lt.s32.totalorder %v212, 0
    %v763 = vsub.s32 0, %v212
    %v764 = vsel %vm762, %v763, %v212
    %vm765 = vcmp.lt.s32.totalorder %v213, 0
    %v766 = vsub.s32 0, %v213
    %v767 = vsel %vm765, %v766, %v213
    %vm768 = vcmp.lt.s32.totalorder %v214, 0
    %v769 = vsub.s32 0, %v214
    %v770 = vsel %vm768, %v769, %v214
    %vm771 = vcmp.lt.s32.totalorder %v215, 0
    %v772 = vsub.s32 0, %v215
    %v773 = vsel %vm771, %v772, %v215
    %vm774 = vcmp.lt.s32.totalorder %v216, 0
    %v775 = vsub.s32 0, %v216
    %v776 = vsel %vm774, %v775, %v216
    %vm777 = vcmp.lt.s32.totalorder %v217, 0
    %v778 = vsub.s32 0, %v217
    %v779 = vsel %vm777, %v778, %v217
    %vm780 = vcmp.lt.s32.totalorder %v218, 0
    %v781 = vsub.s32 0, %v218
    %v782 = vsel %vm780, %v781, %v218
    %vm783 = vcmp.lt.s32.totalorder %v219, 0
    %v784 = vsub.s32 0, %v219
    %v785 = vsel %vm783, %v784, %v219
    %vm786 = vcmp.lt.s32.totalorder %v220, 0
    %v787 = vsub.s32 0, %v220
    %v788 = vsel %vm786, %v787, %v220
    %vm789 = vcmp.lt.s32.totalorder %v221, 0
    %v790 = vsub.s32 0, %v221
    %v791 = vsel %vm789, %v790, %v221
    %vm792 = vcmp.lt.s32.totalorder %v222, 0
    %v793 = vsub.s32 0, %v222
    %v794 = vsel %vm792, %v793, %v222
    %vm795 = vcmp.lt.s32.totalorder %v223, 0
    %v796 = vsub.s32 0, %v223
    %v797 = vsel %vm795, %v796, %v223
    %vm798 = vcmp.lt.s32.totalorder %v224, 0
    %v799 = vsub.s32 0, %v224
    %v800 = vsel %vm798, %v799, %v224
    %vm801 = vcmp.lt.s32.totalorder %v225, 0
    %v802 = vsub.s32 0, %v225
    %v803 = vsel %vm801, %v802, %v225
    %vm804 = vcmp.lt.s32.totalorder %v226, 0
    %v805 = vsub.s32 0, %v226
    %v806 = vsel %vm804, %v805, %v226
    %vm807 = vcmp.lt.s32.totalorder %v227, 0
    %v808 = vsub.s32 0, %v227
    %v809 = vsel %vm807, %v808, %v227
    %vm810 = vcmp.lt.s32.totalorder %v228, 0
    %v811 = vsub.s32 0, %v228
    %v812 = vsel %vm810, %v811, %v228
    %vm813 = vcmp.lt.s32.totalorder %v229, 0
    %v814 = vsub.s32 0, %v229
    %v815 = vsel %vm813, %v814, %v229
    %vm816 = vcmp.lt.s32.totalorder %v230, 0
    %v817 = vsub.s32 0, %v230
    %v818 = vsel %vm816, %v817, %v230
    %vm819 = vcmp.lt.s32.totalorder %v231, 0
    %v820 = vsub.s32 0, %v231
    %v821 = vsel %vm819, %v820, %v231
    %vm822 = vcmp.lt.s32.totalorder %v232, 0
    %v823 = vsub.s32 0, %v232
    %v824 = vsel %vm822, %v823, %v232
    %vm825 = vcmp.lt.s32.totalorder %v233, 0
    %v826 = vsub.s32 0, %v233
    %v827 = vsel %vm825, %v826, %v233
    %vm828 = vcmp.lt.s32.totalorder %v234, 0
    %v829 = vsub.s32 0, %v234
    %v830 = vsel %vm828, %v829, %v234
    %vm831 = vcmp.lt.s32.totalorder %v235, 0
    %v832 = vsub.s32 0, %v235
    %v833 = vsel %vm831, %v832, %v235
    %vm834 = vcmp.lt.s32.totalorder %v236, 0
    %v835 = vsub.s32 0, %v236
    %v836 = vsel %vm834, %v835, %v236
    %vm837 = vcmp.lt.s32.totalorder %v237, 0
    %v838 = vsub.s32 0, %v237
    %v839 = vsel %vm837, %v838, %v237
    %vm840 = vcmp.lt.s32.totalorder %v238, 0
    %v841 = vsub.s32 0, %v238
    %v842 = vsel %vm840, %v841, %v238
    %vm843 = vcmp.lt.s32.totalorder %v239, 0
    %v844 = vsub.s32 0, %v239
    %v845 = vsel %vm843, %v844, %v239
    %vm846 = vcmp.lt.s32.totalorder %v240, 0
    %v847 = vsub.s32 0, %v240
    %v848 = vsel %vm846, %v847, %v240
    %vm849 = vcmp.lt.s32.totalorder %v241, 0
    %v850 = vsub.s32 0, %v241
    %v851 = vsel %vm849, %v850, %v241
    %vm852 = vcmp.lt.s32.totalorder %v242, 0
    %v853 = vsub.s32 0, %v242
    %v854 = vsel %vm852, %v853, %v242
    %vm855 = vcmp.lt.s32.totalorder %v243, 0
    %v856 = vsub.s32 0, %v243
    %v857 = vsel %vm855, %v856, %v243
    %vm858 = vcmp.lt.s32.totalorder %v244, 0
    %v859 = vsub.s32 0, %v244
    %v860 = vsel %vm858, %v859, %v244
    %vm861 = vcmp.lt.s32.totalorder %v245, 0
    %v862 = vsub.s32 0, %v245
    %v863 = vsel %vm861, %v862, %v245
    %vm864 = vcmp.lt.s32.totalorder %v246, 0
    %v865 = vsub.s32 0, %v246
    %v866 = vsel %vm864, %v865, %v246
    %vm867 = vcmp.lt.s32.totalorder %v247, 0
    %v868 = vsub.s32 0, %v247
    %v869 = vsel %vm867, %v868, %v247
    %vm870 = vcmp.lt.s32.totalorder %v248, 0
    %v871 = vsub.s32 0, %v248
    %v872 = vsel %vm870, %v871, %v248
    %vm873 = vcmp.lt.s32.totalorder %v249, 0
    %v874 = vsub.s32 0, %v249
    %v875 = vsel %vm873, %v874, %v249
    %vm876 = vcmp.lt.s32.totalorder %v250, 0
    %v877 = vsub.s32 0, %v250
    %v878 = vsel %vm876, %v877, %v250
    %vm879 = vcmp.lt.s32.totalorder %v251, 0
    %v880 = vsub.s32 0, %v251
    %v881 = vsel %vm879, %v880, %v251
    %vm882 = vcmp.lt.s32.totalorder %v252, 0
    %v883 = vsub.s32 0, %v252
    %v884 = vsel %vm882, %v883, %v252
    %vm885 = vcmp.lt.s32.totalorder %v253, 0
    %v886 = vsub.s32 0, %v253
    %v887 = vsel %vm885, %v886, %v253
    %vm888 = vcmp.lt.s32.totalorder %v254, 0
    %v889 = vsub.s32 0, %v254
    %v890 = vsel %vm888, %v889, %v254
    %vm891 = vcmp.lt.s32.totalorder %v255, 0
    %v892 = vsub.s32 0, %v255
    %v893 = vsel %vm891, %v892, %v255
    %vm894 = vcmp.lt.s32.totalorder %v256, 0
    %v895 = vsub.s32 0, %v256
    %v896 = vsel %vm894, %v895, %v256
    %vm897 = vcmp.lt.s32.totalorder %v257, 0
    %v898 = vsub.s32 0, %v257
    %v899 = vsel %vm897, %v898, %v257
    %vm900 = vcmp.lt.s32.totalorder %v258, 0
    %v901 = vsub.s32 0, %v258
    %v902 = vsel %vm900, %v901, %v258
    %vm903 = vcmp.lt.s32.totalorder %v259, 0
    %v904 = vsub.s32 0, %v259
    %v905 = vsel %vm903, %v904, %v259
    %vm906 = vcmp.lt.s32.totalorder %v260, 0
    %v907 = vsub.s32 0, %v260
    %v908 = vsel %vm906, %v907, %v260
    %vm909 = vcmp.lt.s32.totalorder %v261, 0
    %v910 = vsub.s32 0, %v261
    %v911 = vsel %vm909, %v910, %v261
    %vm912 = vcmp.lt.s32.totalorder %v262, 0
    %v913 = vsub.s32 0, %v262
    %v914 = vsel %vm912, %v913, %v262
    %vm915 = vcmp.lt.s32.totalorder %v263, 0
    %v916 = vsub.s32 0, %v263
    %v917 = vsel %vm915, %v916, %v263
    %vm918 = vcmp.lt.s32.totalorder %v264, 0
    %v919 = vsub.s32 0, %v264
    %v920 = vsel %vm918, %v919, %v264
    %vm921 = vcmp.lt.s32.totalorder %v265, 0
    %v922 = vsub.s32 0, %v265
    %v923 = vsel %vm921, %v922, %v265
    %vm924 = vcmp.lt.s32.totalorder %v266, 0
    %v925 = vsub.s32 0, %v266
    %v926 = vsel %vm924, %v925, %v266
    %vm927 = vcmp.lt.s32.totalorder %v267, 0
    %v928 = vsub.s32 0, %v267
    %v929 = vsel %vm927, %v928, %v267
    %vm930 = vcmp.lt.s32.totalorder %v268, 0
    %v931 = vsub.s32 0, %v268
    %v932 = vsel %vm930, %v931, %v268
    %vm933 = vcmp.lt.s32.totalorder %v269, 0
    %v934 = vsub.s32 0, %v269
    %v935 = vsel %vm933, %v934, %v269
    %vm936 = vcmp.lt.s32.totalorder %v270, 0
    %v937 = vsub.s32 0, %v270
    %v938 = vsel %vm936, %v937, %v270
    %vm939 = vcmp.lt.s32.totalorder %v271, 0
    %v940 = vsub.s32 0, %v271
    %v941 = vsel %vm939, %v940, %v271
    %vm942 = vcmp.lt.s32.totalorder %v272, 0
    %v943 = vsub.s32 0, %v272
    %v944 = vsel %vm942, %v943, %v272
    %vm945 = vcmp.lt.s32.totalorder %v273, 0
    %v946 = vsub.s32 0, %v273
    %v947 = vsel %vm945, %v946, %v273
    %vm948 = vcmp.lt.s32.totalorder %v274, 0
    %v949 = vsub.s32 0, %v274
    %v950 = vsel %vm948, %v949, %v274
    %vm951 = vcmp.lt.s32.totalorder %v275, 0
    %v952 = vsub.s32 0, %v275
    %v953 = vsel %vm951, %v952, %v275
    %vm954 = vcmp.lt.s32.totalorder %v276, 0
    %v955 = vsub.s32 0, %v276
    %v956 = vsel %vm954, %v955, %v276
    %vm957 = vcmp.lt.s32.totalorder %v277, 0
    %v958 = vsub.s32 0, %v277
    %v959 = vsel %vm957, %v958, %v277
    %vm960 = vcmp.lt.s32.totalorder %v278, 0
    %v961 = vsub.s32 0, %v278
    %v962 = vsel %vm960, %v961, %v278
    %vm963 = vcmp.lt.s32.totalorder %v279, 0
    %v964 = vsub.s32 0, %v279
    %v965 = vsel %vm963, %v964, %v279
    %vm966 = vcmp.lt.s32.totalorder %v280, 0
    %v967 = vsub.s32 0, %v280
    %v968 = vsel %vm966, %v967, %v280
    %vm969 = vcmp.lt.s32.totalorder %v281, 0
    %v970 = vsub.s32 0, %v281
    %v971 = vsel %vm969, %v970, %v281
    %vm972 = vcmp.lt.s32.totalorder %v282, 0
    %v973 = vsub.s32 0, %v282
    %v974 = vsel %vm972, %v973, %v282
    %vm975 = vcmp.lt.s32.totalorder %v283, 0
    %v976 = vsub.s32 0, %v283
    %v977 = vsel %vm975, %v976, %v283
    %vm978 = vcmp.lt.s32.totalorder %v284, 0
    %v979 = vsub.s32 0, %v284
    %v980 = vsel %vm978, %v979, %v284
    %vm981 = vcmp.lt.s32.totalorder %v285, 0
    %v982 = vsub.s32 0, %v285
    %v983 = vsel %vm981, %v982, %v285
    %vm984 = vcmp.lt.s32.totalorder %v286, 0
    %v985 = vsub.s32 0, %v286
    %v986 = vsel %vm984, %v985, %v286
    %vm987 = vcmp.lt.s32.totalorder %v287, 0
    %v988 = vsub.s32 0, %v287
    %v989 = vsel %vm987, %v988, %v287
    %vm990 = vcmp.lt.s32.totalorder %v288, 0
    %v991 = vsub.s32 0, %v288
    %v992 = vsel %vm990, %v991, %v288
    %vm993 = vcmp.lt.s32.totalorder %v289, 0
    %v994 = vsub.s32 0, %v289
    %v995 = vsel %vm993, %v994, %v289
    %vm996 = vcmp.lt.s32.totalorder %v290, 0
    %v997 = vsub.s32 0, %v290
    %v998 = vsel %vm996, %v997, %v290
    %vm999 = vcmp.lt.s32.totalorder %v291, 0
    %v1000 = vsub.s32 0, %v291
    %v1001 = vsel %vm999, %v1000, %v291
    %vm1002 = vcmp.lt.s32.totalorder %v292, 0
    %v1003 = vsub.s32 0, %v292
    %v1004 = vsel %vm1002, %v1003, %v292
    %vm1005 = vcmp.lt.s32.totalorder %v293, 0
    %v1006 = vsub.s32 0, %v293
    %v1007 = vsel %vm1005, %v1006, %v293
    %vm1008 = vcmp.lt.s32.totalorder %v294, 0
    %v1009 = vsub.s32 0, %v294
    %v1010 = vsel %vm1008, %v1009, %v294
    %vm1011 = vcmp.lt.s32.totalorder %v295, 0
    %v1012 = vsub.s32 0, %v295
    %v1013 = vsel %vm1011, %v1012, %v295
    %vm1014 = vcmp.lt.s32.totalorder %v296, 0
    %v1015 = vsub.s32 0, %v296
    %v1016 = vsel %vm1014, %v1015, %v296
    %vm1017 = vcmp.lt.s32.totalorder %v297, 0
    %v1018 = vsub.s32 0, %v297
    %v1019 = vsel %vm1017, %v1018, %v297
    %vm1020 = vcmp.lt.s32.totalorder %v298, 0
    %v1021 = vsub.s32 0, %v298
    %v1022 = vsel %vm1020, %v1021, %v298
    %vm1023 = vcmp.lt.s32.totalorder %v299, 0
    %v1024 = vsub.s32 0, %v299
    %v1025 = vsel %vm1023, %v1024, %v299
    %vm1026 = vcmp.lt.s32.totalorder %v300, 0
    %v1027 = vsub.s32 0, %v300
    %v1028 = vsel %vm1026, %v1027, %v300
    %vm1029 = vcmp.lt.s32.totalorder %v301, 0
    %v1030 = vsub.s32 0, %v301
    %v1031 = vsel %vm1029, %v1030, %v301
    %vm1032 = vcmp.lt.s32.totalorder %v302, 0
    %v1033 = vsub.s32 0, %v302
    %v1034 = vsel %vm1032, %v1033, %v302
    %vm1035 = vcmp.lt.s32.totalorder %v303, 0
    %v1036 = vsub.s32 0, %v303
    %v1037 = vsel %vm1035, %v1036, %v303
    %vm1038 = vcmp.lt.s32.totalorder %v304, 0
    %v1039 = vsub.s32 0, %v304
    %v1040 = vsel %vm1038, %v1039, %v304
    %vm1041 = vcmp.lt.s32.totalorder %v305, 0
    %v1042 = vsub.s32 0, %v305
    %v1043 = vsel %vm1041, %v1042, %v305
    %vm1044 = vcmp.lt.s32.totalorder %v306, 0
    %v1045 = vsub.s32 0, %v306
    %v1046 = vsel %vm1044, %v1045, %v306
    %vm1047 = vcmp.lt.s32.totalorder %v307, 0
    %v1048 = vsub.s32 0, %v307
    %v1049 = vsel %vm1047, %v1048, %v307
    %vm1050 = vcmp.lt.s32.totalorder %v308, 0
    %v1051 = vsub.s32 0, %v308
    %v1052 = vsel %vm1050, %v1051, %v308
    %vm1053 = vcmp.lt.s32.totalorder %v309, 0
    %v1054 = vsub.s32 0, %v309
    %v1055 = vsel %vm1053, %v1054, %v309
    %vm1056 = vcmp.lt.s32.totalorder %v310, 0
    %v1057 = vsub.s32 0, %v310
    %v1058 = vsel %vm1056, %v1057, %v310
    %vm1059 = vcmp.lt.s32.totalorder %v311, 0
    %v1060 = vsub.s32 0, %v311
    %v1061 = vsel %vm1059, %v1060, %v311
    %vm1062 = vcmp.lt.s32.totalorder %v312, 0
    %v1063 = vsub.s32 0, %v312
    %v1064 = vsel %vm1062, %v1063, %v312
    %vm1065 = vcmp.lt.s32.totalorder %v313, 0
    %v1066 = vsub.s32 0, %v313
    %v1067 = vsel %vm1065, %v1066, %v313
    %vm1068 = vcmp.lt.s32.totalorder %v314, 0
    %v1069 = vsub.s32 0, %v314
    %v1070 = vsel %vm1068, %v1069, %v314
    %vm1071 = vcmp.lt.s32.totalorder %v315, 0
    %v1072 = vsub.s32 0, %v315
    %v1073 = vsel %vm1071, %v1072, %v315
    %vm1074 = vcmp.lt.s32.totalorder %v316, 0
    %v1075 = vsub.s32 0, %v316
    %v1076 = vsel %vm1074, %v1075, %v316
    %vm1077 = vcmp.lt.s32.totalorder %v317, 0
    %v1078 = vsub.s32 0, %v317
    %v1079 = vsel %vm1077, %v1078, %v317
    %vm1080 = vcmp.lt.s32.totalorder %v318, 0
    %v1081 = vsub.s32 0, %v318
    %v1082 = vsel %vm1080, %v1081, %v318
    %vm1083 = vcmp.lt.s32.totalorder %v319, 0
    %v1084 = vsub.s32 0, %v319
    %v1085 = vsel %vm1083, %v1084, %v319
    %vm1086 = vcmp.lt.s32.totalorder %v320, 0
    %v1087 = vsub.s32 0, %v320
    %v1088 = vsel %vm1086, %v1087, %v320
    %vm1089 = vcmp.lt.s32.totalorder %v321, 0
    %v1090 = vsub.s32 0, %v321
    %v1091 = vsel %vm1089, %v1090, %v321
    %vm1092 = vcmp.lt.s32.totalorder %v322, 0
    %v1093 = vsub.s32 0, %v322
    %v1094 = vsel %vm1092, %v1093, %v322
    %vm1095 = vcmp.lt.s32.totalorder %v323, 0
    %v1096 = vsub.s32 0, %v323
    %v1097 = vsel %vm1095, %v1096, %v323
    %vm1098 = vcmp.lt.s32.totalorder %v324, 0
    %v1099 = vsub.s32 0, %v324
    %v1100 = vsel %vm1098, %v1099, %v324
    %vm1101 = vcmp.lt.s32.totalorder %v325, 0
    %v1102 = vsub.s32 0, %v325
    %v1103 = vsel %vm1101, %v1102, %v325
    %vm1104 = vcmp.lt.s32.totalorder %v326, 0
    %v1105 = vsub.s32 0, %v326
    %v1106 = vsel %vm1104, %v1105, %v326
    %vm1107 = vcmp.lt.s32.totalorder %v327, 0
    %v1108 = vsub.s32 0, %v327
    %v1109 = vsel %vm1107, %v1108, %v327
    %vm1110 = vcmp.lt.s32.totalorder %v328, 0
    %v1111 = vsub.s32 0, %v328
    %v1112 = vsel %vm1110, %v1111, %v328
    %vm1113 = vcmp.lt.s32.totalorder %v329, 0
    %v1114 = vsub.s32 0, %v329
    %v1115 = vsel %vm1113, %v1114, %v329
    %vm1116 = vcmp.lt.s32.totalorder %v330, 0
    %v1117 = vsub.s32 0, %v330
    %v1118 = vsel %vm1116, %v1117, %v330
    %vm1119 = vcmp.lt.s32.totalorder %v331, 0
    %v1120 = vsub.s32 0, %v331
    %v1121 = vsel %vm1119, %v1120, %v331
    %vm1122 = vcmp.lt.s32.totalorder %v332, 0
    %v1123 = vsub.s32 0, %v332
    %v1124 = vsel %vm1122, %v1123, %v332
    %vm1125 = vcmp.lt.s32.totalorder %v333, 0
    %v1126 = vsub.s32 0, %v333
    %v1127 = vsel %vm1125, %v1126, %v333
    %vm1128 = vcmp.lt.s32.totalorder %v334, 0
    %v1129 = vsub.s32 0, %v334
    %v1130 = vsel %vm1128, %v1129, %v334
    %vm1131 = vcmp.lt.s32.totalorder %v335, 0
    %v1132 = vsub.s32 0, %v335
    %v1133 = vsel %vm1131, %v1132, %v335
    %vm1134 = vcmp.lt.s32.totalorder %v336, 0
    %v1135 = vsub.s32 0, %v336
    %v1136 = vsel %vm1134, %v1135, %v336
    %vm1137 = vcmp.lt.s32.totalorder %v337, 0
    %v1138 = vsub.s32 0, %v337
    %v1139 = vsel %vm1137, %v1138, %v337
    %vm1140 = vcmp.lt.s32.totalorder %v338, 0
    %v1141 = vsub.s32 0, %v338
    %v1142 = vsel %vm1140, %v1141, %v338
    %vm1143 = vcmp.lt.s32.totalorder %v339, 0
    %v1144 = vsub.s32 0, %v339
    %v1145 = vsel %vm1143, %v1144, %v339
    %vm1146 = vcmp.lt.s32.totalorder %v340, 0
    %v1147 = vsub.s32 0, %v340
    %v1148 = vsel %vm1146, %v1147, %v340
    %vm1149 = vcmp.lt.s32.totalorder %v341, 0
    %v1150 = vsub.s32 0, %v341
    %v1151 = vsel %vm1149, %v1150, %v341
    %vm1152 = vcmp.lt.s32.totalorder %v342, 0
    %v1153 = vsub.s32 0, %v342
    %v1154 = vsel %vm1152, %v1153, %v342
    %vm1155 = vcmp.lt.s32.totalorder %v343, 0
    %v1156 = vsub.s32 0, %v343
    %v1157 = vsel %vm1155, %v1156, %v343
    %vm1158 = vcmp.lt.s32.totalorder %v344, 0
    %v1159 = vsub.s32 0, %v344
    %v1160 = vsel %vm1158, %v1159, %v344
    %vm1161 = vcmp.lt.s32.totalorder %v345, 0
    %v1162 = vsub.s32 0, %v345
    %v1163 = vsel %vm1161, %v1162, %v345
    %vm1164 = vcmp.lt.s32.totalorder %v346, 0
    %v1165 = vsub.s32 0, %v346
    %v1166 = vsel %vm1164, %v1165, %v346
    %vm1167 = vcmp.lt.s32.totalorder %v347, 0
    %v1168 = vsub.s32 0, %v347
    %v1169 = vsel %vm1167, %v1168, %v347
    %vm1170 = vcmp.lt.s32.totalorder %v348, 0
    %v1171 = vsub.s32 0, %v348
    %v1172 = vsel %vm1170, %v1171, %v348
    %vm1173 = vcmp.lt.s32.totalorder %v349, 0
    %v1174 = vsub.s32 0, %v349
    %v1175 = vsel %vm1173, %v1174, %v349
    %vm1176 = vcmp.lt.s32.totalorder %v350, 0
    %v1177 = vsub.s32 0, %v350
    %v1178 = vsel %vm1176, %v1177, %v350
    %vm1179 = vcmp.lt.s32.totalorder %v351, 0
    %v1180 = vsub.s32 0, %v351
    %v1181 = vsel %vm1179, %v1180, %v351
    %vm1182 = vcmp.lt.s32.totalorder %v352, 0
    %v1183 = vsub.s32 0, %v352
    %v1184 = vsel %vm1182, %v1183, %v352
    %vm1185 = vcmp.lt.s32.totalorder %v353, 0
    %v1186 = vsub.s32 0, %v353
    %v1187 = vsel %vm1185, %v1186, %v353
    %vm1188 = vcmp.lt.s32.totalorder %v354, 0
    %v1189 = vsub.s32 0, %v354
    %v1190 = vsel %vm1188, %v1189, %v354
    %vm1191 = vcmp.lt.s32.totalorder %v355, 0
    %v1192 = vsub.s32 0, %v355
    %v1193 = vsel %vm1191, %v1192, %v355
    %vm1194 = vcmp.lt.s32.totalorder %v356, 0
    %v1195 = vsub.s32 0, %v356
    %v1196 = vsel %vm1194, %v1195, %v356
    %vm1197 = vcmp.lt.s32.totalorder %v357, 0
    %v1198 = vsub.s32 0, %v357
    %v1199 = vsel %vm1197, %v1198, %v357
    %vm1200 = vcmp.lt.s32.totalorder %v358, 0
    %v1201 = vsub.s32 0, %v358
    %v1202 = vsel %vm1200, %v1201, %v358
    %vm1203 = vcmp.lt.s32.totalorder %v359, 0
    %v1204 = vsub.s32 0, %v359
    %v1205 = vsel %vm1203, %v1204, %v359
    %vm1206 = vcmp.lt.s32.totalorder %v360, 0
    %v1207 = vsub.s32 0, %v360
    %v1208 = vsel %vm1206, %v1207, %v360
    %vm1209 = vcmp.lt.s32.totalorder %v361, 0
    %v1210 = vsub.s32 0, %v361
    %v1211 = vsel %vm1209, %v1210, %v361
    %vm1212 = vcmp.lt.s32.totalorder %v362, 0
    %v1213 = vsub.s32 0, %v362
    %v1214 = vsel %vm1212, %v1213, %v362
    %vm1215 = vcmp.lt.s32.totalorder %v363, 0
    %v1216 = vsub.s32 0, %v363
    %v1217 = vsel %vm1215, %v1216, %v363
    %vm1218 = vcmp.lt.s32.totalorder %v364, 0
    %v1219 = vsub.s32 0, %v364
    %v1220 = vsel %vm1218, %v1219, %v364
    %vm1221 = vcmp.lt.s32.totalorder %v365, 0
    %v1222 = vsub.s32 0, %v365
    %v1223 = vsel %vm1221, %v1222, %v365
    %vm1224 = vcmp.lt.s32.totalorder %v366, 0
    %v1225 = vsub.s32 0, %v366
    %v1226 = vsel %vm1224, %v1225, %v366
    %vm1227 = vcmp.lt.s32.totalorder %v367, 0
    %v1228 = vsub.s32 0, %v367
    %v1229 = vsel %vm1227, %v1228, %v367
    %vm1230 = vcmp.lt.s32.totalorder %v368, 0
    %v1231 = vsub.s32 0, %v368
    %v1232 = vsel %vm1230, %v1231, %v368
    %vm1233 = vcmp.lt.s32.totalorder %v369, 0
    %v1234 = vsub.s32 0, %v369
    %v1235 = vsel %vm1233, %v1234, %v369
    %vm1236 = vcmp.lt.s32.totalorder %v370, 0
    %v1237 = vsub.s32 0, %v370
    %v1238 = vsel %vm1236, %v1237, %v370
    %vm1239 = vcmp.lt.s32.totalorder %v371, 0
    %v1240 = vsub.s32 0, %v371
    %v1241 = vsel %vm1239, %v1240, %v371
    %vm1242 = vcmp.lt.s32.totalorder %v372, 0
    %v1243 = vsub.s32 0, %v372
    %v1244 = vsel %vm1242, %v1243, %v372
    %vm1245 = vcmp.lt.s32.totalorder %v373, 0
    %v1246 = vsub.s32 0, %v373
    %v1247 = vsel %vm1245, %v1246, %v373
    %vm1248 = vcmp.lt.s32.totalorder %v374, 0
    %v1249 = vsub.s32 0, %v374
    %v1250 = vsel %vm1248, %v1249, %v374
    %vm1251 = vcmp.lt.s32.totalorder %v375, 0
    %v1252 = vsub.s32 0, %v375
    %v1253 = vsel %vm1251, %v1252, %v375
    %vm1254 = vcmp.lt.s32.totalorder %v376, 0
    %v1255 = vsub.s32 0, %v376
    %v1256 = vsel %vm1254, %v1255, %v376
    %vm1257 = vcmp.lt.s32.totalorder %v377, 0
    %v1258 = vsub.s32 0, %v377
    %v1259 = vsel %vm1257, %v1258, %v377
    %vm1260 = vcmp.lt.s32.totalorder %v378, 0
    %v1261 = vsub.s32 0, %v378
    %v1262 = vsel %vm1260, %v1261, %v378
    %vm1263 = vcmp.lt.s32.totalorder %v379, 0
    %v1264 = vsub.s32 0, %v379
    %v1265 = vsel %vm1263, %v1264, %v379
    %vm1266 = vcmp.lt.s32.totalorder %v380, 0
    %v1267 = vsub.s32 0, %v380
    %v1268 = vsel %vm1266, %v1267, %v380
    %vm1269 = vcmp.lt.s32.totalorder %v381, 0
    %v1270 = vsub.s32 0, %v381
    %v1271 = vsel %vm1269, %v1270, %v381
    %vm1272 = vcmp.lt.s32.totalorder %v382, 0
    %v1273 = vsub.s32 0, %v382
    %v1274 = vsel %vm1272, %v1273, %v382
    %vm1275 = vcmp.lt.s32.totalorder %v383, 0
    %v1276 = vsub.s32 0, %v383
    %v1277 = vsel %vm1275, %v1276, %v383
    %vm1278 = vcmp.lt.s32.totalorder %v384, 0
    %v1279 = vsub.s32 0, %v384
    %v1280 = vsel %vm1278, %v1279, %v384
    %vm1281 = vcmp.lt.s32.totalorder %v385, 0
    %v1282 = vsub.s32 0, %v385
    %v1283 = vsel %vm1281, %v1282, %v385
    %vm1284 = vcmp.lt.s32.totalorder %v386, 0
    %v1285 = vsub.s32 0, %v386
    %v1286 = vsel %vm1284, %v1285, %v386
    %vm1287 = vcmp.lt.s32.totalorder %v387, 0
    %v1288 = vsub.s32 0, %v387
    %v1289 = vsel %vm1287, %v1288, %v387
    %vm1290 = vcmp.lt.s32.totalorder %v388, 0
    %v1291 = vsub.s32 0, %v388
    %v1292 = vsel %vm1290, %v1291, %v388
    %vm1293 = vcmp.lt.s32.totalorder %v389, 0
    %v1294 = vsub.s32 0, %v389
    %v1295 = vsel %vm1293, %v1294, %v389
    %vm1296 = vcmp.lt.s32.totalorder %v390, 0
    %v1297 = vsub.s32 0, %v390
    %v1298 = vsel %vm1296, %v1297, %v390
    %vm1299 = vcmp.lt.s32.totalorder %v391, 0
    %v1300 = vsub.s32 0, %v391
    %v1301 = vsel %vm1299, %v1300, %v391
    %vm1302 = vcmp.lt.s32.totalorder %v392, 0
    %v1303 = vsub.s32 0, %v392
    %v1304 = vsel %vm1302, %v1303, %v392
    %vm1305 = vcmp.lt.s32.totalorder %v393, 0
    %v1306 = vsub.s32 0, %v393
    %v1307 = vsel %vm1305, %v1306, %v393
    %vm1308 = vcmp.lt.s32.totalorder %v394, 0
    %v1309 = vsub.s32 0, %v394
    %v1310 = vsel %vm1308, %v1309, %v394
    %vm1311 = vcmp.lt.s32.totalorder %v395, 0
    %v1312 = vsub.s32 0, %v395
    %v1313 = vsel %vm1311, %v1312, %v395
    %vm1314 = vcmp.lt.s32.totalorder %v396, 0
    %v1315 = vsub.s32 0, %v396
    %v1316 = vsel %vm1314, %v1315, %v396
    %vm1317 = vcmp.lt.s32.totalorder %v397, 0
    %v1318 = vsub.s32 0, %v397
    %v1319 = vsel %vm1317, %v1318, %v397
    %vm1320 = vcmp.lt.s32.totalorder %v398, 0
    %v1321 = vsub.s32 0, %v398
    %v1322 = vsel %vm1320, %v1321, %v398
    %vm1323 = vcmp.lt.s32.totalorder %v399, 0
    %v1324 = vsub.s32 0, %v399
    %v1325 = vsel %vm1323, %v1324, %v399
    %vm1326 = vcmp.lt.s32.totalorder %v400, 0
    %v1327 = vsub.s32 0, %v400
    %v1328 = vsel %vm1326, %v1327, %v400
    %vm1329 = vcmp.lt.s32.totalorder %v401, 0
    %v1330 = vsub.s32 0, %v401
    %v1331 = vsel %vm1329, %v1330, %v401
    %vm1332 = vcmp.lt.s32.totalorder %v402, 0
    %v1333 = vsub.s32 0, %v402
    %v1334 = vsel %vm1332, %v1333, %v402
    %vm1335 = vcmp.lt.s32.totalorder %v403, 0
    %v1336 = vsub.s32 0, %v403
    %v1337 = vsel %vm1335, %v1336, %v403
    %vm1338 = vcmp.lt.s32.totalorder %v404, 0
    %v1339 = vsub.s32 0, %v404
    %v1340 = vsel %vm1338, %v1339, %v404
    %vm1341 = vcmp.lt.s32.totalorder %v405, 0
    %v1342 = vsub.s32 0, %v405
    %v1343 = vsel %vm1341, %v1342, %v405
    %vm1344 = vcmp.lt.s32.totalorder %v406, 0
    %v1345 = vsub.s32 0, %v406
    %v1346 = vsel %vm1344, %v1345, %v406
    %vm1347 = vcmp.lt.s32.totalorder %v407, 0
    %v1348 = vsub.s32 0, %v407
    %v1349 = vsel %vm1347, %v1348, %v407
    %vm1350 = vcmp.lt.s32.totalorder %v408, 0
    %v1351 = vsub.s32 0, %v408
    %v1352 = vsel %vm1350, %v1351, %v408
    %vm1353 = vcmp.lt.s32.totalorder %v409, 0
    %v1354 = vsub.s32 0, %v409
    %v1355 = vsel %vm1353, %v1354, %v409
    %vm1356 = vcmp.lt.s32.totalorder %v410, 0
    %v1357 = vsub.s32 0, %v410
    %v1358 = vsel %vm1356, %v1357, %v410
    %vm1359 = vcmp.lt.s32.totalorder %v411, 0
    %v1360 = vsub.s32 0, %v411
    %v1361 = vsel %vm1359, %v1360, %v411
    %vm1362 = vcmp.lt.s32.totalorder %v412, 0
    %v1363 = vsub.s32 0, %v412
    %v1364 = vsel %vm1362, %v1363, %v412
    %vm1365 = vcmp.lt.s32.totalorder %v413, 0
    %v1366 = vsub.s32 0, %v413
    %v1367 = vsel %vm1365, %v1366, %v413
    %vm1368 = vcmp.lt.s32.totalorder %v414, 0
    %v1369 = vsub.s32 0, %v414
    %v1370 = vsel %vm1368, %v1369, %v414
    %vm1371 = vcmp.lt.s32.totalorder %v415, 0
    %v1372 = vsub.s32 0, %v415
    %v1373 = vsel %vm1371, %v1372, %v415
    %vm1374 = vcmp.lt.s32.totalorder %v416, 0
    %v1375 = vsub.s32 0, %v416
    %v1376 = vsel %vm1374, %v1375, %v416
    %vm1377 = vcmp.lt.s32.totalorder %v417, 0
    %v1378 = vsub.s32 0, %v417
    %v1379 = vsel %vm1377, %v1378, %v417
    %vm1380 = vcmp.lt.s32.totalorder %v418, 0
    %v1381 = vsub.s32 0, %v418
    %v1382 = vsel %vm1380, %v1381, %v418
    %vm1383 = vcmp.lt.s32.totalorder %v419, 0
    %v1384 = vsub.s32 0, %v419
    %v1385 = vsel %vm1383, %v1384, %v419
    %vm1386 = vcmp.lt.s32.totalorder %v420, 0
    %v1387 = vsub.s32 0, %v420
    %v1388 = vsel %vm1386, %v1387, %v420
    %vm1389 = vcmp.lt.s32.totalorder %v421, 0
    %v1390 = vsub.s32 0, %v421
    %v1391 = vsel %vm1389, %v1390, %v421
    %vm1392 = vcmp.lt.s32.totalorder %v422, 0
    %v1393 = vsub.s32 0, %v422
    %v1394 = vsel %vm1392, %v1393, %v422
    %vm1395 = vcmp.lt.s32.totalorder %v423, 0
    %v1396 = vsub.s32 0, %v423
    %v1397 = vsel %vm1395, %v1396, %v423
    %vm1398 = vcmp.lt.s32.totalorder %v424, 0
    %v1399 = vsub.s32 0, %v424
    %v1400 = vsel %vm1398, %v1399, %v424
    %vm1401 = vcmp.lt.s32.totalorder %v425, 0
    %v1402 = vsub.s32 0, %v425
    %v1403 = vsel %vm1401, %v1402, %v425
    %vm1404 = vcmp.lt.s32.totalorder %v426, 0
    %v1405 = vsub.s32 0, %v426
    %v1406 = vsel %vm1404, %v1405, %v426
    %vm1407 = vcmp.lt.s32.totalorder %v427, 0
    %v1408 = vsub.s32 0, %v427
    %v1409 = vsel %vm1407, %v1408, %v427
    %vm1410 = vcmp.lt.s32.totalorder %v428, 0
    %v1411 = vsub.s32 0, %v428
    %v1412 = vsel %vm1410, %v1411, %v428
    %vm1413 = vcmp.lt.s32.totalorder %v429, 0
    %v1414 = vsub.s32 0, %v429
    %v1415 = vsel %vm1413, %v1414, %v429
    %vm1416 = vcmp.lt.s32.totalorder %v430, 0
    %v1417 = vsub.s32 0, %v430
    %v1418 = vsel %vm1416, %v1417, %v430
    %vm1419 = vcmp.lt.s32.totalorder %v431, 0
    %v1420 = vsub.s32 0, %v431
    %v1421 = vsel %vm1419, %v1420, %v431
    %vm1422 = vcmp.lt.s32.totalorder %v432, 0
    %v1423 = vsub.s32 0, %v432
    %v1424 = vsel %vm1422, %v1423, %v432
    %vm1425 = vcmp.lt.s32.totalorder %v433, 0
    %v1426 = vsub.s32 0, %v433
    %v1427 = vsel %vm1425, %v1426, %v433
    %vm1428 = vcmp.lt.s32.totalorder %v434, 0
    %v1429 = vsub.s32 0, %v434
    %v1430 = vsel %vm1428, %v1429, %v434
    %vm1431 = vcmp.lt.s32.totalorder %v435, 0
    %v1432 = vsub.s32 0, %v435
    %v1433 = vsel %vm1431, %v1432, %v435
    %vm1434 = vcmp.lt.s32.totalorder %v436, 0
    %v1435 = vsub.s32 0, %v436
    %v1436 = vsel %vm1434, %v1435, %v436
    %vm1437 = vcmp.lt.s32.totalorder %v437, 0
    %v1438 = vsub.s32 0, %v437
    %v1439 = vsel %vm1437, %v1438, %v437
    %vm1440 = vcmp.lt.s32.totalorder %v438, 0
    %v1441 = vsub.s32 0, %v438
    %v1442 = vsel %vm1440, %v1441, %v438
    %vm1443 = vcmp.lt.s32.totalorder %v439, 0
    %v1444 = vsub.s32 0, %v439
    %v1445 = vsel %vm1443, %v1444, %v439
    %vm1446 = vcmp.lt.s32.totalorder %v440, 0
    %v1447 = vsub.s32 0, %v440
    %v1448 = vsel %vm1446, %v1447, %v440
    %vm1449 = vcmp.lt.s32.totalorder %v441, 0
    %v1450 = vsub.s32 0, %v441
    %v1451 = vsel %vm1449, %v1450, %v441
    %vm1452 = vcmp.lt.s32.totalorder %v442, 0
    %v1453 = vsub.s32 0, %v442
    %v1454 = vsel %vm1452, %v1453, %v442
    %vm1455 = vcmp.lt.s32.totalorder %v443, 0
    %v1456 = vsub.s32 0, %v443
    %v1457 = vsel %vm1455, %v1456, %v443
    %vm1458 = vcmp.lt.s32.totalorder %v444, 0
    %v1459 = vsub.s32 0, %v444
    %v1460 = vsel %vm1458, %v1459, %v444
    %vm1461 = vcmp.lt.s32.totalorder %v445, 0
    %v1462 = vsub.s32 0, %v445
    %v1463 = vsel %vm1461, %v1462, %v445
    %vm1464 = vcmp.lt.s32.totalorder %v446, 0
    %v1465 = vsub.s32 0, %v446
    %v1466 = vsel %vm1464, %v1465, %v446
    %vm1467 = vcmp.lt.s32.totalorder %v447, 0
    %v1468 = vsub.s32 0, %v447
    %v1469 = vsel %vm1467, %v1468, %v447
    %vm1470 = vcmp.lt.s32.totalorder %v448, 0
    %v1471 = vsub.s32 0, %v448
    %v1472 = vsel %vm1470, %v1471, %v448
    %vm1473 = vcmp.lt.s32.totalorder %v449, 0
    %v1474 = vsub.s32 0, %v449
    %v1475 = vsel %vm1473, %v1474, %v449
    %vm1476 = vcmp.lt.s32.totalorder %v450, 0
    %v1477 = vsub.s32 0, %v450
    %v1478 = vsel %vm1476, %v1477, %v450
    %vm1479 = vcmp.lt.s32.totalorder %v451, 0
    %v1480 = vsub.s32 0, %v451
    %v1481 = vsel %vm1479, %v1480, %v451
    %vm1482 = vcmp.lt.s32.totalorder %v452, 0
    %v1483 = vsub.s32 0, %v452
    %v1484 = vsel %vm1482, %v1483, %v452
    %vm1485 = vcmp.lt.s32.totalorder %v453, 0
    %v1486 = vsub.s32 0, %v453
    %v1487 = vsel %vm1485, %v1486, %v453
    %vm1488 = vcmp.lt.s32.totalorder %v454, 0
    %v1489 = vsub.s32 0, %v454
    %v1490 = vsel %vm1488, %v1489, %v454
    %vm1491 = vcmp.lt.s32.totalorder %v455, 0
    %v1492 = vsub.s32 0, %v455
    %v1493 = vsel %vm1491, %v1492, %v455
    %vm1494 = vcmp.lt.s32.totalorder %v456, 0
    %v1495 = vsub.s32 0, %v456
    %v1496 = vsel %vm1494, %v1495, %v456
    %vm1497 = vcmp.lt.s32.totalorder %v457, 0
    %v1498 = vsub.s32 0, %v457
    %v1499 = vsel %vm1497, %v1498, %v457
    %vm1500 = vcmp.lt.s32.totalorder %v458, 0
    %v1501 = vsub.s32 0, %v458
    %v1502 = vsel %vm1500, %v1501, %v458
    %vm1503 = vcmp.lt.s32.totalorder %v459, 0
    %v1504 = vsub.s32 0, %v459
    %v1505 = vsel %vm1503, %v1504, %v459
    %vm1506 = vcmp.lt.s32.totalorder %v460, 0
    %v1507 = vsub.s32 0, %v460
    %v1508 = vsel %vm1506, %v1507, %v460
    %vm1509 = vcmp.lt.s32.totalorder %v461, 0
    %v1510 = vsub.s32 0, %v461
    %v1511 = vsel %vm1509, %v1510, %v461
    %vm1512 = vcmp.lt.s32.totalorder %v462, 0
    %v1513 = vsub.s32 0, %v462
    %v1514 = vsel %vm1512, %v1513, %v462
    %vm1515 = vcmp.lt.s32.totalorder %v463, 0
    %v1516 = vsub.s32 0, %v463
    %v1517 = vsel %vm1515, %v1516, %v463
    %vm1518 = vcmp.lt.s32.totalorder %v464, 0
    %v1519 = vsub.s32 0, %v464
    %v1520 = vsel %vm1518, %v1519, %v464
    %vm1521 = vcmp.lt.s32.totalorder %v465, 0
    %v1522 = vsub.s32 0, %v465
    %v1523 = vsel %vm1521, %v1522, %v465
    %vm1524 = vcmp.lt.s32.totalorder %v466, 0
    %v1525 = vsub.s32 0, %v466
    %v1526 = vsel %vm1524, %v1525, %v466
    %vm1527 = vcmp.lt.s32.totalorder %v467, 0
    %v1528 = vsub.s32 0, %v467
    %v1529 = vsel %vm1527, %v1528, %v467
    %vm1530 = vcmp.lt.s32.totalorder %v468, 0
    %v1531 = vsub.s32 0, %v468
    %v1532 = vsel %vm1530, %v1531, %v468
    %vm1533 = vcmp.lt.s32.totalorder %v469, 0
    %v1534 = vsub.s32 0, %v469
    %v1535 = vsel %vm1533, %v1534, %v469
    %vm1536 = vcmp.lt.s32.totalorder %v470, 0
    %v1537 = vsub.s32 0, %v470
    %v1538 = vsel %vm1536, %v1537, %v470
    %vm1539 = vcmp.lt.s32.totalorder %v471, 0
    %v1540 = vsub.s32 0, %v471
    %v1541 = vsel %vm1539, %v1540, %v471
    %vm1542 = vcmp.lt.s32.totalorder %v472, 0
    %v1543 = vsub.s32 0, %v472
    %v1544 = vsel %vm1542, %v1543, %v472
    %vm1545 = vcmp.lt.s32.totalorder %v473, 0
    %v1546 = vsub.s32 0, %v473
    %v1547 = vsel %vm1545, %v1546, %v473
    %vm1548 = vcmp.lt.s32.totalorder %v474, 0
    %v1549 = vsub.s32 0, %v474
    %v1550 = vsel %vm1548, %v1549, %v474
    %vm1551 = vcmp.lt.s32.totalorder %v475, 0
    %v1552 = vsub.s32 0, %v475
    %v1553 = vsel %vm1551, %v1552, %v475
    %vm1554 = vcmp.lt.s32.totalorder %v476, 0
    %v1555 = vsub.s32 0, %v476
    %v1556 = vsel %vm1554, %v1555, %v476
    %vm1557 = vcmp.lt.s32.totalorder %v477, 0
    %v1558 = vsub.s32 0, %v477
    %v1559 = vsel %vm1557, %v1558, %v477
    %vm1560 = vcmp.lt.s32.totalorder %v478, 0
    %v1561 = vsub.s32 0, %v478
    %v1562 = vsel %vm1560, %v1561, %v478
    %vm1563 = vcmp.lt.s32.totalorder %v479, 0
    %v1564 = vsub.s32 0, %v479
    %v1565 = vsel %vm1563, %v1564, %v479
    %vm1566 = vcmp.lt.s32.totalorder %v480, 0
    %v1567 = vsub.s32 0, %v480
    %v1568 = vsel %vm1566, %v1567, %v480
    %vm1569 = vcmp.lt.s32.totalorder %v481, 0
    %v1570 = vsub.s32 0, %v481
    %v1571 = vsel %vm1569, %v1570, %v481
    %vm1572 = vcmp.lt.s32.totalorder %v482, 0
    %v1573 = vsub.s32 0, %v482
    %v1574 = vsel %vm1572, %v1573, %v482
    %vm1575 = vcmp.lt.s32.totalorder %v483, 0
    %v1576 = vsub.s32 0, %v483
    %v1577 = vsel %vm1575, %v1576, %v483
    %vm1578 = vcmp.lt.s32.totalorder %v484, 0
    %v1579 = vsub.s32 0, %v484
    %v1580 = vsel %vm1578, %v1579, %v484
    %vm1581 = vcmp.lt.s32.totalorder %v485, 0
    %v1582 = vsub.s32 0, %v485
    %v1583 = vsel %vm1581, %v1582, %v485
    %vm1584 = vcmp.lt.s32.totalorder %v486, 0
    %v1585 = vsub.s32 0, %v486
    %v1586 = vsel %vm1584, %v1585, %v486
    %vm1587 = vcmp.lt.s32.totalorder %v487, 0
    %v1588 = vsub.s32 0, %v487
    %v1589 = vsel %vm1587, %v1588, %v487
    %vm1590 = vcmp.lt.s32.totalorder %v488, 0
    %v1591 = vsub.s32 0, %v488
    %v1592 = vsel %vm1590, %v1591, %v488
    %vm1593 = vcmp.lt.s32.totalorder %v489, 0
    %v1594 = vsub.s32 0, %v489
    %v1595 = vsel %vm1593, %v1594, %v489
    %vm1596 = vcmp.lt.s32.totalorder %v490, 0
    %v1597 = vsub.s32 0, %v490
    %v1598 = vsel %vm1596, %v1597, %v490
    %vm1599 = vcmp.lt.s32.totalorder %v491, 0
    %v1600 = vsub.s32 0, %v491
    %v1601 = vsel %vm1599, %v1600, %v491
    %vm1602 = vcmp.lt.s32.totalorder %v492, 0
    %v1603 = vsub.s32 0, %v492
    %v1604 = vsel %vm1602, %v1603, %v492
    %vm1605 = vcmp.lt.s32.totalorder %v493, 0
    %v1606 = vsub.s32 0, %v493
    %v1607 = vsel %vm1605, %v1606, %v493
    %vm1608 = vcmp.lt.s32.totalorder %v494, 0
    %v1609 = vsub.s32 0, %v494
    %v1610 = vsel %vm1608, %v1609, %v494
    %vm1611 = vcmp.lt.s32.totalorder %v495, 0
    %v1612 = vsub.s32 0, %v495
    %v1613 = vsel %vm1611, %v1612, %v495
    %vm1614 = vcmp.lt.s32.totalorder %v496, 0
    %v1615 = vsub.s32 0, %v496
    %v1616 = vsel %vm1614, %v1615, %v496
    %vm1617 = vcmp.lt.s32.totalorder %v497, 0
    %v1618 = vsub.s32 0, %v497
    %v1619 = vsel %vm1617, %v1618, %v497
    %vm1620 = vcmp.lt.s32.totalorder %v498, 0
    %v1621 = vsub.s32 0, %v498
    %v1622 = vsel %vm1620, %v1621, %v498
    %vm1623 = vcmp.lt.s32.totalorder %v499, 0
    %v1624 = vsub.s32 0, %v499
    %v1625 = vsel %vm1623, %v1624, %v499
    %vm1626 = vcmp.lt.s32.totalorder %v500, 0
    %v1627 = vsub.s32 0, %v500
    %v1628 = vsel %vm1626, %v1627, %v500
    %vm1629 = vcmp.lt.s32.totalorder %v501, 0
    %v1630 = vsub.s32 0, %v501
    %v1631 = vsel %vm1629, %v1630, %v501
    %vm1632 = vcmp.lt.s32.totalorder %v502, 0
    %v1633 = vsub.s32 0, %v502
    %v1634 = vsel %vm1632, %v1633, %v502
    %vm1635 = vcmp.lt.s32.totalorder %v503, 0
    %v1636 = vsub.s32 0, %v503
    %v1637 = vsel %vm1635, %v1636, %v503
    %vm1638 = vcmp.lt.s32.totalorder %v504, 0
    %v1639 = vsub.s32 0, %v504
    %v1640 = vsel %vm1638, %v1639, %v504
    %vm1641 = vcmp.lt.s32.totalorder %v505, 0
    %v1642 = vsub.s32 0, %v505
    %v1643 = vsel %vm1641, %v1642, %v505
    %vm1644 = vcmp.lt.s32.totalorder %v506, 0
    %v1645 = vsub.s32 0, %v506
    %v1646 = vsel %vm1644, %v1645, %v506
    %vm1647 = vcmp.lt.s32.totalorder %v507, 0
    %v1648 = vsub.s32 0, %v507
    %v1649 = vsel %vm1647, %v1648, %v507
    %vm1650 = vcmp.lt.s32.totalorder %v508, 0
    %v1651 = vsub.s32 0, %v508
    %v1652 = vsel %vm1650, %v1651, %v508
    %vm1653 = vcmp.lt.s32.totalorder %v509, 0
    %v1654 = vsub.s32 0, %v509
    %v1655 = vsel %vm1653, %v1654, %v509
    %vm1656 = vcmp.lt.s32.totalorder %v510, 0
    %v1657 = vsub.s32 0, %v510
    %v1658 = vsel %vm1656, %v1657, %v510
    %vm1659 = vcmp.lt.s32.totalorder %v511, 0
    %v1660 = vsub.s32 0, %v511
    %v1661 = vsel %vm1659, %v1660, %v511
    %vm1662 = vcmp.lt.s32.totalorder %v512, 0
    %v1663 = vsub.s32 0, %v512
    %v1664 = vsel %vm1662, %v1663, %v512
    %vm1665 = vcmp.lt.s32.totalorder %v513, 0
    %v1666 = vsub.s32 0, %v513
    %v1667 = vsel %vm1665, %v1666, %v513
    %vm1668 = vcmp.lt.s32.totalorder %v514, 0
    %v1669 = vsub.s32 0, %v514
    %v1670 = vsel %vm1668, %v1669, %v514
    %vm1671 = vcmp.lt.s32.totalorder %v515, 0
    %v1672 = vsub.s32 0, %v515
    %v1673 = vsel %vm1671, %v1672, %v515
    %vm1674 = vcmp.lt.s32.totalorder %v516, 0
    %v1675 = vsub.s32 0, %v516
    %v1676 = vsel %vm1674, %v1675, %v516
    %vm1677 = vcmp.lt.s32.totalorder %v517, 0
    %v1678 = vsub.s32 0, %v517
    %v1679 = vsel %vm1677, %v1678, %v517
    %vm1680 = vcmp.lt.s32.totalorder %v518, 0
    %v1681 = vsub.s32 0, %v518
    %v1682 = vsel %vm1680, %v1681, %v518
    %vm1683 = vcmp.lt.s32.totalorder %v519, 0
    %v1684 = vsub.s32 0, %v519
    %v1685 = vsel %vm1683, %v1684, %v519
    %vm1686 = vcmp.lt.s32.totalorder %v520, 0
    %v1687 = vsub.s32 0, %v520
    %v1688 = vsel %vm1686, %v1687, %v520
    %vm1689 = vcmp.lt.s32.totalorder %v521, 0
    %v1690 = vsub.s32 0, %v521
    %v1691 = vsel %vm1689, %v1690, %v521
    %vm1692 = vcmp.lt.s32.totalorder %v522, 0
    %v1693 = vsub.s32 0, %v522
    %v1694 = vsel %vm1692, %v1693, %v522
    %vm1695 = vcmp.lt.s32.totalorder %v523, 0
    %v1696 = vsub.s32 0, %v523
    %v1697 = vsel %vm1695, %v1696, %v523
    %vm1698 = vcmp.lt.s32.totalorder %v524, 0
    %v1699 = vsub.s32 0, %v524
    %v1700 = vsel %vm1698, %v1699, %v524
    %vm1701 = vcmp.lt.s32.totalorder %v525, 0
    %v1702 = vsub.s32 0, %v525
    %v1703 = vsel %vm1701, %v1702, %v525
    %vm1704 = vcmp.lt.s32.totalorder %v526, 0
    %v1705 = vsub.s32 0, %v526
    %v1706 = vsel %vm1704, %v1705, %v526
    %vm1707 = vcmp.lt.s32.totalorder %v527, 0
    %v1708 = vsub.s32 0, %v527
    %v1709 = vsel %vm1707, %v1708, %v527
    %vm1710 = vcmp.lt.s32.totalorder %v528, 0
    %v1711 = vsub.s32 0, %v528
    %v1712 = vsel %vm1710, %v1711, %v528
    %vm1713 = vcmp.lt.s32.totalorder %v529, 0
    %v1714 = vsub.s32 0, %v529
    %v1715 = vsel %vm1713, %v1714, %v529
    %vm1716 = vcmp.lt.s32.totalorder %v530, 0
    %v1717 = vsub.s32 0, %v530
    %v1718 = vsel %vm1716, %v1717, %v530
    %vm1719 = vcmp.lt.s32.totalorder %v531, 0
    %v1720 = vsub.s32 0, %v531
    %v1721 = vsel %vm1719, %v1720, %v531
    %vm1722 = vcmp.lt.s32.totalorder %v532, 0
    %v1723 = vsub.s32 0, %v532
    %v1724 = vsel %vm1722, %v1723, %v532
    %vm1725 = vcmp.lt.s32.totalorder %v533, 0
    %v1726 = vsub.s32 0, %v533
    %v1727 = vsel %vm1725, %v1726, %v533
    %vm1728 = vcmp.lt.s32.totalorder %v534, 0
    %v1729 = vsub.s32 0, %v534
    %v1730 = vsel %vm1728, %v1729, %v534
    %vm1731 = vcmp.lt.s32.totalorder %v535, 0
    %v1732 = vsub.s32 0, %v535
    %v1733 = vsel %vm1731, %v1732, %v535
    %vm1734 = vcmp.lt.s32.totalorder %v536, 0
    %v1735 = vsub.s32 0, %v536
    %v1736 = vsel %vm1734, %v1735, %v536
    %vm1737 = vcmp.le.s32.totalorder %v539, 3
    %vm1738 = vcmp.le.s32.totalorder %v542, 3
    %vm1739 = vcmp.le.s32.totalorder %v545, 3
    %vm1740 = vcmp.le.s32.totalorder %v548, 3
    %vm1741 = vcmp.le.s32.totalorder %v551, 3
    %vm1742 = vcmp.le.s32.totalorder %v554, 3
    %vm1743 = vcmp.le.s32.totalorder %v557, 3
    %vm1744 = vcmp.le.s32.totalorder %v560, 3
    %vm1745 = vcmp.le.s32.totalorder %v563, 3
    %vm1746 = vcmp.le.s32.totalorder %v566, 3
    %vm1747 = vcmp.le.s32.totalorder %v569, 3
    %vm1748 = vcmp.le.s32.totalorder %v572, 3
    %vm1749 = vcmp.le.s32.totalorder %v575, 3
    %vm1750 = vcmp.le.s32.totalorder %v578, 3
    %vm1751 = vcmp.le.s32.totalorder %v581, 3
    %vm1752 = vcmp.le.s32.totalorder %v584, 3
    %vm1753 = vcmp.le.s32.totalorder %v587, 3
    %vm1754 = vcmp.le.s32.totalorder %v590, 3
    %vm1755 = vcmp.le.s32.totalorder %v593, 3
    %vm1756 = vcmp.le.s32.totalorder %v596, 3
    %vm1757 = vcmp.le.s32.totalorder %v599, 3
    %vm1758 = vcmp.le.s32.totalorder %v602, 3
    %vm1759 = vcmp.le.s32.totalorder %v605, 3
    %vm1760 = vcmp.le.s32.totalorder %v608, 3
    %vm1761 = vcmp.le.s32.totalorder %v611, 3
    %vm1762 = vcmp.le.s32.totalorder %v614, 3
    %vm1763 = vcmp.le.s32.totalorder %v617, 3
    %vm1764 = vcmp.le.s32.totalorder %v620, 3
    %vm1765 = vcmp.le.s32.totalorder %v623, 3
    %vm1766 = vcmp.le.s32.totalorder %v626, 3
    %vm1767 = vcmp.le.s32.totalorder %v629, 3
    %vm1768 = vcmp.le.s32.totalorder %v632, 3
    %vm1769 = vcmp.le.s32.totalorder %v635, 3
    %vm1770 = vcmp.le.s32.totalorder %v638, 3
    %vm1771 = vcmp.le.s32.totalorder %v641, 3
    %vm1772 = vcmp.le.s32.totalorder %v644, 3
    %vm1773 = vcmp.le.s32.totalorder %v647, 3
    %vm1774 = vcmp.le.s32.totalorder %v650, 3
    %vm1775 = vcmp.le.s32.totalorder %v653, 3
    %vm1776 = vcmp.le.s32.totalorder %v656, 3
    %vm1777 = vcmp.le.s32.totalorder %v659, 3
    %vm1778 = vcmp.le.s32.totalorder %v662, 3
    %vm1779 = vcmp.le.s32.totalorder %v665, 3
    %vm1780 = vcmp.le.s32.totalorder %v668, 3
    %vm1781 = vcmp.le.s32.totalorder %v671, 3
    %vm1782 = vcmp.le.s32.totalorder %v674, 3
    %vm1783 = vcmp.le.s32.totalorder %v677, 3
    %vm1784 = vcmp.le.s32.totalorder %v680, 3
    %vm1785 = vcmp.le.s32.totalorder %v683, 3
    %vm1786 = vcmp.le.s32.totalorder %v686, 3
    %vm1787 = vcmp.le.s32.totalorder %v689, 3
    %vm1788 = vcmp.le.s32.totalorder %v692, 3
    %vm1789 = vcmp.le.s32.totalorder %v695, 3
    %vm1790 = vcmp.le.s32.totalorder %v698, 3
    %vm1791 = vcmp.le.s32.totalorder %v701, 3
    %vm1792 = vcmp.le.s32.totalorder %v704, 3
    %vm1793 = vcmp.le.s32.totalorder %v707, 3
    %vm1794 = vcmp.le.s32.totalorder %v710, 3
    %vm1795 = vcmp.le.s32.totalorder %v713, 3
    %vm1796 = vcmp.le.s32.totalorder %v716, 3
    %vm1797 = vcmp.le.s32.totalorder %v719, 3
    %vm1798 = vcmp.le.s32.totalorder %v722, 3
    %vm1799 = vcmp.le.s32.totalorder %v725, 3
    %vm1800 = vcmp.le.s32.totalorder %v728, 3
    %vm1801 = vcmp.le.s32.totalorder %v731, 3
    %vm1802 = vcmp.le.s32.totalorder %v734, 3
    %vm1803 = vcmp.le.s32.totalorder %v737, 3
    %vm1804 = vcmp.le.s32.totalorder %v740, 3
    %vm1805 = vcmp.le.s32.totalorder %v743, 3
    %vm1806 = vcmp.le.s32.totalorder %v746, 3
    %vm1807 = vcmp.le.s32.totalorder %v749, 3
    %vm1808 = vcmp.le.s32.totalorder %v752, 3
    %vm1809 = vcmp.le.s32.totalorder %v755, 3
    %vm1810 = vcmp.le.s32.totalorder %v758, 3
    %vm1811 = vcmp.le.s32.totalorder %v761, 3
    %vm1812 = vcmp.le.s32.totalorder %v764, 3
    %vm1813 = vcmp.le.s32.totalorder %v767, 3
    %vm1814 = vcmp.le.s32.totalorder %v770, 3
    %vm1815 = vcmp.le.s32.totalorder %v773, 3
    %vm1816 = vcmp.le.s32.totalorder %v776, 3
    %vm1817 = vcmp.le.s32.totalorder %v779, 3
    %vm1818 = vcmp.le.s32.totalorder %v782, 3
    %vm1819 = vcmp.le.s32.totalorder %v785, 3
    %vm1820 = vcmp.le.s32.totalorder %v788, 3
    %vm1821 = vcmp.le.s32.totalorder %v791, 3
    %vm1822 = vcmp.le.s32.totalorder %v794, 3
    %vm1823 = vcmp.le.s32.totalorder %v797, 3
    %vm1824 = vcmp.le.s32.totalorder %v800, 3
    %vm1825 = vcmp.le.s32.totalorder %v803, 3
    %vm1826 = vcmp.le.s32.totalorder %v806, 3
    %vm1827 = vcmp.le.s32.totalorder %v809, 3
    %vm1828 = vcmp.le.s32.totalorder %v812, 3
    %vm1829 = vcmp.le.s32.totalorder %v815, 3
    %vm1830 = vcmp.le.s32.totalorder %v818, 3
    %vm1831 = vcmp.le.s32.totalorder %v821, 3
    %vm1832 = vcmp.le.s32.totalorder %v824, 3
    %vm1833 = vcmp.le.s32.totalorder %v827, 3
    %vm1834 = vcmp.le.s32.totalorder %v830, 3
    %vm1835 = vcmp.le.s32.totalorder %v833, 3
    %vm1836 = vcmp.le.s32.totalorder %v836, 3
    %vm1837 = vcmp.le.s32.totalorder %v839, 3
    %vm1838 = vcmp.le.s32.totalorder %v842, 3
    %vm1839 = vcmp.le.s32.totalorder %v845, 3
    %vm1840 = vcmp.le.s32.totalorder %v848, 3
    %vm1841 = vcmp.le.s32.totalorder %v851, 3
    %vm1842 = vcmp.le.s32.totalorder %v854, 3
    %vm1843 = vcmp.le.s32.totalorder %v857, 3
    %vm1844 = vcmp.le.s32.totalorder %v860, 3
    %vm1845 = vcmp.le.s32.totalorder %v863, 3
    %vm1846 = vcmp.le.s32.totalorder %v866, 3
    %vm1847 = vcmp.le.s32.totalorder %v869, 3
    %vm1848 = vcmp.le.s32.totalorder %v872, 3
    %vm1849 = vcmp.le.s32.totalorder %v875, 3
    %vm1850 = vcmp.le.s32.totalorder %v878, 3
    %vm1851 = vcmp.le.s32.totalorder %v881, 3
    %vm1852 = vcmp.le.s32.totalorder %v884, 3
    %vm1853 = vcmp.le.s32.totalorder %v887, 3
    %vm1854 = vcmp.le.s32.totalorder %v890, 3
    %vm1855 = vcmp.le.s32.totalorder %v893, 3
    %vm1856 = vcmp.le.s32.totalorder %v896, 3
    %vm1857 = vcmp.le.s32.totalorder %v899, 3
    %vm1858 = vcmp.le.s32.totalorder %v902, 3
    %vm1859 = vcmp.le.s32.totalorder %v905, 3
    %vm1860 = vcmp.le.s32.totalorder %v908, 3
    %vm1861 = vcmp.le.s32.totalorder %v911, 3
    %vm1862 = vcmp.le.s32.totalorder %v914, 3
    %vm1863 = vcmp.le.s32.totalorder %v917, 3
    %vm1864 = vcmp.le.s32.totalorder %v920, 3
    %vm1865 = vcmp.le.s32.totalorder %v923, 3
    %vm1866 = vcmp.le.s32.totalorder %v926, 3
    %vm1867 = vcmp.le.s32.totalorder %v929, 3
    %vm1868 = vcmp.le.s32.totalorder %v932, 3
    %vm1869 = vcmp.le.s32.totalorder %v935, 3
    %vm1870 = vcmp.le.s32.totalorder %v938, 3
    %vm1871 = vcmp.le.s32.totalorder %v941, 3
    %vm1872 = vcmp.le.s32.totalorder %v944, 3
    %vm1873 = vcmp.le.s32.totalorder %v947, 3
    %vm1874 = vcmp.le.s32.totalorder %v950, 3
    %vm1875 = vcmp.le.s32.totalorder %v953, 3
    %vm1876 = vcmp.le.s32.totalorder %v956, 3
    %vm1877 = vcmp.le.s32.totalorder %v959, 3
    %vm1878 = vcmp.le.s32.totalorder %v962, 3
    %vm1879 = vcmp.le.s32.totalorder %v965, 3
    %vm1880 = vcmp.le.s32.totalorder %v968, 3
    %vm1881 = vcmp.le.s32.totalorder %v971, 3
    %vm1882 = vcmp.le.s32.totalorder %v974, 3
    %vm1883 = vcmp.le.s32.totalorder %v977, 3
    %vm1884 = vcmp.le.s32.totalorder %v980, 3
    %vm1885 = vcmp.le.s32.totalorder %v983, 3
    %vm1886 = vcmp.le.s32.totalorder %v986, 3
    %vm1887 = vcmp.le.s32.totalorder %v989, 3
    %vm1888 = vcmp.le.s32.totalorder %v992, 3
    %vm1889 = vcmp.le.s32.totalorder %v995, 3
    %vm1890 = vcmp.le.s32.totalorder %v998, 3
    %vm1891 = vcmp.le.s32.totalorder %v1001, 3
    %vm1892 = vcmp.le.s32.totalorder %v1004, 3
    %vm1893 = vcmp.le.s32.totalorder %v1007, 3
    %vm1894 = vcmp.le.s32.totalorder %v1010, 3
    %vm1895 = vcmp.le.s32.totalorder %v1013, 3
    %vm1896 = vcmp.le.s32.totalorder %v1016, 3
    %vm1897 = vcmp.le.s32.totalorder %v1019, 3
    %vm1898 = vcmp.le.s32.totalorder %v1022, 3
    %vm1899 = vcmp.le.s32.totalorder %v1025, 3
    %vm1900 = vcmp.le.s32.totalorder %v1028, 3
    %vm1901 = vcmp.le.s32.totalorder %v1031, 3
    %vm1902 = vcmp.le.s32.totalorder %v1034, 3
    %vm1903 = vcmp.le.s32.totalorder %v1037, 3
    %vm1904 = vcmp.le.s32.totalorder %v1040, 3
    %vm1905 = vcmp.le.s32.totalorder %v1043, 3
    %vm1906 = vcmp.le.s32.totalorder %v1046, 3
    %vm1907 = vcmp.le.s32.totalorder %v1049, 3
    %vm1908 = vcmp.le.s32.totalorder %v1052, 3
    %vm1909 = vcmp.le.s32.totalorder %v1055, 3
    %vm1910 = vcmp.le.s32.totalorder %v1058, 3
    %vm1911 = vcmp.le.s32.totalorder %v1061, 3
    %vm1912 = vcmp.le.s32.totalorder %v1064, 3
    %vm1913 = vcmp.le.s32.totalorder %v1067, 3
    %vm1914 = vcmp.le.s32.totalorder %v1070, 3
    %vm1915 = vcmp.le.s32.totalorder %v1073, 3
    %vm1916 = vcmp.le.s32.totalorder %v1076, 3
    %vm1917 = vcmp.le.s32.totalorder %v1079, 3
    %vm1918 = vcmp.le.s32.totalorder %v1082, 3
    %vm1919 = vcmp.le.s32.totalorder %v1085, 3
    %vm1920 = vcmp.le.s32.totalorder %v1088, 3
    %vm1921 = vcmp.le.s32.totalorder %v1091, 3
    %vm1922 = vcmp.le.s32.totalorder %v1094, 3
    %vm1923 = vcmp.le.s32.totalorder %v1097, 3
    %vm1924 = vcmp.le.s32.totalorder %v1100, 3
    %vm1925 = vcmp.le.s32.totalorder %v1103, 3
    %vm1926 = vcmp.le.s32.totalorder %v1106, 3
    %vm1927 = vcmp.le.s32.totalorder %v1109, 3
    %vm1928 = vcmp.le.s32.totalorder %v1112, 3
    %vm1929 = vcmp.le.s32.totalorder %v1115, 3
    %vm1930 = vcmp.le.s32.totalorder %v1118, 3
    %vm1931 = vcmp.le.s32.totalorder %v1121, 3
    %vm1932 = vcmp.le.s32.totalorder %v1124, 3
    %vm1933 = vcmp.le.s32.totalorder %v1127, 3
    %vm1934 = vcmp.le.s32.totalorder %v1130, 3
    %vm1935 = vcmp.le.s32.totalorder %v1133, 3
    %vm1936 = vcmp.le.s32.totalorder %v1136, 3
    %vm1937 = vcmp.le.s32.totalorder %v1139, 3
    %vm1938 = vcmp.le.s32.totalorder %v1142, 3
    %vm1939 = vcmp.le.s32.totalorder %v1145, 3
    %vm1940 = vcmp.le.s32.totalorder %v1148, 3
    %vm1941 = vcmp.le.s32.totalorder %v1151, 3
    %vm1942 = vcmp.le.s32.totalorder %v1154, 3
    %vm1943 = vcmp.le.s32.totalorder %v1157, 3
    %vm1944 = vcmp.le.s32.totalorder %v1160, 3
    %vm1945 = vcmp.le.s32.totalorder %v1163, 3
    %vm1946 = vcmp.le.s32.totalorder %v1166, 3
    %vm1947 = vcmp.le.s32.totalorder %v1169, 3
    %vm1948 = vcmp.le.s32.totalorder %v1172, 3
    %vm1949 = vcmp.le.s32.totalorder %v1175, 3
    %vm1950 = vcmp.le.s32.totalorder %v1178, 3
    %vm1951 = vcmp.le.s32.totalorder %v1181, 3
    %vm1952 = vcmp.le.s32.totalorder %v1184, 3
    %vm1953 = vcmp.le.s32.totalorder %v1187, 3
    %vm1954 = vcmp.le.s32.totalorder %v1190, 3
    %vm1955 = vcmp.le.s32.totalorder %v1193, 3
    %vm1956 = vcmp.le.s32.totalorder %v1196, 3
    %vm1957 = vcmp.le.s32.totalorder %v1199, 3
    %vm1958 = vcmp.le.s32.totalorder %v1202, 3
    %vm1959 = vcmp.le.s32.totalorder %v1205, 3
    %vm1960 = vcmp.le.s32.totalorder %v1208, 3
    %vm1961 = vcmp.le.s32.totalorder %v1211, 3
    %vm1962 = vcmp.le.s32.totalorder %v1214, 3
    %vm1963 = vcmp.le.s32.totalorder %v1217, 3
    %vm1964 = vcmp.le.s32.totalorder %v1220, 3
    %vm1965 = vcmp.le.s32.totalorder %v1223, 3
    %vm1966 = vcmp.le.s32.totalorder %v1226, 3
    %vm1967 = vcmp.le.s32.totalorder %v1229, 3
    %vm1968 = vcmp.le.s32.totalorder %v1232, 3
    %vm1969 = vcmp.le.s32.totalorder %v1235, 3
    %vm1970 = vcmp.le.s32.totalorder %v1238, 3
    %vm1971 = vcmp.le.s32.totalorder %v1241, 3
    %vm1972 = vcmp.le.s32.totalorder %v1244, 3
    %vm1973 = vcmp.le.s32.totalorder %v1247, 3
    %vm1974 = vcmp.le.s32.totalorder %v1250, 3
    %vm1975 = vcmp.le.s32.totalorder %v1253, 3
    %vm1976 = vcmp.le.s32.totalorder %v1256, 3
    %vm1977 = vcmp.le.s32.totalorder %v1259, 3
    %vm1978 = vcmp.le.s32.totalorder %v1262, 3
    %vm1979 = vcmp.le.s32.totalorder %v1265, 3
    %vm1980 = vcmp.le.s32.totalorder %v1268, 3
    %vm1981 = vcmp.le.s32.totalorder %v1271, 3
    %vm1982 = vcmp.le.s32.totalorder %v1274, 3
    %vm1983 = vcmp.le.s32.totalorder %v1277, 3
    %vm1984 = vcmp.le.s32.totalorder %v1280, 3
    %vm1985 = vcmp.le.s32.totalorder %v1283, 3
    %vm1986 = vcmp.le.s32.totalorder %v1286, 3
    %vm1987 = vcmp.le.s32.totalorder %v1289, 3
    %vm1988 = vcmp.le.s32.totalorder %v1292, 3
    %vm1989 = vcmp.le.s32.totalorder %v1295, 3
    %vm1990 = vcmp.le.s32.totalorder %v1298, 3
    %vm1991 = vcmp.le.s32.totalorder %v1301, 3
    %vm1992 = vcmp.le.s32.totalorder %v1304, 3
    %vm1993 = vcmp.le.s32.totalorder %v1307, 3
    %vm1994 = vcmp.le.s32.totalorder %v1310, 3
    %vm1995 = vcmp.le.s32.totalorder %v1313, 3
    %vm1996 = vcmp.le.s32.totalorder %v1316, 3
    %vm1997 = vcmp.le.s32.totalorder %v1319, 3
    %vm1998 = vcmp.le.s32.totalorder %v1322, 3
    %vm1999 = vcmp.le.s32.totalorder %v1325, 3
    %vm2000 = vcmp.le.s32.totalorder %v1328, 3
    %vm2001 = vcmp.le.s32.totalorder %v1331, 3
    %vm2002 = vcmp.le.s32.totalorder %v1334, 3
    %vm2003 = vcmp.le.s32.totalorder %v1337, 3
    %vm2004 = vcmp.le.s32.totalorder %v1340, 3
    %vm2005 = vcmp.le.s32.totalorder %v1343, 3
    %vm2006 = vcmp.le.s32.totalorder %v1346, 3
    %vm2007 = vcmp.le.s32.totalorder %v1349, 3
    %vm2008 = vcmp.le.s32.totalorder %v1352, 3
    %vm2009 = vcmp.le.s32.totalorder %v1355, 3
    %vm2010 = vcmp.le.s32.totalorder %v1358, 3
    %vm2011 = vcmp.le.s32.totalorder %v1361, 3
    %vm2012 = vcmp.le.s32.totalorder %v1364, 3
    %vm2013 = vcmp.le.s32.totalorder %v1367, 3
    %vm2014 = vcmp.le.s32.totalorder %v1370, 3
    %vm2015 = vcmp.le.s32.totalorder %v1373, 3
    %vm2016 = vcmp.le.s32.totalorder %v1376, 3
    %vm2017 = vcmp.le.s32.totalorder %v1379, 3
    %vm2018 = vcmp.le.s32.totalorder %v1382, 3
    %vm2019 = vcmp.le.s32.totalorder %v1385, 3
    %vm2020 = vcmp.le.s32.totalorder %v1388, 3
    %vm2021 = vcmp.le.s32.totalorder %v1391, 3
    %vm2022 = vcmp.le.s32.totalorder %v1394, 3
    %vm2023 = vcmp.le.s32.totalorder %v1397, 3
    %vm2024 = vcmp.le.s32.totalorder %v1400, 3
    %vm2025 = vcmp.le.s32.totalorder %v1403, 3
    %vm2026 = vcmp.le.s32.totalorder %v1406, 3
    %vm2027 = vcmp.le.s32.totalorder %v1409, 3
    %vm2028 = vcmp.le.s32.totalorder %v1412, 3
    %vm2029 = vcmp.le.s32.totalorder %v1415, 3
    %vm2030 = vcmp.le.s32.totalorder %v1418, 3
    %vm2031 = vcmp.le.s32.totalorder %v1421, 3
    %vm2032 = vcmp.le.s32.totalorder %v1424, 3
    %vm2033 = vcmp.le.s32.totalorder %v1427, 3
    %vm2034 = vcmp.le.s32.totalorder %v1430, 3
    %vm2035 = vcmp.le.s32.totalorder %v1433, 3
    %vm2036 = vcmp.le.s32.totalorder %v1436, 3
    %vm2037 = vcmp.le.s32.totalorder %v1439, 3
    %vm2038 = vcmp.le.s32.totalorder %v1442, 3
    %vm2039 = vcmp.le.s32.totalorder %v1445, 3
    %vm2040 = vcmp.le.s32.totalorder %v1448, 3
    %vm2041 = vcmp.le.s32.totalorder %v1451, 3
    %vm2042 = vcmp.le.s32.totalorder %v1454, 3
    %vm2043 = vcmp.le.s32.totalorder %v1457, 3
    %vm2044 = vcmp.le.s32.totalorder %v1460, 3
    %vm2045 = vcmp.le.s32.totalorder %v1463, 3
    %vm2046 = vcmp.le.s32.totalorder %v1466, 3
    %vm2047 = vcmp.le.s32.totalorder %v1469, 3
    %vm2048 = vcmp.le.s32.totalorder %v1472, 3
    %vm2049 = vcmp.le.s32.totalorder %v1475, 3
    %vm2050 = vcmp.le.s32.totalorder %v1478, 3
    %vm2051 = vcmp.le.s32.totalorder %v1481, 3
    %vm2052 = vcmp.le.s32.totalorder %v1484, 3
    %vm2053 = vcmp.le.s32.totalorder %v1487, 3
    %vm2054 = vcmp.le.s32.totalorder %v1490, 3
    %vm2055 = vcmp.le.s32.totalorder %v1493, 3
    %vm2056 = vcmp.le.s32.totalorder %v1496, 3
    %vm2057 = vcmp.le.s32.totalorder %v1499, 3
    %vm2058 = vcmp.le.s32.totalorder %v1502, 3
    %vm2059 = vcmp.le.s32.totalorder %v1505, 3
    %vm2060 = vcmp.le.s32.totalorder %v1508, 3
    %vm2061 = vcmp.le.s32.totalorder %v1511, 3
    %vm2062 = vcmp.le.s32.totalorder %v1514, 3
    %vm2063 = vcmp.le.s32.totalorder %v1517, 3
    %vm2064 = vcmp.le.s32.totalorder %v1520, 3
    %vm2065 = vcmp.le.s32.totalorder %v1523, 3
    %vm2066 = vcmp.le.s32.totalorder %v1526, 3
    %vm2067 = vcmp.le.s32.totalorder %v1529, 3
    %vm2068 = vcmp.le.s32.totalorder %v1532, 3
    %vm2069 = vcmp.le.s32.totalorder %v1535, 3
    %vm2070 = vcmp.le.s32.totalorder %v1538, 3
    %vm2071 = vcmp.le.s32.totalorder %v1541, 3
    %vm2072 = vcmp.le.s32.totalorder %v1544, 3
    %vm2073 = vcmp.le.s32.totalorder %v1547, 3
    %vm2074 = vcmp.le.s32.totalorder %v1550, 3
    %vm2075 = vcmp.le.s32.totalorder %v1553, 3
    %vm2076 = vcmp.le.s32.totalorder %v1556, 3
    %vm2077 = vcmp.le.s32.totalorder %v1559, 3
    %vm2078 = vcmp.le.s32.totalorder %v1562, 3
    %vm2079 = vcmp.le.s32.totalorder %v1565, 3
    %vm2080 = vcmp.le.s32.totalorder %v1568, 3
    %vm2081 = vcmp.le.s32.totalorder %v1571, 3
    %vm2082 = vcmp.le.s32.totalorder %v1574, 3
    %vm2083 = vcmp.le.s32.totalorder %v1577, 3
    %vm2084 = vcmp.le.s32.totalorder %v1580, 3
    %vm2085 = vcmp.le.s32.totalorder %v1583, 3
    %vm2086 = vcmp.le.s32.totalorder %v1586, 3
    %vm2087 = vcmp.le.s32.totalorder %v1589, 3
    %vm2088 = vcmp.le.s32.totalorder %v1592, 3
    %vm2089 = vcmp.le.s32.totalorder %v1595, 3
    %vm2090 = vcmp.le.s32.totalorder %v1598, 3
    %vm2091 = vcmp.le.s32.totalorder %v1601, 3
    %vm2092 = vcmp.le.s32.totalorder %v1604, 3
    %vm2093 = vcmp.le.s32.totalorder %v1607, 3
    %vm2094 = vcmp.le.s32.totalorder %v1610, 3
    %vm2095 = vcmp.le.s32.totalorder %v1613, 3
    %vm2096 = vcmp.le.s32.totalorder %v1616, 3
    %vm2097 = vcmp.le.s32.totalorder %v1619, 3
    %vm2098 = vcmp.le.s32.totalorder %v1622, 3
    %vm2099 = vcmp.le.s32.totalorder %v1625, 3
    %vm2100 = vcmp.le.s32.totalorder %v1628, 3
    %vm2101 = vcmp.le.s32.totalorder %v1631, 3
    %vm2102 = vcmp.le.s32.totalorder %v1634, 3
    %vm2103 = vcmp.le.s32.totalorder %v1637, 3
    %vm2104 = vcmp.le.s32.totalorder %v1640, 3
    %vm2105 = vcmp.le.s32.totalorder %v1643, 3
    %vm2106 = vcmp.le.s32.totalorder %v1646, 3
    %vm2107 = vcmp.le.s32.totalorder %v1649, 3
    %vm2108 = vcmp.le.s32.totalorder %v1652, 3
    %vm2109 = vcmp.le.s32.totalorder %v1655, 3
    %vm2110 = vcmp.le.s32.totalorder %v1658, 3
    %vm2111 = vcmp.le.s32.totalorder %v1661, 3
    %vm2112 = vcmp.le.s32.totalorder %v1664, 3
    %vm2113 = vcmp.le.s32.totalorder %v1667, 3
    %vm2114 = vcmp.le.s32.totalorder %v1670, 3
    %vm2115 = vcmp.le.s32.totalorder %v1673, 3
    %vm2116 = vcmp.le.s32.totalorder %v1676, 3
    %vm2117 = vcmp.le.s32.totalorder %v1679, 3
    %vm2118 = vcmp.le.s32.totalorder %v1682, 3
    %vm2119 = vcmp.le.s32.totalorder %v1685, 3
    %vm2120 = vcmp.le.s32.totalorder %v1688, 3
    %vm2121 = vcmp.le.s32.totalorder %v1691, 3
    %vm2122 = vcmp.le.s32.totalorder %v1694, 3
    %vm2123 = vcmp.le.s32.totalorder %v1697, 3
    %vm2124 = vcmp.le.s32.totalorder %v1700, 3
    %vm2125 = vcmp.le.s32.totalorder %v1703, 3
    %vm2126 = vcmp.le.s32.totalorder %v1706, 3
    %vm2127 = vcmp.le.s32.totalorder %v1709, 3
    %vm2128 = vcmp.le.s32.totalorder %v1712, 3
    %vm2129 = vcmp.le.s32.totalorder %v1715, 3
    %vm2130 = vcmp.le.s32.totalorder %v1718, 3
    %vm2131 = vcmp.le.s32.totalorder %v1721, 3
    %vm2132 = vcmp.le.s32.totalorder %v1724, 3
    %vm2133 = vcmp.le.s32.totalorder %v1727, 3
    %vm2134 = vcmp.le.s32.totalorder %v1730, 3
    %vm2135 = vcmp.le.s32.totalorder %v1733, 3
    %vm2136 = vcmp.le.s32.totalorder %v1736, 3
    %v2137 = vcvt.s32.f32 %v51
    %v2138 = vcvt.s32.f32 %v52
    %v2139 = vcvt.s32.f32 %v53
    %v2140 = vcvt.s32.f32 %v54
    %v2141 = vcvt.s32.f32 %v55
    %v2142 = vcvt.s32.f32 %v56
    %v2143 = vcvt.s32.f32 %v57
    %v2144 = vcvt.s32.f32 %v58
    %v2145 = vcvt.s32.f32 %v59
    %v2146 = vcvt.s32.f32 %v60
    %v2147 = vcvt.s32.f32 %v61
    %v2148 = vcvt.s32.f32 %v62
    %v2149 = vcvt.s32.f32 %v63
    %v2150 = vcvt.s32.f32 %v64
    %v2151 = vcvt.s32.f32 %v65
    %v2152 = vcvt.s32.f32 %v66
    %v2153 = vcvt.s32.f32 %v67
    %v2154 = vcvt.s32.f32 %v68
    %v2155 = vcvt.s32.f32 %v69
    %v2156 = vcvt.s32.f32 %v70
    %v2157 = vcvt.s32.f32 %v71
    %v2158 = vcvt.s32.f32 %v72
    %v2159 = vcvt.s32.f32 %v73
    %v2160 = vcvt.s32.f32 %v74
    %v2161 = vcvt.s32.f32 %v75
    %v2162 = vcvt.s32.f32 %v76
    %v2163 = vcvt.s32.f32 %v77
    %v2164 = vcvt.s32.f32 %v78
    %v2165 = vcvt.s32.f32 %v79
    %v2166 = vcvt.s32.f32 %v80
    %v2167 = vcvt.s32.f32 %v81
    %v2168 = vcvt.s32.f32 %v82
    %v2169 = vcvt.s32.f32 %v83
    %v2170 = vcvt.s32.f32 %v84
    %v2171 = vcvt.s32.f32 %v85
    %v2172 = vcvt.s32.f32 %v86
    %v2173 = vcvt.s32.f32 %v87
    %v2174 = vcvt.s32.f32 %v88
    %v2175 = vcvt.s32.f32 %v89
    %v2176 = vcvt.s32.f32 %v90
    %v2177 = vcvt.s32.f32 %v91
    %v2178 = vcvt.s32.f32 %v92
    %v2179 = vcvt.s32.f32 %v93
    %v2180 = vcvt.s32.f32 %v94
    %v2181 = vcvt.s32.f32 %v95
    %v2182 = vcvt.s32.f32 %v96
    %v2183 = vcvt.s32.f32 %v97
    %v2184 = vcvt.s32.f32 %v98
    %v2185 = vcvt.s32.f32 %v99
    %v2186 = vcvt.s32.f32 %v100
    %v2187 = vcvt.s32.f32 %v101
    %v2188 = vcvt.s32.f32 %v102
    %v2189 = vcvt.s32.f32 %v103
    %v2190 = vcvt.s32.f32 %v104
    %v2191 = vcvt.s32.f32 %v105
    %v2192 = vcvt.s32.f32 %v106
    %v2193 = vcvt.s32.f32 %v107
    %v2194 = vcvt.s32.f32 %v108
    %v2195 = vcvt.s32.f32 %v109
    %v2196 = vcvt.s32.f32 %v110
    %v2197 = vcvt.s32.f32 %v111
    %v2198 = vcvt.s32.f32 %v112
    %v2199 = vcvt.s32.f32 %v113
    %v2200 = vcvt.s32.f32 %v114
    %v2201 = vcvt.s32.f32 %v115
    %v2202 = vcvt.s32.f32 %v116
    %v2203 = vcvt.s32.f32 %v117
    %v2204 = vcvt.s32.f32 %v118
    %v2205 = vcvt.s32.f32 %v119
    %v2206 = vcvt.s32.f32 %v120
    %v2207 = vcvt.s32.f32 %v121
    %v2208 = vcvt.s32.f32 %v122
    %v2209 = vcvt.s32.f32 %v123
    %v2210 = vcvt.s32.f32 %v124
    %v2211 = vcvt.s32.f32 %v125
    %v2212 = vcvt.s32.f32 %v126
    %v2213 = vcvt.s32.f32 %v127
    %v2214 = vcvt.s32.f32 %v128
    %v2215 = vcvt.s32.f32 %v129
    %v2216 = vcvt.s32.f32 %v130
    %v2217 = vadd.f32 %v2137, 0.5
    %v2218 = vadd.f32 %v2138, 0.5
    %v2219 = vadd.f32 %v2139, 0.5
    %v2220 = vadd.f32 %v2140, 0.5
    %v2221 = vadd.f32 %v2141, 0.5
    %v2222 = vadd.f32 %v2142, 0.5
    %v2223 = vadd.f32 %v2143, 0.5
    %v2224 = vadd.f32 %v2144, 0.5
    %v2225 = vadd.f32 %v2145, 0.5
    %v2226 = vadd.f32 %v2146, 0.5
    %v2227 = vadd.f32 %v2147, 0.5
    %v2228 = vadd.f32 %v2148, 0.5
    %v2229 = vadd.f32 %v2149, 0.5
    %v2230 = vadd.f32 %v2150, 0.5
    %v2231 = vadd.f32 %v2151, 0.5
    %v2232 = vadd.f32 %v2152, 0.5
    %v2233 = vadd.f32 %v2153, 0.5
    %v2234 = vadd.f32 %v2154, 0.5
    %v2235 = vadd.f32 %v2155, 0.5
    %v2236 = vadd.f32 %v2156, 0.5
    %v2237 = vadd.f32 %v2157, 0.5
    %v2238 = vadd.f32 %v2158, 0.5
    %v2239 = vadd.f32 %v2159, 0.5
    %v2240 = vadd.f32 %v2160, 0.5
    %v2241 = vadd.f32 %v2161, 0.5
    %v2242 = vadd.f32 %v2162, 0.5
    %v2243 = vadd.f32 %v2163, 0.5
    %v2244 = vadd.f32 %v2164, 0.5
    %v2245 = vadd.f32 %v2165, 0.5
    %v2246 = vadd.f32 %v2166, 0.5
    %v2247 = vadd.f32 %v2167, 0.5
    %v2248 = vadd.f32 %v2168, 0.5
    %v2249 = vadd.f32 %v2169, 0.5
    %v2250 = vadd.f32 %v2170, 0.5
    %v2251 = vadd.f32 %v2171, 0.5
    %v2252 = vadd.f32 %v2172, 0.5
    %v2253 = vadd.f32 %v2173, 0.5
    %v2254 = vadd.f32 %v2174, 0.5
    %v2255 = vadd.f32 %v2175, 0.5
    %v2256 = vadd.f32 %v2176, 0.5
    %v2257 = vadd.f32 %v2177, 0.5
    %v2258 = vadd.f32 %v2178, 0.5
    %v2259 = vadd.f32 %v2179, 0.5
    %v2260 = vadd.f32 %v2180, 0.5
    %v2261 = vadd.f32 %v2181, 0.5
    %v2262 = vadd.f32 %v2182, 0.5
    %v2263 = vadd.f32 %v2183, 0.5
    %v2264 = vadd.f32 %v2184, 0.5
    %v2265 = vadd.f32 %v2185, 0.5
    %v2266 = vadd.f32 %v2186, 0.5
    %v2267 = vadd.f32 %v2187, 0.5
    %v2268 = vadd.f32 %v2188, 0.5
    %v2269 = vadd.f32 %v2189, 0.5
    %v2270 = vadd.f32 %v2190, 0.5
    %v2271 = vadd.f32 %v2191, 0.5
    %v2272 = vadd.f32 %v2192, 0.5
    %v2273 = vadd.f32 %v2193, 0.5
    %v2274 = vadd.f32 %v2194, 0.5
    %v2275 = vadd.f32 %v2195, 0.5
    %v2276 = vadd.f32 %v2196, 0.5
    %v2277 = vadd.f32 %v2197, 0.5
    %v2278 = vadd.f32 %v2198, 0.5
    %v2279 = vadd.f32 %v2199, 0.5
    %v2280 = vadd.f32 %v2200, 0.5
    %v2281 = vadd.f32 %v2201, 0.5
    %v2282 = vadd.f32 %v2202, 0.5
    %v2283 = vadd.f32 %v2203, 0.5
    %v2284 = vadd.f32 %v2204, 0.5
    %v2285 = vadd.f32 %v2205, 0.5
    %v2286 = vadd.f32 %v2206, 0.5
    %v2287 = vadd.f32 %v2207, 0.5
    %v2288 = vadd.f32 %v2208, 0.5
    %v2289 = vadd.f32 %v2209, 0.5
    %v2290 = vadd.f32 %v2210, 0.5
    %v2291 = vadd.f32 %v2211, 0.5
    %v2292 = vadd.f32 %v2212, 0.5
    %v2293 = vadd.f32 %v2213, 0.5
    %v2294 = vadd.f32 %v2214, 0.5
    %v2295 = vadd.f32 %v2215, 0.5
    %v2296 = vadd.f32 %v2216, 0.5
    %v2297 = vmul.f32 %v2217, 0.0625
    %v2298 = vmul.f32 %v2218, 0.0625
    %v2299 = vmul.f32 %v2219, 0.0625
    %v2300 = vmul.f32 %v2220, 0.0625
    %v2301 = vmul.f32 %v2221, 0.0625
    %v2302 = vmul.f32 %v2222, 0.0625
    %v2303 = vmul.f32 %v2223, 0.0625
    %v2304 = vmul.f32 %v2224, 0.0625
    %v2305 = vmul.f32 %v2225, 0.0625
    %v2306 = vmul.f32 %v2226, 0.0625
    %v2307 = vmul.f32 %v2227, 0.0625
    %v2308 = vmul.f32 %v2228, 0.0625
    %v2309 = vmul.f32 %v2229, 0.0625
    %v2310 = vmul.f32 %v2230, 0.0625
    %v2311 = vmul.f32 %v2231, 0.0625
    %v2312 = vmul.f32 %v2232, 0.0625
    %v2313 = vmul.f32 %v2233, 0.0625
    %v2314 = vmul.f32 %v2234, 0.0625
    %v2315 = vmul.f32 %v2235, 0.0625
    %v2316 = vmul.f32 %v2236, 0.0625
    %v2317 = vmul.f32 %v2237, 0.0625
    %v2318 = vmul.f32 %v2238, 0.0625
    %v2319 = vmul.f32 %v2239, 0.0625
    %v2320 = vmul.f32 %v2240, 0.0625
    %v2321 = vmul.f32 %v2241, 0.0625
    %v2322 = vmul.f32 %v2242, 0.0625
    %v2323 = vmul.f32 %v2243, 0.0625
    %v2324 = vmul.f32 %v2244, 0.0625
    %v2325 = vmul.f32 %v2245, 0.0625
    %v2326 = vmul.f32 %v2246, 0.0625
    %v2327 = vmul.f32 %v2247, 0.0625
    %v2328 = vmul.f32 %v2248, 0.0625
    %v2329 = vmul.f32 %v2249, 0.0625
    %v2330 = vmul.f32 %v2250, 0.0625
    %v2331 = vmul.f32 %v2251, 0.0625
    %v2332 = vmul.f32 %v2252, 0.0625
    %v2333 = vmul.f32 %v2253, 0.0625
    %v2334 = vmul.f32 %v2254, 0.0625
    %v2335 = vmul.f32 %v2255, 0.0625
    %v2336 = vmul.f32 %v2256, 0.0625
    %v2337 = vmul.f32 %v2257, 0.0625
    %v2338 = vmul.f32 %v2258, 0.0625
    %v2339 = vmul.f32 %v2259, 0.0625
    %v2340 = vmul.f32 %v2260, 0.0625
    %v2341 = vmul.f32 %v2261, 0.0625
    %v2342 = vmul.f32 %v2262, 0.0625
    %v2343 = vmul.f32 %v2263, 0.0625
    %v2344 = vmul.f32 %v2264, 0.0625
    %v2345 = vmul.f32 %v2265, 0.0625
    %v2346 = vmul.f32 %v2266, 0.0625
    %v2347 = vmul.f32 %v2267, 0.0625
    %v2348 = vmul.f32 %v2268, 0.0625
    %v2349 = vmul.f32 %v2269, 0.0625
    %v2350 = vmul.f32 %v2270, 0.0625
    %v2351 = vmul.f32 %v2271, 0.0625
    %v2352 = vmul.f32 %v2272, 0.0625
    %v2353 = vmul.f32 %v2273, 0.0625
    %v2354 = vmul.f32 %v2274, 0.0625
    %v2355 = vmul.f32 %v2275, 0.0625
    %v2356 = vmul.f32 %v2276, 0.0625
    %v2357 = vmul.f32 %v2277, 0.0625
    %v2358 = vmul.f32 %v2278, 0.0625
    %v2359 = vmul.f32 %v2279, 0.0625
    %v2360 = vmul.f32 %v2280, 0.0625
    %v2361 = vmul.f32 %v2281, 0.0625
    %v2362 = vmul.f32 %v2282, 0.0625
    %v2363 = vmul.f32 %v2283, 0.0625
    %v2364 = vmul.f32 %v2284, 0.0625
    %v2365 = vmul.f32 %v2285, 0.0625
    %v2366 = vmul.f32 %v2286, 0.0625
    %v2367 = vmul.f32 %v2287, 0.0625
    %v2368 = vmul.f32 %v2288, 0.0625
    %v2369 = vmul.f32 %v2289, 0.0625
    %v2370 = vmul.f32 %v2290, 0.0625
    %v2371 = vmul.f32 %v2291, 0.0625
    %v2372 = vmul.f32 %v2292, 0.0625
    %v2373 = vmul.f32 %v2293, 0.0625
    %v2374 = vmul.f32 %v2294, 0.0625
    %v2375 = vmul.f32 %v2295, 0.0625
    %v2376 = vmul.f32 %v2296, 0.0625
    %v2377 = vfloor.f32 %v2297
    %v2378 = vfloor.f32 %v2298
    %v2379 = vfloor.f32 %v2299
    %v2380 = vfloor.f32 %v2300
    %v2381 = vfloor.f32 %v2301
    %v2382 = vfloor.f32 %v2302
    %v2383 = vfloor.f32 %v2303
    %v2384 = vfloor.f32 %v2304
    %v2385 = vfloor.f32 %v2305
    %v2386 = vfloor.f32 %v2306
    %v2387 = vfloor.f32 %v2307
    %v2388 = vfloor.f32 %v2308
    %v2389 = vfloor.f32 %v2309
    %v2390 = vfloor.f32 %v2310
    %v2391 = vfloor.f32 %v2311
    %v2392 = vfloor.f32 %v2312
    %v2393 = vfloor.f32 %v2313
    %v2394 = vfloor.f32 %v2314
    %v2395 = vfloor.f32 %v2315
    %v2396 = vfloor.f32 %v2316
    %v2397 = vfloor.f32 %v2317
    %v2398 = vfloor.f32 %v2318
    %v2399 = vfloor.f32 %v2319
    %v2400 = vfloor.f32 %v2320
    %v2401 = vfloor.f32 %v2321
    %v2402 = vfloor.f32 %v2322
    %v2403 = vfloor.f32 %v2323
    %v2404 = vfloor.f32 %v2324
    %v2405 = vfloor.f32 %v2325
    %v2406 = vfloor.f32 %v2326
    %v2407 = vfloor.f32 %v2327
    %v2408 = vfloor.f32 %v2328
    %v2409 = vfloor.f32 %v2329
    %v2410 = vfloor.f32 %v2330
    %v2411 = vfloor.f32 %v2331
    %v2412 = vfloor.f32 %v2332
    %v2413 = vfloor.f32 %v2333
    %v2414 = vfloor.f32 %v2334
    %v2415 = vfloor.f32 %v2335
    %v2416 = vfloor.f32 %v2336
    %v2417 = vfloor.f32 %v2337
    %v2418 = vfloor.f32 %v2338
    %v2419 = vfloor.f32 %v2339
    %v2420 = vfloor.f32 %v2340
    %v2421 = vfloor.f32 %v2341
    %v2422 = vfloor.f32 %v2342
    %v2423 = vfloor.f32 %v2343
    %v2424 = vfloor.f32 %v2344
    %v2425 = vfloor.f32 %v2345
    %v2426 = vfloor.f32 %v2346
    %v2427 = vfloor.f32 %v2347
    %v2428 = vfloor.f32 %v2348
    %v2429 = vfloor.f32 %v2349
    %v2430 = vfloor.f32 %v2350
    %v2431 = vfloor.f32 %v2351
    %v2432 = vfloor.f32 %v2352
    %v2433 = vfloor.f32 %v2353
    %v2434 = vfloor.f32 %v2354
    %v2435 = vfloor.f32 %v2355
    %v2436 = vfloor.f32 %v2356
    %v2437 = vfloor.f32 %v2357
    %v2438 = vfloor.f32 %v2358
    %v2439 = vfloor.f32 %v2359
    %v2440 = vfloor.f32 %v2360
    %v2441 = vfloor.f32 %v2361
    %v2442 = vfloor.f32 %v2362
    %v2443 = vfloor.f32 %v2363
    %v2444 = vfloor.f32 %v2364
    %v2445 = vfloor.f32 %v2365
    %v2446 = vfloor.f32 %v2366
    %v2447 = vfloor.f32 %v2367
    %v2448 = vfloor.f32 %v2368
    %v2449 = vfloor.f32 %v2369
    %v2450 = vfloor.f32 %v2370
    %v2451 = vfloor.f32 %v2371
    %v2452 = vfloor.f32 %v2372
    %v2453 = vfloor.f32 %v2373
    %v2454 = vfloor.f32 %v2374
    %v2455 = vfloor.f32 %v2375
    %v2456 = vfloor.f32 %v2376
    %v2457 = vcvt.s32.f32 %v132
    %v2458 = vcvt.s32.f32 %v133
    %v2459 = vcvt.s32.f32 %v134
    %v2460 = vcvt.s32.f32 %v135
    %v2461 = vcvt.s32.f32 %v136
    %v2462 = vadd.f32 %v2457, 0.5
    %v2463 = vadd.f32 %v2458, 0.5
    %v2464 = vadd.f32 %v2459, 0.5
    %v2465 = vadd.f32 %v2460, 0.5
    %v2466 = vadd.f32 %v2461, 0.5
    %v2467 = vmul.f32 %v2462, 0.0625
    %v2468 = vmul.f32 %v2463, 0.0625
    %v2469 = vmul.f32 %v2464, 0.0625
    %v2470 = vmul.f32 %v2465, 0.0625
    %v2471 = vmul.f32 %v2466, 0.0625
    %v2472 = vfloor.f32 %v2467
    %v2473 = vfloor.f32 %v2468
    %v2474 = vfloor.f32 %v2469
    %v2475 = vfloor.f32 %v2470
    %v2476 = vfloor.f32 %v2471
    %vm2477 = vcmp.eq.f32.partialorder %v2377, %v2472
    %vm2478 = vcmp.eq.f32.partialorder %v2377, %v2473
    %vm2479 = vcmp.eq.f32.partialorder %v2377, %v2474
    %vm2480 = vcmp.eq.f32.partialorder %v2377, %v2475
    %vm2481 = vcmp.eq.f32.partialorder %v2377, %v2476
    %vm2482 = vcmp.eq.f32.partialorder %v2378, %v2472
    %vm2483 = vcmp.eq.f32.partialorder %v2378, %v2473
    %vm2484 = vcmp.eq.f32.partialorder %v2378, %v2474
    %vm2485 = vcmp.eq.f32.partialorder %v2378, %v2475
    %vm2486 = vcmp.eq.f32.partialorder %v2378, %v2476
    %vm2487 = vcmp.eq.f32.partialorder %v2379, %v2472
    %vm2488 = vcmp.eq.f32.partialorder %v2379, %v2473
    %vm2489 = vcmp.eq.f32.partialorder %v2379, %v2474
    %vm2490 = vcmp.eq.f32.partialorder %v2379, %v2475
    %vm2491 = vcmp.eq.f32.partialorder %v2379, %v2476
    %vm2492 = vcmp.eq.f32.partialorder %v2380, %v2472
    %vm2493 = vcmp.eq.f32.partialorder %v2380, %v2473
    %vm2494 = vcmp.eq.f32.partialorder %v2380, %v2474
    %vm2495 = vcmp.eq.f32.partialorder %v2380, %v2475
    %vm2496 = vcmp.eq.f32.partialorder %v2380, %v2476
    %vm2497 = vcmp.eq.f32.partialorder %v2381, %v2472
    %vm2498 = vcmp.eq.f32.partialorder %v2381, %v2473
    %vm2499 = vcmp.eq.f32.partialorder %v2381, %v2474
    %vm2500 = vcmp.eq.f32.partialorder %v2381, %v2475
    %vm2501 = vcmp.eq.f32.partialorder %v2381, %v2476
    %vm2502 = vcmp.eq.f32.partialorder %v2382, %v2472
    %vm2503 = vcmp.eq.f32.partialorder %v2382, %v2473
    %vm2504 = vcmp.eq.f32.partialorder %v2382, %v2474
    %vm2505 = vcmp.eq.f32.partialorder %v2382, %v2475
    %vm2506 = vcmp.eq.f32.partialorder %v2382, %v2476
    %vm2507 = vcmp.eq.f32.partialorder %v2383, %v2472
    %vm2508 = vcmp.eq.f32.partialorder %v2383, %v2473
    %vm2509 = vcmp.eq.f32.partialorder %v2383, %v2474
    %vm2510 = vcmp.eq.f32.partialorder %v2383, %v2475
    %vm2511 = vcmp.eq.f32.partialorder %v2383, %v2476
    %vm2512 = vcmp.eq.f32.partialorder %v2384, %v2472
    %vm2513 = vcmp.eq.f32.partialorder %v2384, %v2473
    %vm2514 = vcmp.eq.f32.partialorder %v2384, %v2474
    %vm2515 = vcmp.eq.f32.partialorder %v2384, %v2475
    %vm2516 = vcmp.eq.f32.partialorder %v2384, %v2476
    %vm2517 = vcmp.eq.f32.partialorder %v2385, %v2472
    %vm2518 = vcmp.eq.f32.partialorder %v2385, %v2473
    %vm2519 = vcmp.eq.f32.partialorder %v2385, %v2474
    %vm2520 = vcmp.eq.f32.partialorder %v2385, %v2475
    %vm2521 = vcmp.eq.f32.partialorder %v2385, %v2476
    %vm2522 = vcmp.eq.f32.partialorder %v2386, %v2472
    %vm2523 = vcmp.eq.f32.partialorder %v2386, %v2473
    %vm2524 = vcmp.eq.f32.partialorder %v2386, %v2474
    %vm2525 = vcmp.eq.f32.partialorder %v2386, %v2475
    %vm2526 = vcmp.eq.f32.partialorder %v2386, %v2476
    %vm2527 = vcmp.eq.f32.partialorder %v2387, %v2472
    %vm2528 = vcmp.eq.f32.partialorder %v2387, %v2473
    %vm2529 = vcmp.eq.f32.partialorder %v2387, %v2474
    %vm2530 = vcmp.eq.f32.partialorder %v2387, %v2475
    %vm2531 = vcmp.eq.f32.partialorder %v2387, %v2476
    %vm2532 = vcmp.eq.f32.partialorder %v2388, %v2472
    %vm2533 = vcmp.eq.f32.partialorder %v2388, %v2473
    %vm2534 = vcmp.eq.f32.partialorder %v2388, %v2474
    %vm2535 = vcmp.eq.f32.partialorder %v2388, %v2475
    %vm2536 = vcmp.eq.f32.partialorder %v2388, %v2476
    %vm2537 = vcmp.eq.f32.partialorder %v2389, %v2472
    %vm2538 = vcmp.eq.f32.partialorder %v2389, %v2473
    %vm2539 = vcmp.eq.f32.partialorder %v2389, %v2474
    %vm2540 = vcmp.eq.f32.partialorder %v2389, %v2475
    %vm2541 = vcmp.eq.f32.partialorder %v2389, %v2476
    %vm2542 = vcmp.eq.f32.partialorder %v2390, %v2472
    %vm2543 = vcmp.eq.f32.partialorder %v2390, %v2473
    %vm2544 = vcmp.eq.f32.partialorder %v2390, %v2474
    %vm2545 = vcmp.eq.f32.partialorder %v2390, %v2475
    %vm2546 = vcmp.eq.f32.partialorder %v2390, %v2476
    %vm2547 = vcmp.eq.f32.partialorder %v2391, %v2472
    %vm2548 = vcmp.eq.f32.partialorder %v2391, %v2473
    %vm2549 = vcmp.eq.f32.partialorder %v2391, %v2474
    %vm2550 = vcmp.eq.f32.partialorder %v2391, %v2475
    %vm2551 = vcmp.eq.f32.partialorder %v2391, %v2476
    %vm2552 = vcmp.eq.f32.partialorder %v2392, %v2472
    %vm2553 = vcmp.eq.f32.partialorder %v2392, %v2473
    %vm2554 = vcmp.eq.f32.partialorder %v2392, %v2474
    %vm2555 = vcmp.eq.f32.partialorder %v2392, %v2475
    %vm2556 = vcmp.eq.f32.partialorder %v2392, %v2476
    %vm2557 = vcmp.eq.f32.partialorder %v2393, %v2472
    %vm2558 = vcmp.eq.f32.partialorder %v2393, %v2473
    %vm2559 = vcmp.eq.f32.partialorder %v2393, %v2474
    %vm2560 = vcmp.eq.f32.partialorder %v2393, %v2475
    %vm2561 = vcmp.eq.f32.partialorder %v2393, %v2476
    %vm2562 = vcmp.eq.f32.partialorder %v2394, %v2472
    %vm2563 = vcmp.eq.f32.partialorder %v2394, %v2473
    %vm2564 = vcmp.eq.f32.partialorder %v2394, %v2474
    %vm2565 = vcmp.eq.f32.partialorder %v2394, %v2475
    %vm2566 = vcmp.eq.f32.partialorder %v2394, %v2476
    %vm2567 = vcmp.eq.f32.partialorder %v2395, %v2472
    %vm2568 = vcmp.eq.f32.partialorder %v2395, %v2473
    %vm2569 = vcmp.eq.f32.partialorder %v2395, %v2474
    %vm2570 = vcmp.eq.f32.partialorder %v2395, %v2475
    %vm2571 = vcmp.eq.f32.partialorder %v2395, %v2476
    %vm2572 = vcmp.eq.f32.partialorder %v2396, %v2472
    %vm2573 = vcmp.eq.f32.partialorder %v2396, %v2473
    %vm2574 = vcmp.eq.f32.partialorder %v2396, %v2474
    %vm2575 = vcmp.eq.f32.partialorder %v2396, %v2475
    %vm2576 = vcmp.eq.f32.partialorder %v2396, %v2476
    %vm2577 = vcmp.eq.f32.partialorder %v2397, %v2472
    %vm2578 = vcmp.eq.f32.partialorder %v2397, %v2473
    %vm2579 = vcmp.eq.f32.partialorder %v2397, %v2474
    %vm2580 = vcmp.eq.f32.partialorder %v2397, %v2475
    %vm2581 = vcmp.eq.f32.partialorder %v2397, %v2476
    %vm2582 = vcmp.eq.f32.partialorder %v2398, %v2472
    %vm2583 = vcmp.eq.f32.partialorder %v2398, %v2473
    %vm2584 = vcmp.eq.f32.partialorder %v2398, %v2474
    %vm2585 = vcmp.eq.f32.partialorder %v2398, %v2475
    %vm2586 = vcmp.eq.f32.partialorder %v2398, %v2476
    %vm2587 = vcmp.eq.f32.partialorder %v2399, %v2472
    %vm2588 = vcmp.eq.f32.partialorder %v2399, %v2473
    %vm2589 = vcmp.eq.f32.partialorder %v2399, %v2474
    %vm2590 = vcmp.eq.f32.partialorder %v2399, %v2475
    %vm2591 = vcmp.eq.f32.partialorder %v2399, %v2476
    %vm2592 = vcmp.eq.f32.partialorder %v2400, %v2472
    %vm2593 = vcmp.eq.f32.partialorder %v2400, %v2473
    %vm2594 = vcmp.eq.f32.partialorder %v2400, %v2474
    %vm2595 = vcmp.eq.f32.partialorder %v2400, %v2475
    %vm2596 = vcmp.eq.f32.partialorder %v2400, %v2476
    %vm2597 = vcmp.eq.f32.partialorder %v2401, %v2472
    %vm2598 = vcmp.eq.f32.partialorder %v2401, %v2473
    %vm2599 = vcmp.eq.f32.partialorder %v2401, %v2474
    %vm2600 = vcmp.eq.f32.partialorder %v2401, %v2475
    %vm2601 = vcmp.eq.f32.partialorder %v2401, %v2476
    %vm2602 = vcmp.eq.f32.partialorder %v2402, %v2472
    %vm2603 = vcmp.eq.f32.partialorder %v2402, %v2473
    %vm2604 = vcmp.eq.f32.partialorder %v2402, %v2474
    %vm2605 = vcmp.eq.f32.partialorder %v2402, %v2475
    %vm2606 = vcmp.eq.f32.partialorder %v2402, %v2476
    %vm2607 = vcmp.eq.f32.partialorder %v2403, %v2472
    %vm2608 = vcmp.eq.f32.partialorder %v2403, %v2473
    %vm2609 = vcmp.eq.f32.partialorder %v2403, %v2474
    %vm2610 = vcmp.eq.f32.partialorder %v2403, %v2475
    %vm2611 = vcmp.eq.f32.partialorder %v2403, %v2476
    %vm2612 = vcmp.eq.f32.partialorder %v2404, %v2472
    %vm2613 = vcmp.eq.f32.partialorder %v2404, %v2473
    %vm2614 = vcmp.eq.f32.partialorder %v2404, %v2474
    %vm2615 = vcmp.eq.f32.partialorder %v2404, %v2475
    %vm2616 = vcmp.eq.f32.partialorder %v2404, %v2476
    %vm2617 = vcmp.eq.f32.partialorder %v2405, %v2472
    %vm2618 = vcmp.eq.f32.partialorder %v2405, %v2473
    %vm2619 = vcmp.eq.f32.partialorder %v2405, %v2474
    %vm2620 = vcmp.eq.f32.partialorder %v2405, %v2475
    %vm2621 = vcmp.eq.f32.partialorder %v2405, %v2476
    %vm2622 = vcmp.eq.f32.partialorder %v2406, %v2472
    %vm2623 = vcmp.eq.f32.partialorder %v2406, %v2473
    %vm2624 = vcmp.eq.f32.partialorder %v2406, %v2474
    %vm2625 = vcmp.eq.f32.partialorder %v2406, %v2475
    %vm2626 = vcmp.eq.f32.partialorder %v2406, %v2476
    %vm2627 = vcmp.eq.f32.partialorder %v2407, %v2472
    %vm2628 = vcmp.eq.f32.partialorder %v2407, %v2473
    %vm2629 = vcmp.eq.f32.partialorder %v2407, %v2474
    %vm2630 = vcmp.eq.f32.partialorder %v2407, %v2475
    %vm2631 = vcmp.eq.f32.partialorder %v2407, %v2476
    %vm2632 = vcmp.eq.f32.partialorder %v2408, %v2472
    %vm2633 = vcmp.eq.f32.partialorder %v2408, %v2473
    %vm2634 = vcmp.eq.f32.partialorder %v2408, %v2474
    %vm2635 = vcmp.eq.f32.partialorder %v2408, %v2475
    %vm2636 = vcmp.eq.f32.partialorder %v2408, %v2476
    %vm2637 = vcmp.eq.f32.partialorder %v2409, %v2472
    %vm2638 = vcmp.eq.f32.partialorder %v2409, %v2473
    %vm2639 = vcmp.eq.f32.partialorder %v2409, %v2474
    %vm2640 = vcmp.eq.f32.partialorder %v2409, %v2475
    %vm2641 = vcmp.eq.f32.partialorder %v2409, %v2476
    %vm2642 = vcmp.eq.f32.partialorder %v2410, %v2472
    %vm2643 = vcmp.eq.f32.partialorder %v2410, %v2473
    %vm2644 = vcmp.eq.f32.partialorder %v2410, %v2474
    %vm2645 = vcmp.eq.f32.partialorder %v2410, %v2475
    %vm2646 = vcmp.eq.f32.partialorder %v2410, %v2476
    %vm2647 = vcmp.eq.f32.partialorder %v2411, %v2472
    %vm2648 = vcmp.eq.f32.partialorder %v2411, %v2473
    %vm2649 = vcmp.eq.f32.partialorder %v2411, %v2474
    %vm2650 = vcmp.eq.f32.partialorder %v2411, %v2475
    %vm2651 = vcmp.eq.f32.partialorder %v2411, %v2476
    %vm2652 = vcmp.eq.f32.partialorder %v2412, %v2472
    %vm2653 = vcmp.eq.f32.partialorder %v2412, %v2473
    %vm2654 = vcmp.eq.f32.partialorder %v2412, %v2474
    %vm2655 = vcmp.eq.f32.partialorder %v2412, %v2475
    %vm2656 = vcmp.eq.f32.partialorder %v2412, %v2476
    %vm2657 = vcmp.eq.f32.partialorder %v2413, %v2472
    %vm2658 = vcmp.eq.f32.partialorder %v2413, %v2473
    %vm2659 = vcmp.eq.f32.partialorder %v2413, %v2474
    %vm2660 = vcmp.eq.f32.partialorder %v2413, %v2475
    %vm2661 = vcmp.eq.f32.partialorder %v2413, %v2476
    %vm2662 = vcmp.eq.f32.partialorder %v2414, %v2472
    %vm2663 = vcmp.eq.f32.partialorder %v2414, %v2473
    %vm2664 = vcmp.eq.f32.partialorder %v2414, %v2474
    %vm2665 = vcmp.eq.f32.partialorder %v2414, %v2475
    %vm2666 = vcmp.eq.f32.partialorder %v2414, %v2476
    %vm2667 = vcmp.eq.f32.partialorder %v2415, %v2472
    %vm2668 = vcmp.eq.f32.partialorder %v2415, %v2473
    %vm2669 = vcmp.eq.f32.partialorder %v2415, %v2474
    %vm2670 = vcmp.eq.f32.partialorder %v2415, %v2475
    %vm2671 = vcmp.eq.f32.partialorder %v2415, %v2476
    %vm2672 = vcmp.eq.f32.partialorder %v2416, %v2472
    %vm2673 = vcmp.eq.f32.partialorder %v2416, %v2473
    %vm2674 = vcmp.eq.f32.partialorder %v2416, %v2474
    %vm2675 = vcmp.eq.f32.partialorder %v2416, %v2475
    %vm2676 = vcmp.eq.f32.partialorder %v2416, %v2476
    %vm2677 = vcmp.eq.f32.partialorder %v2417, %v2472
    %vm2678 = vcmp.eq.f32.partialorder %v2417, %v2473
    %vm2679 = vcmp.eq.f32.partialorder %v2417, %v2474
    %vm2680 = vcmp.eq.f32.partialorder %v2417, %v2475
    %vm2681 = vcmp.eq.f32.partialorder %v2417, %v2476
    %vm2682 = vcmp.eq.f32.partialorder %v2418, %v2472
    %vm2683 = vcmp.eq.f32.partialorder %v2418, %v2473
    %vm2684 = vcmp.eq.f32.partialorder %v2418, %v2474
    %vm2685 = vcmp.eq.f32.partialorder %v2418, %v2475
    %vm2686 = vcmp.eq.f32.partialorder %v2418, %v2476
    %vm2687 = vcmp.eq.f32.partialorder %v2419, %v2472
    %vm2688 = vcmp.eq.f32.partialorder %v2419, %v2473
    %vm2689 = vcmp.eq.f32.partialorder %v2419, %v2474
    %vm2690 = vcmp.eq.f32.partialorder %v2419, %v2475
    %vm2691 = vcmp.eq.f32.partialorder %v2419, %v2476
    %vm2692 = vcmp.eq.f32.partialorder %v2420, %v2472
    %vm2693 = vcmp.eq.f32.partialorder %v2420, %v2473
    %vm2694 = vcmp.eq.f32.partialorder %v2420, %v2474
    %vm2695 = vcmp.eq.f32.partialorder %v2420, %v2475
    %vm2696 = vcmp.eq.f32.partialorder %v2420, %v2476
    %vm2697 = vcmp.eq.f32.partialorder %v2421, %v2472
    %vm2698 = vcmp.eq.f32.partialorder %v2421, %v2473
    %vm2699 = vcmp.eq.f32.partialorder %v2421, %v2474
    %vm2700 = vcmp.eq.f32.partialorder %v2421, %v2475
    %vm2701 = vcmp.eq.f32.partialorder %v2421, %v2476
    %vm2702 = vcmp.eq.f32.partialorder %v2422, %v2472
    %vm2703 = vcmp.eq.f32.partialorder %v2422, %v2473
    %vm2704 = vcmp.eq.f32.partialorder %v2422, %v2474
    %vm2705 = vcmp.eq.f32.partialorder %v2422, %v2475
    %vm2706 = vcmp.eq.f32.partialorder %v2422, %v2476
    %vm2707 = vcmp.eq.f32.partialorder %v2423, %v2472
    %vm2708 = vcmp.eq.f32.partialorder %v2423, %v2473
    %vm2709 = vcmp.eq.f32.partialorder %v2423, %v2474
    %vm2710 = vcmp.eq.f32.partialorder %v2423, %v2475
    %vm2711 = vcmp.eq.f32.partialorder %v2423, %v2476
    %vm2712 = vcmp.eq.f32.partialorder %v2424, %v2472
    %vm2713 = vcmp.eq.f32.partialorder %v2424, %v2473
    %vm2714 = vcmp.eq.f32.partialorder %v2424, %v2474
    %vm2715 = vcmp.eq.f32.partialorder %v2424, %v2475
    %vm2716 = vcmp.eq.f32.partialorder %v2424, %v2476
    %vm2717 = vcmp.eq.f32.partialorder %v2425, %v2472
    %vm2718 = vcmp.eq.f32.partialorder %v2425, %v2473
    %vm2719 = vcmp.eq.f32.partialorder %v2425, %v2474
    %vm2720 = vcmp.eq.f32.partialorder %v2425, %v2475
    %vm2721 = vcmp.eq.f32.partialorder %v2425, %v2476
    %vm2722 = vcmp.eq.f32.partialorder %v2426, %v2472
    %vm2723 = vcmp.eq.f32.partialorder %v2426, %v2473
    %vm2724 = vcmp.eq.f32.partialorder %v2426, %v2474
    %vm2725 = vcmp.eq.f32.partialorder %v2426, %v2475
    %vm2726 = vcmp.eq.f32.partialorder %v2426, %v2476
    %vm2727 = vcmp.eq.f32.partialorder %v2427, %v2472
    %vm2728 = vcmp.eq.f32.partialorder %v2427, %v2473
    %vm2729 = vcmp.eq.f32.partialorder %v2427, %v2474
    %vm2730 = vcmp.eq.f32.partialorder %v2427, %v2475
    %vm2731 = vcmp.eq.f32.partialorder %v2427, %v2476
    %vm2732 = vcmp.eq.f32.partialorder %v2428, %v2472
    %vm2733 = vcmp.eq.f32.partialorder %v2428, %v2473
    %vm2734 = vcmp.eq.f32.partialorder %v2428, %v2474
    %vm2735 = vcmp.eq.f32.partialorder %v2428, %v2475
    %vm2736 = vcmp.eq.f32.partialorder %v2428, %v2476
    %vm2737 = vcmp.eq.f32.partialorder %v2429, %v2472
    %vm2738 = vcmp.eq.f32.partialorder %v2429, %v2473
    %vm2739 = vcmp.eq.f32.partialorder %v2429, %v2474
    %vm2740 = vcmp.eq.f32.partialorder %v2429, %v2475
    %vm2741 = vcmp.eq.f32.partialorder %v2429, %v2476
    %vm2742 = vcmp.eq.f32.partialorder %v2430, %v2472
    %vm2743 = vcmp.eq.f32.partialorder %v2430, %v2473
    %vm2744 = vcmp.eq.f32.partialorder %v2430, %v2474
    %vm2745 = vcmp.eq.f32.partialorder %v2430, %v2475
    %vm2746 = vcmp.eq.f32.partialorder %v2430, %v2476
    %vm2747 = vcmp.eq.f32.partialorder %v2431, %v2472
    %vm2748 = vcmp.eq.f32.partialorder %v2431, %v2473
    %vm2749 = vcmp.eq.f32.partialorder %v2431, %v2474
    %vm2750 = vcmp.eq.f32.partialorder %v2431, %v2475
    %vm2751 = vcmp.eq.f32.partialorder %v2431, %v2476
    %vm2752 = vcmp.eq.f32.partialorder %v2432, %v2472
    %vm2753 = vcmp.eq.f32.partialorder %v2432, %v2473
    %vm2754 = vcmp.eq.f32.partialorder %v2432, %v2474
    %vm2755 = vcmp.eq.f32.partialorder %v2432, %v2475
    %vm2756 = vcmp.eq.f32.partialorder %v2432, %v2476
    %vm2757 = vcmp.eq.f32.partialorder %v2433, %v2472
    %vm2758 = vcmp.eq.f32.partialorder %v2433, %v2473
    %vm2759 = vcmp.eq.f32.partialorder %v2433, %v2474
    %vm2760 = vcmp.eq.f32.partialorder %v2433, %v2475
    %vm2761 = vcmp.eq.f32.partialorder %v2433, %v2476
    %vm2762 = vcmp.eq.f32.partialorder %v2434, %v2472
    %vm2763 = vcmp.eq.f32.partialorder %v2434, %v2473
    %vm2764 = vcmp.eq.f32.partialorder %v2434, %v2474
    %vm2765 = vcmp.eq.f32.partialorder %v2434, %v2475
    %vm2766 = vcmp.eq.f32.partialorder %v2434, %v2476
    %vm2767 = vcmp.eq.f32.partialorder %v2435, %v2472
    %vm2768 = vcmp.eq.f32.partialorder %v2435, %v2473
    %vm2769 = vcmp.eq.f32.partialorder %v2435, %v2474
    %vm2770 = vcmp.eq.f32.partialorder %v2435, %v2475
    %vm2771 = vcmp.eq.f32.partialorder %v2435, %v2476
    %vm2772 = vcmp.eq.f32.partialorder %v2436, %v2472
    %vm2773 = vcmp.eq.f32.partialorder %v2436, %v2473
    %vm2774 = vcmp.eq.f32.partialorder %v2436, %v2474
    %vm2775 = vcmp.eq.f32.partialorder %v2436, %v2475
    %vm2776 = vcmp.eq.f32.partialorder %v2436, %v2476
    %vm2777 = vcmp.eq.f32.partialorder %v2437, %v2472
    %vm2778 = vcmp.eq.f32.partialorder %v2437, %v2473
    %vm2779 = vcmp.eq.f32.partialorder %v2437, %v2474
    %vm2780 = vcmp.eq.f32.partialorder %v2437, %v2475
    %vm2781 = vcmp.eq.f32.partialorder %v2437, %v2476
    %vm2782 = vcmp.eq.f32.partialorder %v2438, %v2472
    %vm2783 = vcmp.eq.f32.partialorder %v2438, %v2473
    %vm2784 = vcmp.eq.f32.partialorder %v2438, %v2474
    %vm2785 = vcmp.eq.f32.partialorder %v2438, %v2475
    %vm2786 = vcmp.eq.f32.partialorder %v2438, %v2476
    %vm2787 = vcmp.eq.f32.partialorder %v2439, %v2472
    %vm2788 = vcmp.eq.f32.partialorder %v2439, %v2473
    %vm2789 = vcmp.eq.f32.partialorder %v2439, %v2474
    %vm2790 = vcmp.eq.f32.partialorder %v2439, %v2475
    %vm2791 = vcmp.eq.f32.partialorder %v2439, %v2476
    %vm2792 = vcmp.eq.f32.partialorder %v2440, %v2472
    %vm2793 = vcmp.eq.f32.partialorder %v2440, %v2473
    %vm2794 = vcmp.eq.f32.partialorder %v2440, %v2474
    %vm2795 = vcmp.eq.f32.partialorder %v2440, %v2475
    %vm2796 = vcmp.eq.f32.partialorder %v2440, %v2476
    %vm2797 = vcmp.eq.f32.partialorder %v2441, %v2472
    %vm2798 = vcmp.eq.f32.partialorder %v2441, %v2473
    %vm2799 = vcmp.eq.f32.partialorder %v2441, %v2474
    %vm2800 = vcmp.eq.f32.partialorder %v2441, %v2475
    %vm2801 = vcmp.eq.f32.partialorder %v2441, %v2476
    %vm2802 = vcmp.eq.f32.partialorder %v2442, %v2472
    %vm2803 = vcmp.eq.f32.partialorder %v2442, %v2473
    %vm2804 = vcmp.eq.f32.partialorder %v2442, %v2474
    %vm2805 = vcmp.eq.f32.partialorder %v2442, %v2475
    %vm2806 = vcmp.eq.f32.partialorder %v2442, %v2476
    %vm2807 = vcmp.eq.f32.partialorder %v2443, %v2472
    %vm2808 = vcmp.eq.f32.partialorder %v2443, %v2473
    %vm2809 = vcmp.eq.f32.partialorder %v2443, %v2474
    %vm2810 = vcmp.eq.f32.partialorder %v2443, %v2475
    %vm2811 = vcmp.eq.f32.partialorder %v2443, %v2476
    %vm2812 = vcmp.eq.f32.partialorder %v2444, %v2472
    %vm2813 = vcmp.eq.f32.partialorder %v2444, %v2473
    %vm2814 = vcmp.eq.f32.partialorder %v2444, %v2474
    %vm2815 = vcmp.eq.f32.partialorder %v2444, %v2475
    %vm2816 = vcmp.eq.f32.partialorder %v2444, %v2476
    %vm2817 = vcmp.eq.f32.partialorder %v2445, %v2472
    %vm2818 = vcmp.eq.f32.partialorder %v2445, %v2473
    %vm2819 = vcmp.eq.f32.partialorder %v2445, %v2474
    %vm2820 = vcmp.eq.f32.partialorder %v2445, %v2475
    %vm2821 = vcmp.eq.f32.partialorder %v2445, %v2476
    %vm2822 = vcmp.eq.f32.partialorder %v2446, %v2472
    %vm2823 = vcmp.eq.f32.partialorder %v2446, %v2473
    %vm2824 = vcmp.eq.f32.partialorder %v2446, %v2474
    %vm2825 = vcmp.eq.f32.partialorder %v2446, %v2475
    %vm2826 = vcmp.eq.f32.partialorder %v2446, %v2476
    %vm2827 = vcmp.eq.f32.partialorder %v2447, %v2472
    %vm2828 = vcmp.eq.f32.partialorder %v2447, %v2473
    %vm2829 = vcmp.eq.f32.partialorder %v2447, %v2474
    %vm2830 = vcmp.eq.f32.partialorder %v2447, %v2475
    %vm2831 = vcmp.eq.f32.partialorder %v2447, %v2476
    %vm2832 = vcmp.eq.f32.partialorder %v2448, %v2472
    %vm2833 = vcmp.eq.f32.partialorder %v2448, %v2473
    %vm2834 = vcmp.eq.f32.partialorder %v2448, %v2474
    %vm2835 = vcmp.eq.f32.partialorder %v2448, %v2475
    %vm2836 = vcmp.eq.f32.partialorder %v2448, %v2476
    %vm2837 = vcmp.eq.f32.partialorder %v2449, %v2472
    %vm2838 = vcmp.eq.f32.partialorder %v2449, %v2473
    %vm2839 = vcmp.eq.f32.partialorder %v2449, %v2474
    %vm2840 = vcmp.eq.f32.partialorder %v2449, %v2475
    %vm2841 = vcmp.eq.f32.partialorder %v2449, %v2476
    %vm2842 = vcmp.eq.f32.partialorder %v2450, %v2472
    %vm2843 = vcmp.eq.f32.partialorder %v2450, %v2473
    %vm2844 = vcmp.eq.f32.partialorder %v2450, %v2474
    %vm2845 = vcmp.eq.f32.partialorder %v2450, %v2475
    %vm2846 = vcmp.eq.f32.partialorder %v2450, %v2476
    %vm2847 = vcmp.eq.f32.partialorder %v2451, %v2472
    %vm2848 = vcmp.eq.f32.partialorder %v2451, %v2473
    %vm2849 = vcmp.eq.f32.partialorder %v2451, %v2474
    %vm2850 = vcmp.eq.f32.partialorder %v2451, %v2475
    %vm2851 = vcmp.eq.f32.partialorder %v2451, %v2476
    %vm2852 = vcmp.eq.f32.partialorder %v2452, %v2472
    %vm2853 = vcmp.eq.f32.partialorder %v2452, %v2473
    %vm2854 = vcmp.eq.f32.partialorder %v2452, %v2474
    %vm2855 = vcmp.eq.f32.partialorder %v2452, %v2475
    %vm2856 = vcmp.eq.f32.partialorder %v2452, %v2476
    %vm2857 = vcmp.eq.f32.partialorder %v2453, %v2472
    %vm2858 = vcmp.eq.f32.partialorder %v2453, %v2473
    %vm2859 = vcmp.eq.f32.partialorder %v2453, %v2474
    %vm2860 = vcmp.eq.f32.partialorder %v2453, %v2475
    %vm2861 = vcmp.eq.f32.partialorder %v2453, %v2476
    %vm2862 = vcmp.eq.f32.partialorder %v2454, %v2472
    %vm2863 = vcmp.eq.f32.partialorder %v2454, %v2473
    %vm2864 = vcmp.eq.f32.partialorder %v2454, %v2474
    %vm2865 = vcmp.eq.f32.partialorder %v2454, %v2475
    %vm2866 = vcmp.eq.f32.partialorder %v2454, %v2476
    %vm2867 = vcmp.eq.f32.partialorder %v2455, %v2472
    %vm2868 = vcmp.eq.f32.partialorder %v2455, %v2473
    %vm2869 = vcmp.eq.f32.partialorder %v2455, %v2474
    %vm2870 = vcmp.eq.f32.partialorder %v2455, %v2475
    %vm2871 = vcmp.eq.f32.partialorder %v2455, %v2476
    %vm2872 = vcmp.eq.f32.partialorder %v2456, %v2472
    %vm2873 = vcmp.eq.f32.partialorder %v2456, %v2473
    %vm2874 = vcmp.eq.f32.partialorder %v2456, %v2474
    %vm2875 = vcmp.eq.f32.partialorder %v2456, %v2475
    %vm2876 = vcmp.eq.f32.partialorder %v2456, %v2476
    %vm2877 = vmand %vm1737, %vm2477
    %vm2878 = vmand %vm1738, %vm2478
    %vm2879 = vmand %vm1739, %vm2479
    %vm2880 = vmand %vm1740, %vm2480
    %vm2881 = vmand %vm1741, %vm2481
    %vm2882 = vmand %vm1742, %vm2482
    %vm2883 = vmand %vm1743, %vm2483
    %vm2884 = vmand %vm1744, %vm2484
    %vm2885 = vmand %vm1745, %vm2485
    %vm2886 = vmand %vm1746, %vm2486
    %vm2887 = vmand %vm1747, %vm2487
    %vm2888 = vmand %vm1748, %vm2488
    %vm2889 = vmand %vm1749, %vm2489
    %vm2890 = vmand %vm1750, %vm2490
    %vm2891 = vmand %vm1751, %vm2491
    %vm2892 = vmand %vm1752, %vm2492
    %vm2893 = vmand %vm1753, %vm2493
    %vm2894 = vmand %vm1754, %vm2494
    %vm2895 = vmand %vm1755, %vm2495
    %vm2896 = vmand %vm1756, %vm2496
    %vm2897 = vmand %vm1757, %vm2497
    %vm2898 = vmand %vm1758, %vm2498
    %vm2899 = vmand %vm1759, %vm2499
    %vm2900 = vmand %vm1760, %vm2500
    %vm2901 = vmand %vm1761, %vm2501
    %vm2902 = vmand %vm1762, %vm2502
    %vm2903 = vmand %vm1763, %vm2503
    %vm2904 = vmand %vm1764, %vm2504
    %vm2905 = vmand %vm1765, %vm2505
    %vm2906 = vmand %vm1766, %vm2506
    %vm2907 = vmand %vm1767, %vm2507
    %vm2908 = vmand %vm1768, %vm2508
    %vm2909 = vmand %vm1769, %vm2509
    %vm2910 = vmand %vm1770, %vm2510
    %vm2911 = vmand %vm1771, %vm2511
    %vm2912 = vmand %vm1772, %vm2512
    %vm2913 = vmand %vm1773, %vm2513
    %vm2914 = vmand %vm1774, %vm2514
    %vm2915 = vmand %vm1775, %vm2515
    %vm2916 = vmand %vm1776, %vm2516
    %vm2917 = vmand %vm1777, %vm2517
    %vm2918 = vmand %vm1778, %vm2518
    %vm2919 = vmand %vm1779, %vm2519
    %vm2920 = vmand %vm1780, %vm2520
    %vm2921 = vmand %vm1781, %vm2521
    %vm2922 = vmand %vm1782, %vm2522
    %vm2923 = vmand %vm1783, %vm2523
    %vm2924 = vmand %vm1784, %vm2524
    %vm2925 = vmand %vm1785, %vm2525
    %vm2926 = vmand %vm1786, %vm2526
    %vm2927 = vmand %vm1787, %vm2527
    %vm2928 = vmand %vm1788, %vm2528
    %vm2929 = vmand %vm1789, %vm2529
    %vm2930 = vmand %vm1790, %vm2530
    %vm2931 = vmand %vm1791, %vm2531
    %vm2932 = vmand %vm1792, %vm2532
    %vm2933 = vmand %vm1793, %vm2533
    %vm2934 = vmand %vm1794, %vm2534
    %vm2935 = vmand %vm1795, %vm2535
    %vm2936 = vmand %vm1796, %vm2536
    %vm2937 = vmand %vm1797, %vm2537
    %vm2938 = vmand %vm1798, %vm2538
    %vm2939 = vmand %vm1799, %vm2539
    %vm2940 = vmand %vm1800, %vm2540
    %vm2941 = vmand %vm1801, %vm2541
    %vm2942 = vmand %vm1802, %vm2542
    %vm2943 = vmand %vm1803, %vm2543
    %vm2944 = vmand %vm1804, %vm2544
    %vm2945 = vmand %vm1805, %vm2545
    %vm2946 = vmand %vm1806, %vm2546
    %vm2947 = vmand %vm1807, %vm2547
    %vm2948 = vmand %vm1808, %vm2548
    %vm2949 = vmand %vm1809, %vm2549
    %vm2950 = vmand %vm1810, %vm2550
    %vm2951 = vmand %vm1811, %vm2551
    %vm2952 = vmand %vm1812, %vm2552
    %vm2953 = vmand %vm1813, %vm2553
    %vm2954 = vmand %vm1814, %vm2554
    %vm2955 = vmand %vm1815, %vm2555
    %vm2956 = vmand %vm1816, %vm2556
    %vm2957 = vmand %vm1817, %vm2557
    %vm2958 = vmand %vm1818, %vm2558
    %vm2959 = vmand %vm1819, %vm2559
    %vm2960 = vmand %vm1820, %vm2560
    %vm2961 = vmand %vm1821, %vm2561
    %vm2962 = vmand %vm1822, %vm2562
    %vm2963 = vmand %vm1823, %vm2563
    %vm2964 = vmand %vm1824, %vm2564
    %vm2965 = vmand %vm1825, %vm2565
    %vm2966 = vmand %vm1826, %vm2566
    %vm2967 = vmand %vm1827, %vm2567
    %vm2968 = vmand %vm1828, %vm2568
    %vm2969 = vmand %vm1829, %vm2569
    %vm2970 = vmand %vm1830, %vm2570
    %vm2971 = vmand %vm1831, %vm2571
    %vm2972 = vmand %vm1832, %vm2572
    %vm2973 = vmand %vm1833, %vm2573
    %vm2974 = vmand %vm1834, %vm2574
    %vm2975 = vmand %vm1835, %vm2575
    %vm2976 = vmand %vm1836, %vm2576
    %vm2977 = vmand %vm1837, %vm2577
    %vm2978 = vmand %vm1838, %vm2578
    %vm2979 = vmand %vm1839, %vm2579
    %vm2980 = vmand %vm1840, %vm2580
    %vm2981 = vmand %vm1841, %vm2581
    %vm2982 = vmand %vm1842, %vm2582
    %vm2983 = vmand %vm1843, %vm2583
    %vm2984 = vmand %vm1844, %vm2584
    %vm2985 = vmand %vm1845, %vm2585
    %vm2986 = vmand %vm1846, %vm2586
    %vm2987 = vmand %vm1847, %vm2587
    %vm2988 = vmand %vm1848, %vm2588
    %vm2989 = vmand %vm1849, %vm2589
    %vm2990 = vmand %vm1850, %vm2590
    %vm2991 = vmand %vm1851, %vm2591
    %vm2992 = vmand %vm1852, %vm2592
    %vm2993 = vmand %vm1853, %vm2593
    %vm2994 = vmand %vm1854, %vm2594
    %vm2995 = vmand %vm1855, %vm2595
    %vm2996 = vmand %vm1856, %vm2596
    %vm2997 = vmand %vm1857, %vm2597
    %vm2998 = vmand %vm1858, %vm2598
    %vm2999 = vmand %vm1859, %vm2599
    %vm3000 = vmand %vm1860, %vm2600
    %vm3001 = vmand %vm1861, %vm2601
    %vm3002 = vmand %vm1862, %vm2602
    %vm3003 = vmand %vm1863, %vm2603
    %vm3004 = vmand %vm1864, %vm2604
    %vm3005 = vmand %vm1865, %vm2605
    %vm3006 = vmand %vm1866, %vm2606
    %vm3007 = vmand %vm1867, %vm2607
    %vm3008 = vmand %vm1868, %vm2608
    %vm3009 = vmand %vm1869, %vm2609
    %vm3010 = vmand %vm1870, %vm2610
    %vm3011 = vmand %vm1871, %vm2611
    %vm3012 = vmand %vm1872, %vm2612
    %vm3013 = vmand %vm1873, %vm2613
    %vm3014 = vmand %vm1874, %vm2614
    %vm3015 = vmand %vm1875, %vm2615
    %vm3016 = vmand %vm1876, %vm2616
    %vm3017 = vmand %vm1877, %vm2617
    %vm3018 = vmand %vm1878, %vm2618
    %vm3019 = vmand %vm1879, %vm2619
    %vm3020 = vmand %vm1880, %vm2620
    %vm3021 = vmand %vm1881, %vm2621
    %vm3022 = vmand %vm1882, %vm2622
    %vm3023 = vmand %vm1883, %vm2623
    %vm3024 = vmand %vm1884, %vm2624
    %vm3025 = vmand %vm1885, %vm2625
    %vm3026 = vmand %vm1886, %vm2626
    %vm3027 = vmand %vm1887, %vm2627
    %vm3028 = vmand %vm1888, %vm2628
    %vm3029 = vmand %vm1889, %vm2629
    %vm3030 = vmand %vm1890, %vm2630
    %vm3031 = vmand %vm1891, %vm2631
    %vm3032 = vmand %vm1892, %vm2632
    %vm3033 = vmand %vm1893, %vm2633
    %vm3034 = vmand %vm1894, %vm2634
    %vm3035 = vmand %vm1895, %vm2635
    %vm3036 = vmand %vm1896, %vm2636
    %vm3037 = vmand %vm1897, %vm2637
    %vm3038 = vmand %vm1898, %vm2638
    %vm3039 = vmand %vm1899, %vm2639
    %vm3040 = vmand %vm1900, %vm2640
    %vm3041 = vmand %vm1901, %vm2641
    %vm3042 = vmand %vm1902, %vm2642
    %vm3043 = vmand %vm1903, %vm2643
    %vm3044 = vmand %vm1904, %vm2644
    %vm3045 = vmand %vm1905, %vm2645
    %vm3046 = vmand %vm1906, %vm2646
    %vm3047 = vmand %vm1907, %vm2647
    %vm3048 = vmand %vm1908, %vm2648
    %vm3049 = vmand %vm1909, %vm2649
    %vm3050 = vmand %vm1910, %vm2650
    %vm3051 = vmand %vm1911, %vm2651
    %vm3052 = vmand %vm1912, %vm2652
    %vm3053 = vmand %vm1913, %vm2653
    %vm3054 = vmand %vm1914, %vm2654
    %vm3055 = vmand %vm1915, %vm2655
    %vm3056 = vmand %vm1916, %vm2656
    %vm3057 = vmand %vm1917, %vm2657
    %vm3058 = vmand %vm1918, %vm2658
    %vm3059 = vmand %vm1919, %vm2659
    %vm3060 = vmand %vm1920, %vm2660
    %vm3061 = vmand %vm1921, %vm2661
    %vm3062 = vmand %vm1922, %vm2662
    %vm3063 = vmand %vm1923, %vm2663
    %vm3064 = vmand %vm1924, %vm2664
    %vm3065 = vmand %vm1925, %vm2665
    %vm3066 = vmand %vm1926, %vm2666
    %vm3067 = vmand %vm1927, %vm2667
    %vm3068 = vmand %vm1928, %vm2668
    %vm3069 = vmand %vm1929, %vm2669
    %vm3070 = vmand %vm1930, %vm2670
    %vm3071 = vmand %vm1931, %vm2671
    %vm3072 = vmand %vm1932, %vm2672
    %vm3073 = vmand %vm1933, %vm2673
    %vm3074 = vmand %vm1934, %vm2674
    %vm3075 = vmand %vm1935, %vm2675
    %vm3076 = vmand %vm1936, %vm2676
    %vm3077 = vmand %vm1937, %vm2677
    %vm3078 = vmand %vm1938, %vm2678
    %vm3079 = vmand %vm1939, %vm2679
    %vm3080 = vmand %vm1940, %vm2680
    %vm3081 = vmand %vm1941, %vm2681
    %vm3082 = vmand %vm1942, %vm2682
    %vm3083 = vmand %vm1943, %vm2683
    %vm3084 = vmand %vm1944, %vm2684
    %vm3085 = vmand %vm1945, %vm2685
    %vm3086 = vmand %vm1946, %vm2686
    %vm3087 = vmand %vm1947, %vm2687
    %vm3088 = vmand %vm1948, %vm2688
    %vm3089 = vmand %vm1949, %vm2689
    %vm3090 = vmand %vm1950, %vm2690
    %vm3091 = vmand %vm1951, %vm2691
    %vm3092 = vmand %vm1952, %vm2692
    %vm3093 = vmand %vm1953, %vm2693
    %vm3094 = vmand %vm1954, %vm2694
    %vm3095 = vmand %vm1955, %vm2695
    %vm3096 = vmand %vm1956, %vm2696
    %vm3097 = vmand %vm1957, %vm2697
    %vm3098 = vmand %vm1958, %vm2698
    %vm3099 = vmand %vm1959, %vm2699
    %vm3100 = vmand %vm1960, %vm2700
    %vm3101 = vmand %vm1961, %vm2701
    %vm3102 = vmand %vm1962, %vm2702
    %vm3103 = vmand %vm1963, %vm2703
    %vm3104 = vmand %vm1964, %vm2704
    %vm3105 = vmand %vm1965, %vm2705
    %vm3106 = vmand %vm1966, %vm2706
    %vm3107 = vmand %vm1967, %vm2707
    %vm3108 = vmand %vm1968, %vm2708
    %vm3109 = vmand %vm1969, %vm2709
    %vm3110 = vmand %vm1970, %vm2710
    %vm3111 = vmand %vm1971, %vm2711
    %vm3112 = vmand %vm1972, %vm2712
    %vm3113 = vmand %vm1973, %vm2713
    %vm3114 = vmand %vm1974, %vm2714
    %vm3115 = vmand %vm1975, %vm2715
    %vm3116 = vmand %vm1976, %vm2716
    %vm3117 = vmand %vm1977, %vm2717
    %vm3118 = vmand %vm1978, %vm2718
    %vm3119 = vmand %vm1979, %vm2719
    %vm3120 = vmand %vm1980, %vm2720
    %vm3121 = vmand %vm1981, %vm2721
    %vm3122 = vmand %vm1982, %vm2722
    %vm3123 = vmand %vm1983, %vm2723
    %vm3124 = vmand %vm1984, %vm2724
    %vm3125 = vmand %vm1985, %vm2725
    %vm3126 = vmand %vm1986, %vm2726
    %vm3127 = vmand %vm1987, %vm2727
    %vm3128 = vmand %vm1988, %vm2728
    %vm3129 = vmand %vm1989, %vm2729
    %vm3130 = vmand %vm1990, %vm2730
    %vm3131 = vmand %vm1991, %vm2731
    %vm3132 = vmand %vm1992, %vm2732
    %vm3133 = vmand %vm1993, %vm2733
    %vm3134 = vmand %vm1994, %vm2734
    %vm3135 = vmand %vm1995, %vm2735
    %vm3136 = vmand %vm1996, %vm2736
    %vm3137 = vmand %vm1997, %vm2737
    %vm3138 = vmand %vm1998, %vm2738
    %vm3139 = vmand %vm1999, %vm2739
    %vm3140 = vmand %vm2000, %vm2740
    %vm3141 = vmand %vm2001, %vm2741
    %vm3142 = vmand %vm2002, %vm2742
    %vm3143 = vmand %vm2003, %vm2743
    %vm3144 = vmand %vm2004, %vm2744
    %vm3145 = vmand %vm2005, %vm2745
    %vm3146 = vmand %vm2006, %vm2746
    %vm3147 = vmand %vm2007, %vm2747
    %vm3148 = vmand %vm2008, %vm2748
    %vm3149 = vmand %vm2009, %vm2749
    %vm3150 = vmand %vm2010, %vm2750
    %vm3151 = vmand %vm2011, %vm2751
    %vm3152 = vmand %vm2012, %vm2752
    %vm3153 = vmand %vm2013, %vm2753
    %vm3154 = vmand %vm2014, %vm2754
    %vm3155 = vmand %vm2015, %vm2755
    %vm3156 = vmand %vm2016, %vm2756
    %vm3157 = vmand %vm2017, %vm2757
    %vm3158 = vmand %vm2018, %vm2758
    %vm3159 = vmand %vm2019, %vm2759
    %vm3160 = vmand %vm2020, %vm2760
    %vm3161 = vmand %vm2021, %vm2761
    %vm3162 = vmand %vm2022, %vm2762
    %vm3163 = vmand %vm2023, %vm2763
    %vm3164 = vmand %vm2024, %vm2764
    %vm3165 = vmand %vm2025, %vm2765
    %vm3166 = vmand %vm2026, %vm2766
    %vm3167 = vmand %vm2027, %vm2767
    %vm3168 = vmand %vm2028, %vm2768
    %vm3169 = vmand %vm2029, %vm2769
    %vm3170 = vmand %vm2030, %vm2770
    %vm3171 = vmand %vm2031, %vm2771
    %vm3172 = vmand %vm2032, %vm2772
    %vm3173 = vmand %vm2033, %vm2773
    %vm3174 = vmand %vm2034, %vm2774
    %vm3175 = vmand %vm2035, %vm2775
    %vm3176 = vmand %vm2036, %vm2776
    %vm3177 = vmand %vm2037, %vm2777
    %vm3178 = vmand %vm2038, %vm2778
    %vm3179 = vmand %vm2039, %vm2779
    %vm3180 = vmand %vm2040, %vm2780
    %vm3181 = vmand %vm2041, %vm2781
    %vm3182 = vmand %vm2042, %vm2782
    %vm3183 = vmand %vm2043, %vm2783
    %vm3184 = vmand %vm2044, %vm2784
    %vm3185 = vmand %vm2045, %vm2785
    %vm3186 = vmand %vm2046, %vm2786
    %vm3187 = vmand %vm2047, %vm2787
    %vm3188 = vmand %vm2048, %vm2788
    %vm3189 = vmand %vm2049, %vm2789
    %vm3190 = vmand %vm2050, %vm2790
    %vm3191 = vmand %vm2051, %vm2791
    %vm3192 = vmand %vm2052, %vm2792
    %vm3193 = vmand %vm2053, %vm2793
    %vm3194 = vmand %vm2054, %vm2794
    %vm3195 = vmand %vm2055, %vm2795
    %vm3196 = vmand %vm2056, %vm2796
    %vm3197 = vmand %vm2057, %vm2797
    %vm3198 = vmand %vm2058, %vm2798
    %vm3199 = vmand %vm2059, %vm2799
    %vm3200 = vmand %vm2060, %vm2800
    %vm3201 = vmand %vm2061, %vm2801
    %vm3202 = vmand %vm2062, %vm2802
    %vm3203 = vmand %vm2063, %vm2803
    %vm3204 = vmand %vm2064, %vm2804
    %vm3205 = vmand %vm2065, %vm2805
    %vm3206 = vmand %vm2066, %vm2806
    %vm3207 = vmand %vm2067, %vm2807
    %vm3208 = vmand %vm2068, %vm2808
    %vm3209 = vmand %vm2069, %vm2809
    %vm3210 = vmand %vm2070, %vm2810
    %vm3211 = vmand %vm2071, %vm2811
    %vm3212 = vmand %vm2072, %vm2812
    %vm3213 = vmand %vm2073, %vm2813
    %vm3214 = vmand %vm2074, %vm2814
    %vm3215 = vmand %vm2075, %vm2815
    %vm3216 = vmand %vm2076, %vm2816
    %vm3217 = vmand %vm2077, %vm2817
    %vm3218 = vmand %vm2078, %vm2818
    %vm3219 = vmand %vm2079, %vm2819
    %vm3220 = vmand %vm2080, %vm2820
    %vm3221 = vmand %vm2081, %vm2821
    %vm3222 = vmand %vm2082, %vm2822
    %vm3223 = vmand %vm2083, %vm2823
    %vm3224 = vmand %vm2084, %vm2824
    %vm3225 = vmand %vm2085, %vm2825
    %vm3226 = vmand %vm2086, %vm2826
    %vm3227 = vmand %vm2087, %vm2827
    %vm3228 = vmand %vm2088, %vm2828
    %vm3229 = vmand %vm2089, %vm2829
    %vm3230 = vmand %vm2090, %vm2830
    %vm3231 = vmand %vm2091, %vm2831
    %vm3232 = vmand %vm2092, %vm2832
    %vm3233 = vmand %vm2093, %vm2833
    %vm3234 = vmand %vm2094, %vm2834
    %vm3235 = vmand %vm2095, %vm2835
    %vm3236 = vmand %vm2096, %vm2836
    %vm3237 = vmand %vm2097, %vm2837
    %vm3238 = vmand %vm2098, %vm2838
    %vm3239 = vmand %vm2099, %vm2839
    %vm3240 = vmand %vm2100, %vm2840
    %vm3241 = vmand %vm2101, %vm2841
    %vm3242 = vmand %vm2102, %vm2842
    %vm3243 = vmand %vm2103, %vm2843
    %vm3244 = vmand %vm2104, %vm2844
    %vm3245 = vmand %vm2105, %vm2845
    %vm3246 = vmand %vm2106, %vm2846
    %vm3247 = vmand %vm2107, %vm2847
    %vm3248 = vmand %vm2108, %vm2848
    %vm3249 = vmand %vm2109, %vm2849
    %vm3250 = vmand %vm2110, %vm2850
    %vm3251 = vmand %vm2111, %vm2851
    %vm3252 = vmand %vm2112, %vm2852
    %vm3253 = vmand %vm2113, %vm2853
    %vm3254 = vmand %vm2114, %vm2854
    %vm3255 = vmand %vm2115, %vm2855
    %vm3256 = vmand %vm2116, %vm2856
    %vm3257 = vmand %vm2117, %vm2857
    %vm3258 = vmand %vm2118, %vm2858
    %vm3259 = vmand %vm2119, %vm2859
    %vm3260 = vmand %vm2120, %vm2860
    %vm3261 = vmand %vm2121, %vm2861
    %vm3262 = vmand %vm2122, %vm2862
    %vm3263 = vmand %vm2123, %vm2863
    %vm3264 = vmand %vm2124, %vm2864
    %vm3265 = vmand %vm2125, %vm2865
    %vm3266 = vmand %vm2126, %vm2866
    %vm3267 = vmand %vm2127, %vm2867
    %vm3268 = vmand %vm2128, %vm2868
    %vm3269 = vmand %vm2129, %vm2869
    %vm3270 = vmand %vm2130, %vm2870
    %vm3271 = vmand %vm2131, %vm2871
    %vm3272 = vmand %vm2132, %vm2872
    %vm3273 = vmand %vm2133, %vm2873
    %vm3274 = vmand %vm2134, %vm2874
    %vm3275 = vmand %vm2135, %vm2875
    %vm3276 = vmand %vm2136, %vm2876
    %v3277 = vsel %vm2877, 1.0, 0.0
    %v3278 = vsel %vm2878, 1.0, 0.0
    %v3279 = vsel %vm2879, 1.0, 0.0
    %v3280 = vsel %vm2880, 1.0, 0.0
    %v3281 = vsel %vm2881, 1.0, 0.0
    %v3282 = vsel %vm2882, 1.0, 0.0
    %v3283 = vsel %vm2883, 1.0, 0.0
    %v3284 = vsel %vm2884, 1.0, 0.0
    %v3285 = vsel %vm2885, 1.0, 0.0
    %v3286 = vsel %vm2886, 1.0, 0.0
    %v3287 = vsel %vm2887, 1.0, 0.0
    %v3288 = vsel %vm2888, 1.0, 0.0
    %v3289 = vsel %vm2889, 1.0, 0.0
    %v3290 = vsel %vm2890, 1.0, 0.0
    %v3291 = vsel %vm2891, 1.0, 0.0
    %v3292 = vsel %vm2892, 1.0, 0.0
    %v3293 = vsel %vm2893, 1.0, 0.0
    %v3294 = vsel %vm2894, 1.0, 0.0
    %v3295 = vsel %vm2895, 1.0, 0.0
    %v3296 = vsel %vm2896, 1.0, 0.0
    %v3297 = vsel %vm2897, 1.0, 0.0
    %v3298 = vsel %vm2898, 1.0, 0.0
    %v3299 = vsel %vm2899, 1.0, 0.0
    %v3300 = vsel %vm2900, 1.0, 0.0
    %v3301 = vsel %vm2901, 1.0, 0.0
    %v3302 = vsel %vm2902, 1.0, 0.0
    %v3303 = vsel %vm2903, 1.0, 0.0
    %v3304 = vsel %vm2904, 1.0, 0.0
    %v3305 = vsel %vm2905, 1.0, 0.0
    %v3306 = vsel %vm2906, 1.0, 0.0
    %v3307 = vsel %vm2907, 1.0, 0.0
    %v3308 = vsel %vm2908, 1.0, 0.0
    %v3309 = vsel %vm2909, 1.0, 0.0
    %v3310 = vsel %vm2910, 1.0, 0.0
    %v3311 = vsel %vm2911, 1.0, 0.0
    %v3312 = vsel %vm2912, 1.0, 0.0
    %v3313 = vsel %vm2913, 1.0, 0.0
    %v3314 = vsel %vm2914, 1.0, 0.0
    %v3315 = vsel %vm2915, 1.0, 0.0
    %v3316 = vsel %vm2916, 1.0, 0.0
    %v3317 = vsel %vm2917, 1.0, 0.0
    %v3318 = vsel %vm2918, 1.0, 0.0
    %v3319 = vsel %vm2919, 1.0, 0.0
    %v3320 = vsel %vm2920, 1.0, 0.0
    %v3321 = vsel %vm2921, 1.0, 0.0
    %v3322 = vsel %vm2922, 1.0, 0.0
    %v3323 = vsel %vm2923, 1.0, 0.0
    %v3324 = vsel %vm2924, 1.0, 0.0
    %v3325 = vsel %vm2925, 1.0, 0.0
    %v3326 = vsel %vm2926, 1.0, 0.0
    %v3327 = vsel %vm2927, 1.0, 0.0
    %v3328 = vsel %vm2928, 1.0, 0.0
    %v3329 = vsel %vm2929, 1.0, 0.0
    %v3330 = vsel %vm2930, 1.0, 0.0
    %v3331 = vsel %vm2931, 1.0, 0.0
    %v3332 = vsel %vm2932, 1.0, 0.0
    %v3333 = vsel %vm2933, 1.0, 0.0
    %v3334 = vsel %vm2934, 1.0, 0.0
    %v3335 = vsel %vm2935, 1.0, 0.0
    %v3336 = vsel %vm2936, 1.0, 0.0
    %v3337 = vsel %vm2937, 1.0, 0.0
    %v3338 = vsel %vm2938, 1.0, 0.0
    %v3339 = vsel %vm2939, 1.0, 0.0
    %v3340 = vsel %vm2940, 1.0, 0.0
    %v3341 = vsel %vm2941, 1.0, 0.0
    %v3342 = vsel %vm2942, 1.0, 0.0
    %v3343 = vsel %vm2943, 1.0, 0.0
    %v3344 = vsel %vm2944, 1.0, 0.0
    %v3345 = vsel %vm2945, 1.0, 0.0
    %v3346 = vsel %vm2946, 1.0, 0.0
    %v3347 = vsel %vm2947, 1.0, 0.0
    %v3348 = vsel %vm2948, 1.0, 0.0
    %v3349 = vsel %vm2949, 1.0, 0.0
    %v3350 = vsel %vm2950, 1.0, 0.0
    %v3351 = vsel %vm2951, 1.0, 0.0
    %v3352 = vsel %vm2952, 1.0, 0.0
    %v3353 = vsel %vm2953, 1.0, 0.0
    %v3354 = vsel %vm2954, 1.0, 0.0
    %v3355 = vsel %vm2955, 1.0, 0.0
    %v3356 = vsel %vm2956, 1.0, 0.0
    %v3357 = vsel %vm2957, 1.0, 0.0
    %v3358 = vsel %vm2958, 1.0, 0.0
    %v3359 = vsel %vm2959, 1.0, 0.0
    %v3360 = vsel %vm2960, 1.0, 0.0
    %v3361 = vsel %vm2961, 1.0, 0.0
    %v3362 = vsel %vm2962, 1.0, 0.0
    %v3363 = vsel %vm2963, 1.0, 0.0
    %v3364 = vsel %vm2964, 1.0, 0.0
    %v3365 = vsel %vm2965, 1.0, 0.0
    %v3366 = vsel %vm2966, 1.0, 0.0
    %v3367 = vsel %vm2967, 1.0, 0.0
    %v3368 = vsel %vm2968, 1.0, 0.0
    %v3369 = vsel %vm2969, 1.0, 0.0
    %v3370 = vsel %vm2970, 1.0, 0.0
    %v3371 = vsel %vm2971, 1.0, 0.0
    %v3372 = vsel %vm2972, 1.0, 0.0
    %v3373 = vsel %vm2973, 1.0, 0.0
    %v3374 = vsel %vm2974, 1.0, 0.0
    %v3375 = vsel %vm2975, 1.0, 0.0
    %v3376 = vsel %vm2976, 1.0, 0.0
    %v3377 = vsel %vm2977, 1.0, 0.0
    %v3378 = vsel %vm2978, 1.0, 0.0
    %v3379 = vsel %vm2979, 1.0, 0.0
    %v3380 = vsel %vm2980, 1.0, 0.0
    %v3381 = vsel %vm2981, 1.0, 0.0
    %v3382 = vsel %vm2982, 1.0, 0.0
    %v3383 = vsel %vm2983, 1.0, 0.0
    %v3384 = vsel %vm2984, 1.0, 0.0
    %v3385 = vsel %vm2985, 1.0, 0.0
    %v3386 = vsel %vm2986, 1.0, 0.0
    %v3387 = vsel %vm2987, 1.0, 0.0
    %v3388 = vsel %vm2988, 1.0, 0.0
    %v3389 = vsel %vm2989, 1.0, 0.0
    %v3390 = vsel %vm2990, 1.0, 0.0
    %v3391 = vsel %vm2991, 1.0, 0.0
    %v3392 = vsel %vm2992, 1.0, 0.0
    %v3393 = vsel %vm2993, 1.0, 0.0
    %v3394 = vsel %vm2994, 1.0, 0.0
    %v3395 = vsel %vm2995, 1.0, 0.0
    %v3396 = vsel %vm2996, 1.0, 0.0
    %v3397 = vsel %vm2997, 1.0, 0.0
    %v3398 = vsel %vm2998, 1.0, 0.0
    %v3399 = vsel %vm2999, 1.0, 0.0
    %v3400 = vsel %vm3000, 1.0, 0.0
    %v3401 = vsel %vm3001, 1.0, 0.0
    %v3402 = vsel %vm3002, 1.0, 0.0
    %v3403 = vsel %vm3003, 1.0, 0.0
    %v3404 = vsel %vm3004, 1.0, 0.0
    %v3405 = vsel %vm3005, 1.0, 0.0
    %v3406 = vsel %vm3006, 1.0, 0.0
    %v3407 = vsel %vm3007, 1.0, 0.0
    %v3408 = vsel %vm3008, 1.0, 0.0
    %v3409 = vsel %vm3009, 1.0, 0.0
    %v3410 = vsel %vm3010, 1.0, 0.0
    %v3411 = vsel %vm3011, 1.0, 0.0
    %v3412 = vsel %vm3012, 1.0, 0.0
    %v3413 = vsel %vm3013, 1.0, 0.0
    %v3414 = vsel %vm3014, 1.0, 0.0
    %v3415 = vsel %vm3015, 1.0, 0.0
    %v3416 = vsel %vm3016, 1.0, 0.0
    %v3417 = vsel %vm3017, 1.0, 0.0
    %v3418 = vsel %vm3018, 1.0, 0.0
    %v3419 = vsel %vm3019, 1.0, 0.0
    %v3420 = vsel %vm3020, 1.0, 0.0
    %v3421 = vsel %vm3021, 1.0, 0.0
    %v3422 = vsel %vm3022, 1.0, 0.0
    %v3423 = vsel %vm3023, 1.0, 0.0
    %v3424 = vsel %vm3024, 1.0, 0.0
    %v3425 = vsel %vm3025, 1.0, 0.0
    %v3426 = vsel %vm3026, 1.0, 0.0
    %v3427 = vsel %vm3027, 1.0, 0.0
    %v3428 = vsel %vm3028, 1.0, 0.0
    %v3429 = vsel %vm3029, 1.0, 0.0
    %v3430 = vsel %vm3030, 1.0, 0.0
    %v3431 = vsel %vm3031, 1.0, 0.0
    %v3432 = vsel %vm3032, 1.0, 0.0
    %v3433 = vsel %vm3033, 1.0, 0.0
    %v3434 = vsel %vm3034, 1.0, 0.0
    %v3435 = vsel %vm3035, 1.0, 0.0
    %v3436 = vsel %vm3036, 1.0, 0.0
    %v3437 = vsel %vm3037, 1.0, 0.0
    %v3438 = vsel %vm3038, 1.0, 0.0
    %v3439 = vsel %vm3039, 1.0, 0.0
    %v3440 = vsel %vm3040, 1.0, 0.0
    %v3441 = vsel %vm3041, 1.0, 0.0
    %v3442 = vsel %vm3042, 1.0, 0.0
    %v3443 = vsel %vm3043, 1.0, 0.0
    %v3444 = vsel %vm3044, 1.0, 0.0
    %v3445 = vsel %vm3045, 1.0, 0.0
    %v3446 = vsel %vm3046, 1.0, 0.0
    %v3447 = vsel %vm3047, 1.0, 0.0
    %v3448 = vsel %vm3048, 1.0, 0.0
    %v3449 = vsel %vm3049, 1.0, 0.0
    %v3450 = vsel %vm3050, 1.0, 0.0
    %v3451 = vsel %vm3051, 1.0, 0.0
    %v3452 = vsel %vm3052, 1.0, 0.0
    %v3453 = vsel %vm3053, 1.0, 0.0
    %v3454 = vsel %vm3054, 1.0, 0.0
    %v3455 = vsel %vm3055, 1.0, 0.0
    %v3456 = vsel %vm3056, 1.0, 0.0
    %v3457 = vsel %vm3057, 1.0, 0.0
    %v3458 = vsel %vm3058, 1.0, 0.0
    %v3459 = vsel %vm3059, 1.0, 0.0
    %v3460 = vsel %vm3060, 1.0, 0.0
    %v3461 = vsel %vm3061, 1.0, 0.0
    %v3462 = vsel %vm3062, 1.0, 0.0
    %v3463 = vsel %vm3063, 1.0, 0.0
    %v3464 = vsel %vm3064, 1.0, 0.0
    %v3465 = vsel %vm3065, 1.0, 0.0
    %v3466 = vsel %vm3066, 1.0, 0.0
    %v3467 = vsel %vm3067, 1.0, 0.0
    %v3468 = vsel %vm3068, 1.0, 0.0
    %v3469 = vsel %vm3069, 1.0, 0.0
    %v3470 = vsel %vm3070, 1.0, 0.0
    %v3471 = vsel %vm3071, 1.0, 0.0
    %v3472 = vsel %vm3072, 1.0, 0.0
    %v3473 = vsel %vm3073, 1.0, 0.0
    %v3474 = vsel %vm3074, 1.0, 0.0
    %v3475 = vsel %vm3075, 1.0, 0.0
    %v3476 = vsel %vm3076, 1.0, 0.0
    %v3477 = vsel %vm3077, 1.0, 0.0
    %v3478 = vsel %vm3078, 1.0, 0.0
    %v3479 = vsel %vm3079, 1.0, 0.0
    %v3480 = vsel %vm3080, 1.0, 0.0
    %v3481 = vsel %vm3081, 1.0, 0.0
    %v3482 = vsel %vm3082, 1.0, 0.0
    %v3483 = vsel %vm3083, 1.0, 0.0
    %v3484 = vsel %vm3084, 1.0, 0.0
    %v3485 = vsel %vm3085, 1.0, 0.0
    %v3486 = vsel %vm3086, 1.0, 0.0
    %v3487 = vsel %vm3087, 1.0, 0.0
    %v3488 = vsel %vm3088, 1.0, 0.0
    %v3489 = vsel %vm3089, 1.0, 0.0
    %v3490 = vsel %vm3090, 1.0, 0.0
    %v3491 = vsel %vm3091, 1.0, 0.0
    %v3492 = vsel %vm3092, 1.0, 0.0
    %v3493 = vsel %vm3093, 1.0, 0.0
    %v3494 = vsel %vm3094, 1.0, 0.0
    %v3495 = vsel %vm3095, 1.0, 0.0
    %v3496 = vsel %vm3096, 1.0, 0.0
    %v3497 = vsel %vm3097, 1.0, 0.0
    %v3498 = vsel %vm3098, 1.0, 0.0
    %v3499 = vsel %vm3099, 1.0, 0.0
    %v3500 = vsel %vm3100, 1.0, 0.0
    %v3501 = vsel %vm3101, 1.0, 0.0
    %v3502 = vsel %vm3102, 1.0, 0.0
    %v3503 = vsel %vm3103, 1.0, 0.0
    %v3504 = vsel %vm3104, 1.0, 0.0
    %v3505 = vsel %vm3105, 1.0, 0.0
    %v3506 = vsel %vm3106, 1.0, 0.0
    %v3507 = vsel %vm3107, 1.0, 0.0
    %v3508 = vsel %vm3108, 1.0, 0.0
    %v3509 = vsel %vm3109, 1.0, 0.0
    %v3510 = vsel %vm3110, 1.0, 0.0
    %v3511 = vsel %vm3111, 1.0, 0.0
    %v3512 = vsel %vm3112, 1.0, 0.0
    %v3513 = vsel %vm3113, 1.0, 0.0
    %v3514 = vsel %vm3114, 1.0, 0.0
    %v3515 = vsel %vm3115, 1.0, 0.0
    %v3516 = vsel %vm3116, 1.0, 0.0
    %v3517 = vsel %vm3117, 1.0, 0.0
    %v3518 = vsel %vm3118, 1.0, 0.0
    %v3519 = vsel %vm3119, 1.0, 0.0
    %v3520 = vsel %vm3120, 1.0, 0.0
    %v3521 = vsel %vm3121, 1.0, 0.0
    %v3522 = vsel %vm3122, 1.0, 0.0
    %v3523 = vsel %vm3123, 1.0, 0.0
    %v3524 = vsel %vm3124, 1.0, 0.0
    %v3525 = vsel %vm3125, 1.0, 0.0
    %v3526 = vsel %vm3126, 1.0, 0.0
    %v3527 = vsel %vm3127, 1.0, 0.0
    %v3528 = vsel %vm3128, 1.0, 0.0
    %v3529 = vsel %vm3129, 1.0, 0.0
    %v3530 = vsel %vm3130, 1.0, 0.0
    %v3531 = vsel %vm3131, 1.0, 0.0
    %v3532 = vsel %vm3132, 1.0, 0.0
    %v3533 = vsel %vm3133, 1.0, 0.0
    %v3534 = vsel %vm3134, 1.0, 0.0
    %v3535 = vsel %vm3135, 1.0, 0.0
    %v3536 = vsel %vm3136, 1.0, 0.0
    %v3537 = vsel %vm3137, 1.0, 0.0
    %v3538 = vsel %vm3138, 1.0, 0.0
    %v3539 = vsel %vm3139, 1.0, 0.0
    %v3540 = vsel %vm3140, 1.0, 0.0
    %v3541 = vsel %vm3141, 1.0, 0.0
    %v3542 = vsel %vm3142, 1.0, 0.0
    %v3543 = vsel %vm3143, 1.0, 0.0
    %v3544 = vsel %vm3144, 1.0, 0.0
    %v3545 = vsel %vm3145, 1.0, 0.0
    %v3546 = vsel %vm3146, 1.0, 0.0
    %v3547 = vsel %vm3147, 1.0, 0.0
    %v3548 = vsel %vm3148, 1.0, 0.0
    %v3549 = vsel %vm3149, 1.0, 0.0
    %v3550 = vsel %vm3150, 1.0, 0.0
    %v3551 = vsel %vm3151, 1.0, 0.0
    %v3552 = vsel %vm3152, 1.0, 0.0
    %v3553 = vsel %vm3153, 1.0, 0.0
    %v3554 = vsel %vm3154, 1.0, 0.0
    %v3555 = vsel %vm3155, 1.0, 0.0
    %v3556 = vsel %vm3156, 1.0, 0.0
    %v3557 = vsel %vm3157, 1.0, 0.0
    %v3558 = vsel %vm3158, 1.0, 0.0
    %v3559 = vsel %vm3159, 1.0, 0.0
    %v3560 = vsel %vm3160, 1.0, 0.0
    %v3561 = vsel %vm3161, 1.0, 0.0
    %v3562 = vsel %vm3162, 1.0, 0.0
    %v3563 = vsel %vm3163, 1.0, 0.0
    %v3564 = vsel %vm3164, 1.0, 0.0
    %v3565 = vsel %vm3165, 1.0, 0.0
    %v3566 = vsel %vm3166, 1.0, 0.0
    %v3567 = vsel %vm3167, 1.0, 0.0
    %v3568 = vsel %vm3168, 1.0, 0.0
    %v3569 = vsel %vm3169, 1.0, 0.0
    %v3570 = vsel %vm3170, 1.0, 0.0
    %v3571 = vsel %vm3171, 1.0, 0.0
    %v3572 = vsel %vm3172, 1.0, 0.0
    %v3573 = vsel %vm3173, 1.0, 0.0
    %v3574 = vsel %vm3174, 1.0, 0.0
    %v3575 = vsel %vm3175, 1.0, 0.0
    %v3576 = vsel %vm3176, 1.0, 0.0
    %v3577 = vsel %vm3177, 1.0, 0.0
    %v3578 = vsel %vm3178, 1.0, 0.0
    %v3579 = vsel %vm3179, 1.0, 0.0
    %v3580 = vsel %vm3180, 1.0, 0.0
    %v3581 = vsel %vm3181, 1.0, 0.0
    %v3582 = vsel %vm3182, 1.0, 0.0
    %v3583 = vsel %vm3183, 1.0, 0.0
    %v3584 = vsel %vm3184, 1.0, 0.0
    %v3585 = vsel %vm3185, 1.0, 0.0
    %v3586 = vsel %vm3186, 1.0, 0.0
    %v3587 = vsel %vm3187, 1.0, 0.0
    %v3588 = vsel %vm3188, 1.0, 0.0
    %v3589 = vsel %vm3189, 1.0, 0.0
    %v3590 = vsel %vm3190, 1.0, 0.0
    %v3591 = vsel %vm3191, 1.0, 0.0
    %v3592 = vsel %vm3192, 1.0, 0.0
    %v3593 = vsel %vm3193, 1.0, 0.0
    %v3594 = vsel %vm3194, 1.0, 0.0
    %v3595 = vsel %vm3195, 1.0, 0.0
    %v3596 = vsel %vm3196, 1.0, 0.0
    %v3597 = vsel %vm3197, 1.0, 0.0
    %v3598 = vsel %vm3198, 1.0, 0.0
    %v3599 = vsel %vm3199, 1.0, 0.0
    %v3600 = vsel %vm3200, 1.0, 0.0
    %v3601 = vsel %vm3201, 1.0, 0.0
    %v3602 = vsel %vm3202, 1.0, 0.0
    %v3603 = vsel %vm3203, 1.0, 0.0
    %v3604 = vsel %vm3204, 1.0, 0.0
    %v3605 = vsel %vm3205, 1.0, 0.0
    %v3606 = vsel %vm3206, 1.0, 0.0
    %v3607 = vsel %vm3207, 1.0, 0.0
    %v3608 = vsel %vm3208, 1.0, 0.0
    %v3609 = vsel %vm3209, 1.0, 0.0
    %v3610 = vsel %vm3210, 1.0, 0.0
    %v3611 = vsel %vm3211, 1.0, 0.0
    %v3612 = vsel %vm3212, 1.0, 0.0
    %v3613 = vsel %vm3213, 1.0, 0.0
    %v3614 = vsel %vm3214, 1.0, 0.0
    %v3615 = vsel %vm3215, 1.0, 0.0
    %v3616 = vsel %vm3216, 1.0, 0.0
    %v3617 = vsel %vm3217, 1.0, 0.0
    %v3618 = vsel %vm3218, 1.0, 0.0
    %v3619 = vsel %vm3219, 1.0, 0.0
    %v3620 = vsel %vm3220, 1.0, 0.0
    %v3621 = vsel %vm3221, 1.0, 0.0
    %v3622 = vsel %vm3222, 1.0, 0.0
    %v3623 = vsel %vm3223, 1.0, 0.0
    %v3624 = vsel %vm3224, 1.0, 0.0
    %v3625 = vsel %vm3225, 1.0, 0.0
    %v3626 = vsel %vm3226, 1.0, 0.0
    %v3627 = vsel %vm3227, 1.0, 0.0
    %v3628 = vsel %vm3228, 1.0, 0.0
    %v3629 = vsel %vm3229, 1.0, 0.0
    %v3630 = vsel %vm3230, 1.0, 0.0
    %v3631 = vsel %vm3231, 1.0, 0.0
    %v3632 = vsel %vm3232, 1.0, 0.0
    %v3633 = vsel %vm3233, 1.0, 0.0
    %v3634 = vsel %vm3234, 1.0, 0.0
    %v3635 = vsel %vm3235, 1.0, 0.0
    %v3636 = vsel %vm3236, 1.0, 0.0
    %v3637 = vsel %vm3237, 1.0, 0.0
    %v3638 = vsel %vm3238, 1.0, 0.0
    %v3639 = vsel %vm3239, 1.0, 0.0
    %v3640 = vsel %vm3240, 1.0, 0.0
    %v3641 = vsel %vm3241, 1.0, 0.0
    %v3642 = vsel %vm3242, 1.0, 0.0
    %v3643 = vsel %vm3243, 1.0, 0.0
    %v3644 = vsel %vm3244, 1.0, 0.0
    %v3645 = vsel %vm3245, 1.0, 0.0
    %v3646 = vsel %vm3246, 1.0, 0.0
    %v3647 = vsel %vm3247, 1.0, 0.0
    %v3648 = vsel %vm3248, 1.0, 0.0
    %v3649 = vsel %vm3249, 1.0, 0.0
    %v3650 = vsel %vm3250, 1.0, 0.0
    %v3651 = vsel %vm3251, 1.0, 0.0
    %v3652 = vsel %vm3252, 1.0, 0.0
    %v3653 = vsel %vm3253, 1.0, 0.0
    %v3654 = vsel %vm3254, 1.0, 0.0
    %v3655 = vsel %vm3255, 1.0, 0.0
    %v3656 = vsel %vm3256, 1.0, 0.0
    %v3657 = vsel %vm3257, 1.0, 0.0
    %v3658 = vsel %vm3258, 1.0, 0.0
    %v3659 = vsel %vm3259, 1.0, 0.0
    %v3660 = vsel %vm3260, 1.0, 0.0
    %v3661 = vsel %vm3261, 1.0, 0.0
    %v3662 = vsel %vm3262, 1.0, 0.0
    %v3663 = vsel %vm3263, 1.0, 0.0
    %v3664 = vsel %vm3264, 1.0, 0.0
    %v3665 = vsel %vm3265, 1.0, 0.0
    %v3666 = vsel %vm3266, 1.0, 0.0
    %v3667 = vsel %vm3267, 1.0, 0.0
    %v3668 = vsel %vm3268, 1.0, 0.0
    %v3669 = vsel %vm3269, 1.0, 0.0
    %v3670 = vsel %vm3270, 1.0, 0.0
    %v3671 = vsel %vm3271, 1.0, 0.0
    %v3672 = vsel %vm3272, 1.0, 0.0
    %v3673 = vsel %vm3273, 1.0, 0.0
    %v3674 = vsel %vm3274, 1.0, 0.0
    %v3675 = vsel %vm3275, 1.0, 0.0
    %v3676 = vsel %vm3276, 1.0, 0.0
    %3677 = vmatprep.subr.mxu0 %v3278
    %3678 = vmatpush1.msra.mxu0 %v3277
    %3679 = vmatprep.subr.mxu0 %v3283
    %3680 = vmatpush1.msra.mxu0 %v3282
    %3681 = vmatprep.subr.mxu0 %v3288
    %3682 = vmatpush1.msra.mxu0 %v3287
    %3683 = vmatprep.subr.mxu0 %v3293
    %3684 = vmatpush1.msra.mxu0 %v3292
    %3685 = vmatprep.subr.mxu0 %v3298
    %3686 = vmatpush1.msra.mxu0 %v3297
    %3687 = vmatprep.subr.mxu0 %v3303
    %3688 = vmatpush1.msra.mxu0 %v3302
    %3689 = vmatprep.subr.mxu0 %v3308
    %3690 = vmatpush1.msra.mxu0 %v3307
    %3691 = vmatprep.subr.mxu0 %v3313
    %3692 = vmatpush1.msra.mxu0 %v3312
    %3693 = vmatprep.subr.mxu0 %v3318
    %3694 = vmatpush1.msra.mxu0 %v3317
    %3695 = vmatprep.subr.mxu0 %v3323
    %3696 = vmatpush1.msra.mxu0 %v3322
    %3697 = vmatprep.subr.mxu0 %v3328
    %3698 = vmatpush1.msra.mxu0 %v3327
    %3699 = vmatprep.subr.mxu0 %v3333
    %3700 = vmatpush1.msra.mxu0 %v3332
    %3701 = vmatprep.subr.mxu0 %v3338
    %3702 = vmatpush1.msra.mxu0 %v3337
    %3703 = vmatprep.subr.mxu0 %v3343
    %3704 = vmatpush1.msra.mxu0 %v3342
    %3705 = vmatprep.subr.mxu0 %v3348
    %3706 = vmatpush1.msra.mxu0 %v3347
    %3707 = vmatprep.subr.mxu0 %v3353
    %3708 = vmatpush1.msra.mxu0 %v3352
    %3709 = vmatprep.subr.mxu0 %v3358
    %3710 = vmatpush1.msra.mxu0 %v3357
    %3711 = vmatprep.subr.mxu0 %v3363
    %3712 = vmatpush1.msra.mxu0 %v3362
    %3713 = vmatprep.subr.mxu0 %v3368
    %3714 = vmatpush1.msra.mxu0 %v3367
    %3715 = vmatprep.subr.mxu0 %v3373
    %3716 = vmatpush1.msra.mxu0 %v3372
    %3717 = vmatprep.subr.mxu0 %v3378
    %3718 = vmatpush1.msra.mxu0 %v3377
    %3719 = vmatprep.subr.mxu0 %v3383
    %3720 = vmatpush1.msra.mxu0 %v3382
    %3721 = vmatprep.subr.mxu0 %v3388
    %3722 = vmatpush1.msra.mxu0 %v3387
    %3723 = vmatprep.subr.mxu0 %v3393
    %3724 = vmatpush1.msra.mxu0 %v3392
    %3725 = vmatprep.subr.mxu0 %v3398
    %3726 = vmatpush1.msra.mxu0 %v3397
    %3727 = vmatprep.subr.mxu0 %v3403
    %3728 = vmatpush1.msra.mxu0 %v3402
    %3729 = vmatprep.subr.mxu0 %v3408
    %3730 = vmatpush1.msra.mxu0 %v3407
    %3731 = vmatprep.subr.mxu0 %v3413
    %3732 = vmatpush1.msra.mxu0 %v3412
    %3733 = vmatprep.subr.mxu0 %v3418
    %3734 = vmatpush1.msra.mxu0 %v3417
    %3735 = vmatprep.subr.mxu0 %v3423
    %3736 = vmatpush1.msra.mxu0 %v3422
    %3737 = vmatprep.subr.mxu0 %v3428
    %3738 = vmatpush1.msra.mxu0 %v3427
    %3739 = vmatprep.subr.mxu0 %v3433
    %3740 = vmatpush1.msra.mxu0 %v3432
    %3741 = vmatprep.mubr.f32.mxu0 %v42
    %3742 = vmatmul.mubr.f32.gmra.mrb[0].mxu0 %v40
    %v3743 = vpop.f32.mrb[0].mxu0
    %v3744 = vadd.f32 0.0, %v3743
    %v3745 = vpop.f32.mrb[0].mxu0
    %v3746 = vadd.f32 0.0, %v3745
    %3747 = vmatprep.mubr.f32.mxu0 %v43
    %3748 = vmatmul.mubr.f32.gmra.mrb[0].mxu0 %v41
    %v3749 = vpop.f32.mrb[0].mxu0
    %v3750 = vadd.f32 0.0, %v3749
    %v3751 = vpop.f32.mrb[0].mxu0
    %v3752 = vadd.f32 0.0, %v3751
    %3753 = vdwg.mxu0
    %3754 = vmatprep.subr.mxu0 %v3438
    %3755 = vmatpush1.msra.mxu0 %v3437
    %3756 = vmatprep.subr.mxu0 %v3443
    %3757 = vmatpush1.msra.mxu0 %v3442
    %3758 = vmatprep.subr.mxu0 %v3448
    %3759 = vmatpush1.msra.mxu0 %v3447
    %3760 = vmatprep.subr.mxu0 %v3453
    %3761 = vmatpush1.msra.mxu0 %v3452
    %3762 = vmatprep.subr.mxu0 %v3458
    %3763 = vmatpush1.msra.mxu0 %v3457
    %3764 = vmatprep.subr.mxu0 %v3463
    %3765 = vmatpush1.msra.mxu0 %v3462
    %3766 = vmatprep.subr.mxu0 %v3468
    %3767 = vmatpush1.msra.mxu0 %v3467
    %3768 = vmatprep.subr.mxu0 %v3473
    %3769 = vmatpush1.msra.mxu0 %v3472
    %3770 = vmatprep.subr.mxu0 %v3478
    %3771 = vmatpush1.msra.mxu0 %v3477
    %3772 = vmatprep.subr.mxu0 %v3483
    %3773 = vmatpush1.msra.mxu0 %v3482
    %3774 = vmatprep.subr.mxu0 %v3488
    %3775 = vmatpush1.msra.mxu0 %v3487
    %3776 = vmatprep.subr.mxu0 %v3493
    %3777 = vmatpush1.msra.mxu0 %v3492
    %3778 = vmatprep.subr.mxu0 %v3498
    %3779 = vmatpush1.msra.mxu0 %v3497
    %3780 = vmatprep.subr.mxu0 %v3503
    %3781 = vmatpush1.msra.mxu0 %v3502
    %3782 = vmatprep.subr.mxu0 %v3508
    %3783 = vmatpush1.msra.mxu0 %v3507
    %3784 = vmatprep.subr.mxu0 %v3513
    %3785 = vmatpush1.msra.mxu0 %v3512
    %3786 = vmatprep.subr.mxu0 %v3518
    %3787 = vmatpush1.msra.mxu0 %v3517
    %3788 = vmatprep.subr.mxu0 %v3523
    %3789 = vmatpush1.msra.mxu0 %v3522
    %3790 = vmatprep.subr.mxu0 %v3528
    %3791 = vmatpush1.msra.mxu0 %v3527
    %3792 = vmatprep.subr.mxu0 %v3533
    %3793 = vmatpush1.msra.mxu0 %v3532
    %3794 = vmatprep.subr.mxu0 %v3538
    %3795 = vmatpush1.msra.mxu0 %v3537
    %3796 = vmatprep.subr.mxu0 %v3543
    %3797 = vmatpush1.msra.mxu0 %v3542
    %3798 = vmatprep.subr.mxu0 %v3548
    %3799 = vmatpush1.msra.mxu0 %v3547
    %3800 = vmatprep.subr.mxu0 %v3553
    %3801 = vmatpush1.msra.mxu0 %v3552
    %3802 = vmatprep.subr.mxu0 %v3558
    %3803 = vmatpush1.msra.mxu0 %v3557
    %3804 = vmatprep.subr.mxu0 %v3563
    %3805 = vmatpush1.msra.mxu0 %v3562
    %3806 = vmatprep.subr.mxu0 %v3568
    %3807 = vmatpush1.msra.mxu0 %v3567
    %3808 = vmatprep.subr.mxu0 %v3573
    %3809 = vmatpush1.msra.mxu0 %v3572
    %3810 = vmatprep.subr.mxu0 %v3578
    %3811 = vmatpush1.msra.mxu0 %v3577
    %3812 = vmatprep.subr.mxu0 %v3583
    %3813 = vmatpush1.msra.mxu0 %v3582
    %3814 = vmatprep.subr.mxu0 %v3588
    %3815 = vmatpush1.msra.mxu0 %v3587
    %3816 = vmatprep.subr.mxu0 %v3593
    %3817 = vmatpush1.msra.mxu0 %v3592
    %3818 = vmatprep.mubr.f32.mxu0 %v46
    %3819 = vmatmul.mubr.f32.gmra.mrb[0].mxu0 %v44
    %v3820 = vpop.f32.mrb[0].mxu0
    %v3821 = vadd.f32 %v3744, %v3820
    %v3822 = vpop.f32.mrb[0].mxu0
    %v3823 = vadd.f32 %v3746, %v3822
    %3824 = vmatprep.mubr.f32.mxu0 %v47
    %3825 = vmatmul.mubr.f32.gmra.mrb[0].mxu0 %v45
    %v3826 = vpop.f32.mrb[0].mxu0
    %v3827 = vadd.f32 %v3750, %v3826
    %v3828 = vpop.f32.mrb[0].mxu0
    %v3829 = vadd.f32 %v3752, %v3828
    %3830 = vdwg.mxu0
    %3831 = vmatprep.subr.mxu0 %v3598
    %3832 = vmatpush1.msra.mxu0 %v3597
    %3833 = vmatprep.subr.mxu0 %v3603
    %3834 = vmatpush1.msra.mxu0 %v3602
    %3835 = vmatprep.subr.mxu0 %v3608
    %3836 = vmatpush1.msra.mxu0 %v3607
    %3837 = vmatprep.subr.mxu0 %v3613
    %3838 = vmatpush1.msra.mxu0 %v3612
    %3839 = vmatprep.subr.mxu0 %v3618
    %3840 = vmatpush1.msra.mxu0 %v3617
    %3841 = vmatprep.subr.mxu0 %v3623
    %3842 = vmatpush1.msra.mxu0 %v3622
    %3843 = vmatprep.subr.mxu0 %v3628
    %3844 = vmatpush1.msra.mxu0 %v3627
    %3845 = vmatprep.subr.mxu0 %v3633
    %3846 = vmatpush1.msra.mxu0 %v3632
    %3847 = vmatprep.subr.mxu0 %v3638
    %3848 = vmatpush1.msra.mxu0 %v3637
    %3849 = vmatprep.subr.mxu0 %v3643
    %3850 = vmatpush1.msra.mxu0 %v3642
    %3851 = vmatprep.subr.mxu0 %v3648
    %3852 = vmatpush1.msra.mxu0 %v3647
    %3853 = vmatprep.subr.mxu0 %v3653
    %3854 = vmatpush1.msra.mxu0 %v3652
    %3855 = vmatprep.subr.mxu0 %v3658
    %3856 = vmatpush1.msra.mxu0 %v3657
    %3857 = vmatprep.subr.mxu0 %v3663
    %3858 = vmatpush1.msra.mxu0 %v3662
    %3859 = vmatprep.subr.mxu0 %v3668
    %3860 = vmatpush1.msra.mxu0 %v3667
    %3861 = vmatprep.subr.mxu0 %v3673
    %3862 = vmatpush1.msra.mxu0 %v3672
    %3863 = vmatprep.subr.mxu0 0.0
    %3864 = vmatpush1.msra.mxu0 0.0
    %3865 = vmatprep.subr.mxu0 0.0
    %3866 = vmatpush1.msra.mxu0 0.0
    %3867 = vmatprep.subr.mxu0 0.0
    %3868 = vmatpush1.msra.mxu0 0.0
    %3869 = vmatprep.subr.mxu0 0.0
    %3870 = vmatpush1.msra.mxu0 0.0
    %3871 = vmatprep.subr.mxu0 0.0
    %3872 = vmatpush1.msra.mxu0 0.0
    %3873 = vmatprep.subr.mxu0 0.0
    %3874 = vmatpush1.msra.mxu0 0.0
    %3875 = vmatprep.subr.mxu0 0.0
    %3876 = vmatpush1.msra.mxu0 0.0
    %3877 = vmatprep.subr.mxu0 0.0
    %3878 = vmatpush1.msra.mxu0 0.0
    %3879 = vmatprep.subr.mxu0 0.0
    %3880 = vmatpush1.msra.mxu0 0.0
    %3881 = vmatprep.subr.mxu0 0.0
    %3882 = vmatpush1.msra.mxu0 0.0
    %3883 = vmatprep.subr.mxu0 0.0
    %3884 = vmatpush1.msra.mxu0 0.0
    %3885 = vmatprep.subr.mxu0 0.0
    %3886 = vmatpush1.msra.mxu0 0.0
    %3887 = vmatprep.subr.mxu0 0.0
    %3888 = vmatpush1.msra.mxu0 0.0
    %3889 = vmatprep.subr.mxu0 0.0
    %3890 = vmatpush1.msra.mxu0 0.0
    %3891 = vmatprep.subr.mxu0 0.0
    %3892 = vmatpush1.msra.mxu0 0.0
    %3893 = vmatprep.subr.mxu0 0.0
    %3894 = vmatpush1.msra.mxu0 0.0
    %3895 = vmatprep.mubr.f32.mxu0 0.0
    %3896 = vmatmul.mubr.f32.gmra.mrb[0].mxu0 %v48
    %v3897 = vpop.f32.mrb[0].mxu0
    %v3898 = vadd.f32 %v3821, %v3897
    %v3899 = vpop.f32.mrb[0].mxu0
    %v3900 = vadd.f32 %v3823, %v3899
    %3901 = vmatprep.mubr.f32.mxu0 0.0
    %3902 = vmatmul.mubr.f32.gmra.mrb[0].mxu0 %v49
    %v3903 = vpop.f32.mrb[0].mxu0
    %v3904 = vadd.f32 %v3827, %v3903
    %v3905 = vpop.f32.mrb[0].mxu0
    %v3906 = vadd.f32 %v3829, %v3905
    %3907 = vdwg.mxu0
    %3908 = vmatprep.subr.mxu0 %v3280
    %3909 = vmatpush1.msra.mxu0 %v3279
    %3910 = vmatprep.subr.mxu0 %v3285
    %3911 = vmatpush1.msra.mxu0 %v3284
    %3912 = vmatprep.subr.mxu0 %v3290
    %3913 = vmatpush1.msra.mxu0 %v3289
    %3914 = vmatprep.subr.mxu0 %v3295
    %3915 = vmatpush1.msra.mxu0 %v3294
    %3916 = vmatprep.subr.mxu0 %v3300
    %3917 = vmatpush1.msra.mxu0 %v3299
    %3918 = vmatprep.subr.mxu0 %v3305
    %3919 = vmatpush1.msra.mxu0 %v3304
    %3920 = vmatprep.subr.mxu0 %v3310
    %3921 = vmatpush1.msra.mxu0 %v3309
    %3922 = vmatprep.subr.mxu0 %v3315
    %3923 = vmatpush1.msra.mxu0 %v3314
    %3924 = vmatprep.subr.mxu0 %v3320
    %3925 = vmatpush1.msra.mxu0 %v3319
    %3926 = vmatprep.subr.mxu0 %v3325
    %3927 = vmatpush1.msra.mxu0 %v3324
    %3928 = vmatprep.subr.mxu0 %v3330
    %3929 = vmatpush1.msra.mxu0 %v3329
    %3930 = vmatprep.subr.mxu0 %v3335
    %3931 = vmatpush1.msra.mxu0 %v3334
    %3932 = vmatprep.subr.mxu0 %v3340
    %3933 = vmatpush1.msra.mxu0 %v3339
    %3934 = vmatprep.subr.mxu0 %v3345
    %3935 = vmatpush1.msra.mxu0 %v3344
    %3936 = vmatprep.subr.mxu0 %v3350
    %3937 = vmatpush1.msra.mxu0 %v3349
    %3938 = vmatprep.subr.mxu0 %v3355
    %3939 = vmatpush1.msra.mxu0 %v3354
    %3940 = vmatprep.subr.mxu0 %v3360
    %3941 = vmatpush1.msra.mxu0 %v3359
    %3942 = vmatprep.subr.mxu0 %v3365
    %3943 = vmatpush1.msra.mxu0 %v3364
    %3944 = vmatprep.subr.mxu0 %v3370
    %3945 = vmatpush1.msra.mxu0 %v3369
    %3946 = vmatprep.subr.mxu0 %v3375
    %3947 = vmatpush1.msra.mxu0 %v3374
    %3948 = vmatprep.subr.mxu0 %v3380
    %3949 = vmatpush1.msra.mxu0 %v3379
    %3950 = vmatprep.subr.mxu0 %v3385
    %3951 = vmatpush1.msra.mxu0 %v3384
    %3952 = vmatprep.subr.mxu0 %v3390
    %3953 = vmatpush1.msra.mxu0 %v3389
    %3954 = vmatprep.subr.mxu0 %v3395
    %3955 = vmatpush1.msra.mxu0 %v3394
    %3956 = vmatprep.subr.mxu0 %v3400
    %3957 = vmatpush1.msra.mxu0 %v3399
    %3958 = vmatprep.subr.mxu0 %v3405
    %3959 = vmatpush1.msra.mxu0 %v3404
    %3960 = vmatprep.subr.mxu0 %v3410
    %3961 = vmatpush1.msra.mxu0 %v3409
    %3962 = vmatprep.subr.mxu0 %v3415
    %3963 = vmatpush1.msra.mxu0 %v3414
    %3964 = vmatprep.subr.mxu0 %v3420
    %3965 = vmatpush1.msra.mxu0 %v3419
    %3966 = vmatprep.subr.mxu0 %v3425
    %3967 = vmatpush1.msra.mxu0 %v3424
    %3968 = vmatprep.subr.mxu0 %v3430
    %3969 = vmatpush1.msra.mxu0 %v3429
    %3970 = vmatprep.subr.mxu0 %v3435
    %3971 = vmatpush1.msra.mxu0 %v3434
    %3972 = vmatprep.mubr.f32.mxu0 %v42
    %3973 = vmatmul.mubr.f32.gmra.mrb[0].mxu0 %v40
    %v3974 = vpop.f32.mrb[0].mxu0
    %v3975 = vadd.f32 0.0, %v3974
    %v3976 = vpop.f32.mrb[0].mxu0
    %v3977 = vadd.f32 0.0, %v3976
    %3978 = vmatprep.mubr.f32.mxu0 %v43
    %3979 = vmatmul.mubr.f32.gmra.mrb[0].mxu0 %v41
    %v3980 = vpop.f32.mrb[0].mxu0
    %v3981 = vadd.f32 0.0, %v3980
    %v3982 = vpop.f32.mrb[0].mxu0
    %v3983 = vadd.f32 0.0, %v3982
    %3984 = vdwg.mxu0
    %3985 = vmatprep.subr.mxu0 %v3440
    %3986 = vmatpush1.msra.mxu0 %v3439
    %3987 = vmatprep.subr.mxu0 %v3445
    %3988 = vmatpush1.msra.mxu0 %v3444
    %3989 = vmatprep.subr.mxu0 %v3450
    %3990 = vmatpush1.msra.mxu0 %v3449
    %3991 = vmatprep.subr.mxu0 %v3455
    %3992 = vmatpush1.msra.mxu0 %v3454
    %3993 = vmatprep.subr.mxu0 %v3460
    %3994 = vmatpush1.msra.mxu0 %v3459
    %3995 = vmatprep.subr.mxu0 %v3465
    %3996 = vmatpush1.msra.mxu0 %v3464
    %3997 = vmatprep.subr.mxu0 %v3470
    %3998 = vmatpush1.msra.mxu0 %v3469
    %3999 = vmatprep.subr.mxu0 %v3475
    %4000 = vmatpush1.msra.mxu0 %v3474
    %4001 = vmatprep.subr.mxu0 %v3480
    %4002 = vmatpush1.msra.mxu0 %v3479
    %4003 = vmatprep.subr.mxu0 %v3485
    %4004 = vmatpush1.msra.mxu0 %v3484
    %4005 = vmatprep.subr.mxu0 %v3490
    %4006 = vmatpush1.msra.mxu0 %v3489
    %4007 = vmatprep.subr.mxu0 %v3495
    %4008 = vmatpush1.msra.mxu0 %v3494
    %4009 = vmatprep.subr.mxu0 %v3500
    %4010 = vmatpush1.msra.mxu0 %v3499
    %4011 = vmatprep.subr.mxu0 %v3505
    %4012 = vmatpush1.msra.mxu0 %v3504
    %4013 = vmatprep.subr.mxu0 %v3510
    %4014 = vmatpush1.msra.mxu0 %v3509
    %4015 = vmatprep.subr.mxu0 %v3515
    %4016 = vmatpush1.msra.mxu0 %v3514
    %4017 = vmatprep.subr.mxu0 %v3520
    %4018 = vmatpush1.msra.mxu0 %v3519
    %4019 = vmatprep.subr.mxu0 %v3525
    %4020 = vmatpush1.msra.mxu0 %v3524
    %4021 = vmatprep.subr.mxu0 %v3530
    %4022 = vmatpush1.msra.mxu0 %v3529
    %4023 = vmatprep.subr.mxu0 %v3535
    %4024 = vmatpush1.msra.mxu0 %v3534
    %4025 = vmatprep.subr.mxu0 %v3540
    %4026 = vmatpush1.msra.mxu0 %v3539
    %4027 = vmatprep.subr.mxu0 %v3545
    %4028 = vmatpush1.msra.mxu0 %v3544
    %4029 = vmatprep.subr.mxu0 %v3550
    %4030 = vmatpush1.msra.mxu0 %v3549
    %4031 = vmatprep.subr.mxu0 %v3555
    %4032 = vmatpush1.msra.mxu0 %v3554
    %4033 = vmatprep.subr.mxu0 %v3560
    %4034 = vmatpush1.msra.mxu0 %v3559
    %4035 = vmatprep.subr.mxu0 %v3565
    %4036 = vmatpush1.msra.mxu0 %v3564
    %4037 = vmatprep.subr.mxu0 %v3570
    %4038 = vmatpush1.msra.mxu0 %v3569
    %4039 = vmatprep.subr.mxu0 %v3575
    %4040 = vmatpush1.msra.mxu0 %v3574
    %4041 = vmatprep.subr.mxu0 %v3580
    %4042 = vmatpush1.msra.mxu0 %v3579
    %4043 = vmatprep.subr.mxu0 %v3585
    %4044 = vmatpush1.msra.mxu0 %v3584
    %4045 = vmatprep.subr.mxu0 %v3590
    %4046 = vmatpush1.msra.mxu0 %v3589
    %4047 = vmatprep.subr.mxu0 %v3595
    %4048 = vmatpush1.msra.mxu0 %v3594
    %4049 = vmatprep.mubr.f32.mxu0 %v46
    %4050 = vmatmul.mubr.f32.gmra.mrb[0].mxu0 %v44
    %v4051 = vpop.f32.mrb[0].mxu0
    %v4052 = vadd.f32 %v3975, %v4051
    %v4053 = vpop.f32.mrb[0].mxu0
    %v4054 = vadd.f32 %v3977, %v4053
    %4055 = vmatprep.mubr.f32.mxu0 %v47
    %4056 = vmatmul.mubr.f32.gmra.mrb[0].mxu0 %v45
    %v4057 = vpop.f32.mrb[0].mxu0
    %v4058 = vadd.f32 %v3981, %v4057
    %v4059 = vpop.f32.mrb[0].mxu0
    %v4060 = vadd.f32 %v3983, %v4059
    %4061 = vdwg.mxu0
    %4062 = vmatprep.subr.mxu0 %v3600
    %4063 = vmatpush1.msra.mxu0 %v3599
    %4064 = vmatprep.subr.mxu0 %v3605
    %4065 = vmatpush1.msra.mxu0 %v3604
    %4066 = vmatprep.subr.mxu0 %v3610
    %4067 = vmatpush1.msra.mxu0 %v3609
    %4068 = vmatprep.subr.mxu0 %v3615
    %4069 = vmatpush1.msra.mxu0 %v3614
    %4070 = vmatprep.subr.mxu0 %v3620
    %4071 = vmatpush1.msra.mxu0 %v3619
    %4072 = vmatprep.subr.mxu0 %v3625
    %4073 = vmatpush1.msra.mxu0 %v3624
    %4074 = vmatprep.subr.mxu0 %v3630
    %4075 = vmatpush1.msra.mxu0 %v3629
    %4076 = vmatprep.subr.mxu0 %v3635
    %4077 = vmatpush1.msra.mxu0 %v3634
    %4078 = vmatprep.subr.mxu0 %v3640
    %4079 = vmatpush1.msra.mxu0 %v3639
    %4080 = vmatprep.subr.mxu0 %v3645
    %4081 = vmatpush1.msra.mxu0 %v3644
    %4082 = vmatprep.subr.mxu0 %v3650
    %4083 = vmatpush1.msra.mxu0 %v3649
    %4084 = vmatprep.subr.mxu0 %v3655
    %4085 = vmatpush1.msra.mxu0 %v3654
    %4086 = vmatprep.subr.mxu0 %v3660
    %4087 = vmatpush1.msra.mxu0 %v3659
    %4088 = vmatprep.subr.mxu0 %v3665
    %4089 = vmatpush1.msra.mxu0 %v3664
    %4090 = vmatprep.subr.mxu0 %v3670
    %4091 = vmatpush1.msra.mxu0 %v3669
    %4092 = vmatprep.subr.mxu0 %v3675
    %4093 = vmatpush1.msra.mxu0 %v3674
    %4094 = vmatprep.subr.mxu0 0.0
    %4095 = vmatpush1.msra.mxu0 0.0
    %4096 = vmatprep.subr.mxu0 0.0
    %4097 = vmatpush1.msra.mxu0 0.0
    %4098 = vmatprep.subr.mxu0 0.0
    %4099 = vmatpush1.msra.mxu0 0.0
    %4100 = vmatprep.subr.mxu0 0.0
    %4101 = vmatpush1.msra.mxu0 0.0
    %4102 = vmatprep.subr.mxu0 0.0
    %4103 = vmatpush1.msra.mxu0 0.0
    %4104 = vmatprep.subr.mxu0 0.0
    %4105 = vmatpush1.msra.mxu0 0.0
    %4106 = vmatprep.subr.mxu0 0.0
    %4107 = vmatpush1.msra.mxu0 0.0
    %4108 = vmatprep.subr.mxu0 0.0
    %4109 = vmatpush1.msra.mxu0 0.0
    %4110 = vmatprep.subr.mxu0 0.0
    %4111 = vmatpush1.msra.mxu0 0.0
    %4112 = vmatprep.subr.mxu0 0.0
    %4113 = vmatpush1.msra.mxu0 0.0
    %4114 = vmatprep.subr.mxu0 0.0
    %4115 = vmatpush1.msra.mxu0 0.0
    %4116 = vmatprep.subr.mxu0 0.0
    %4117 = vmatpush1.msra.mxu0 0.0
    %4118 = vmatprep.subr.mxu0 0.0
    %4119 = vmatpush1.msra.mxu0 0.0
    %4120 = vmatprep.subr.mxu0 0.0
    %4121 = vmatpush1.msra.mxu0 0.0
    %4122 = vmatprep.subr.mxu0 0.0
    %4123 = vmatpush1.msra.mxu0 0.0
    %4124 = vmatprep.subr.mxu0 0.0
    %4125 = vmatpush1.msra.mxu0 0.0
    %4126 = vmatprep.mubr.f32.mxu0 0.0
    %4127 = vmatmul.mubr.f32.gmra.mrb[0].mxu0 %v48
    %v4128 = vpop.f32.mrb[0].mxu0
    %v4129 = vadd.f32 %v4052, %v4128
    %v4130 = vpop.f32.mrb[0].mxu0
    %v4131 = vadd.f32 %v4054, %v4130
    %4132 = vmatprep.mubr.f32.mxu0 0.0
    %4133 = vmatmul.mubr.f32.gmra.mrb[0].mxu0 %v49
    %v4134 = vpop.f32.mrb[0].mxu0
    %v4135 = vadd.f32 %v4058, %v4134
    %v4136 = vpop.f32.mrb[0].mxu0
    %v4137 = vadd.f32 %v4060, %v4136
    %4138 = vdwg.mxu0
    %4139 = vmatprep.subr.mxu0 0.0
    %4140 = vmatpush1.msra.mxu0 %v3281
    %4141 = vmatprep.subr.mxu0 0.0
    %4142 = vmatpush1.msra.mxu0 %v3286
    %4143 = vmatprep.subr.mxu0 0.0
    %4144 = vmatpush1.msra.mxu0 %v3291
    %4145 = vmatprep.subr.mxu0 0.0
    %4146 = vmatpush1.msra.mxu0 %v3296
    %4147 = vmatprep.subr.mxu0 0.0
    %4148 = vmatpush1.msra.mxu0 %v3301
    %4149 = vmatprep.subr.mxu0 0.0
    %4150 = vmatpush1.msra.mxu0 %v3306
    %4151 = vmatprep.subr.mxu0 0.0
    %4152 = vmatpush1.msra.mxu0 %v3311
    %4153 = vmatprep.subr.mxu0 0.0
    %4154 = vmatpush1.msra.mxu0 %v3316
    %4155 = vmatprep.subr.mxu0 0.0
    %4156 = vmatpush1.msra.mxu0 %v3321
    %4157 = vmatprep.subr.mxu0 0.0
    %4158 = vmatpush1.msra.mxu0 %v3326
    %4159 = vmatprep.subr.mxu0 0.0
    %4160 = vmatpush1.msra.mxu0 %v3331
    %4161 = vmatprep.subr.mxu0 0.0
    %4162 = vmatpush1.msra.mxu0 %v3336
    %4163 = vmatprep.subr.mxu0 0.0
    %4164 = vmatpush1.msra.mxu0 %v3341
    %4165 = vmatprep.subr.mxu0 0.0
    %4166 = vmatpush1.msra.mxu0 %v3346
    %4167 = vmatprep.subr.mxu0 0.0
    %4168 = vmatpush1.msra.mxu0 %v3351
    %4169 = vmatprep.subr.mxu0 0.0
    %4170 = vmatpush1.msra.mxu0 %v3356
    %4171 = vmatprep.subr.mxu0 0.0
    %4172 = vmatpush1.msra.mxu0 %v3361
    %4173 = vmatprep.subr.mxu0 0.0
    %4174 = vmatpush1.msra.mxu0 %v3366
    %4175 = vmatprep.subr.mxu0 0.0
    %4176 = vmatpush1.msra.mxu0 %v3371
    %4177 = vmatprep.subr.mxu0 0.0
    %4178 = vmatpush1.msra.mxu0 %v3376
    %4179 = vmatprep.subr.mxu0 0.0
    %4180 = vmatpush1.msra.mxu0 %v3381
    %4181 = vmatprep.subr.mxu0 0.0
    %4182 = vmatpush1.msra.mxu0 %v3386
    %4183 = vmatprep.subr.mxu0 0.0
    %4184 = vmatpush1.msra.mxu0 %v3391
    %4185 = vmatprep.subr.mxu0 0.0
    %4186 = vmatpush1.msra.mxu0 %v3396
    %4187 = vmatprep.subr.mxu0 0.0
    %4188 = vmatpush1.msra.mxu0 %v3401
    %4189 = vmatprep.subr.mxu0 0.0
    %4190 = vmatpush1.msra.mxu0 %v3406
    %4191 = vmatprep.subr.mxu0 0.0
    %4192 = vmatpush1.msra.mxu0 %v3411
    %4193 = vmatprep.subr.mxu0 0.0
    %4194 = vmatpush1.msra.mxu0 %v3416
    %4195 = vmatprep.subr.mxu0 0.0
    %4196 = vmatpush1.msra.mxu0 %v3421
    %4197 = vmatprep.subr.mxu0 0.0
    %4198 = vmatpush1.msra.mxu0 %v3426
    %4199 = vmatprep.subr.mxu0 0.0
    %4200 = vmatpush1.msra.mxu0 %v3431
    %4201 = vmatprep.subr.mxu0 0.0
    %4202 = vmatpush1.msra.mxu0 %v3436
    %4203 = vmatprep.mubr.f32.mxu0 %v42
    %4204 = vmatmul.mubr.f32.gmra.mrb[0].mxu0 %v40
    %v4205 = vpop.f32.mrb[0].mxu0
    %v4206 = vadd.f32 0.0, %v4205
    %v4207 = vpop.f32.mrb[0].mxu0
    %4208 = vmatprep.mubr.f32.mxu0 %v43
    %4209 = vmatmul.mubr.f32.gmra.mrb[0].mxu0 %v41
    %v4210 = vpop.f32.mrb[0].mxu0
    %v4211 = vadd.f32 0.0, %v4210
    %v4212 = vpop.f32.mrb[0].mxu0
    %4213 = vdwg.mxu0
    %4214 = vmatprep.subr.mxu0 0.0
    %4215 = vmatpush1.msra.mxu0 %v3441
    %4216 = vmatprep.subr.mxu0 0.0
    %4217 = vmatpush1.msra.mxu0 %v3446
    %4218 = vmatprep.subr.mxu0 0.0
    %4219 = vmatpush1.msra.mxu0 %v3451
    %4220 = vmatprep.subr.mxu0 0.0
    %4221 = vmatpush1.msra.mxu0 %v3456
    %4222 = vmatprep.subr.mxu0 0.0
    %4223 = vmatpush1.msra.mxu0 %v3461
    %4224 = vmatprep.subr.mxu0 0.0
    %4225 = vmatpush1.msra.mxu0 %v3466
    %4226 = vmatprep.subr.mxu0 0.0
    %4227 = vmatpush1.msra.mxu0 %v3471
    %4228 = vmatprep.subr.mxu0 0.0
    %4229 = vmatpush1.msra.mxu0 %v3476
    %4230 = vmatprep.subr.mxu0 0.0
    %4231 = vmatpush1.msra.mxu0 %v3481
    %4232 = vmatprep.subr.mxu0 0.0
    %4233 = vmatpush1.msra.mxu0 %v3486
    %4234 = vmatprep.subr.mxu0 0.0
    %4235 = vmatpush1.msra.mxu0 %v3491
    %4236 = vmatprep.subr.mxu0 0.0
    %4237 = vmatpush1.msra.mxu0 %v3496
    %4238 = vmatprep.subr.mxu0 0.0
    %4239 = vmatpush1.msra.mxu0 %v3501
    %4240 = vmatprep.subr.mxu0 0.0
    %4241 = vmatpush1.msra.mxu0 %v3506
    %4242 = vmatprep.subr.mxu0 0.0
    %4243 = vmatpush1.msra.mxu0 %v3511
    %4244 = vmatprep.subr.mxu0 0.0
    %4245 = vmatpush1.msra.mxu0 %v3516
    %4246 = vmatprep.subr.mxu0 0.0
    %4247 = vmatpush1.msra.mxu0 %v3521
    %4248 = vmatprep.subr.mxu0 0.0
    %4249 = vmatpush1.msra.mxu0 %v3526
    %4250 = vmatprep.subr.mxu0 0.0
    %4251 = vmatpush1.msra.mxu0 %v3531
    %4252 = vmatprep.subr.mxu0 0.0
    %4253 = vmatpush1.msra.mxu0 %v3536
    %4254 = vmatprep.subr.mxu0 0.0
    %4255 = vmatpush1.msra.mxu0 %v3541
    %4256 = vmatprep.subr.mxu0 0.0
    %4257 = vmatpush1.msra.mxu0 %v3546
    %4258 = vmatprep.subr.mxu0 0.0
    %4259 = vmatpush1.msra.mxu0 %v3551
    %4260 = vmatprep.subr.mxu0 0.0
    %4261 = vmatpush1.msra.mxu0 %v3556
    %4262 = vmatprep.subr.mxu0 0.0
    %4263 = vmatpush1.msra.mxu0 %v3561
    %4264 = vmatprep.subr.mxu0 0.0
    %4265 = vmatpush1.msra.mxu0 %v3566
    %4266 = vmatprep.subr.mxu0 0.0
    %4267 = vmatpush1.msra.mxu0 %v3571
    %4268 = vmatprep.subr.mxu0 0.0
    %4269 = vmatpush1.msra.mxu0 %v3576
    %4270 = vmatprep.subr.mxu0 0.0
    %4271 = vmatpush1.msra.mxu0 %v3581
    %4272 = vmatprep.subr.mxu0 0.0
    %4273 = vmatpush1.msra.mxu0 %v3586
    %4274 = vmatprep.subr.mxu0 0.0
    %4275 = vmatpush1.msra.mxu0 %v3591
    %4276 = vmatprep.subr.mxu0 0.0
    %4277 = vmatpush1.msra.mxu0 %v3596
    %4278 = vmatprep.mubr.f32.mxu0 %v46
    %4279 = vmatmul.mubr.f32.gmra.mrb[0].mxu0 %v44
    %v4280 = vpop.f32.mrb[0].mxu0
    %v4281 = vadd.f32 %v4206, %v4280
    %v4282 = vpop.f32.mrb[0].mxu0
    %4283 = vmatprep.mubr.f32.mxu0 %v47
    %4284 = vmatmul.mubr.f32.gmra.mrb[0].mxu0 %v45
    %v4285 = vpop.f32.mrb[0].mxu0
    %v4286 = vadd.f32 %v4211, %v4285
    %v4287 = vpop.f32.mrb[0].mxu0
    %4288 = vdwg.mxu0
    %4289 = vmatprep.subr.mxu0 0.0
    %4290 = vmatpush1.msra.mxu0 %v3601
    %4291 = vmatprep.subr.mxu0 0.0
    %4292 = vmatpush1.msra.mxu0 %v3606
    %4293 = vmatprep.subr.mxu0 0.0
    %4294 = vmatpush1.msra.mxu0 %v3611
    %4295 = vmatprep.subr.mxu0 0.0
    %4296 = vmatpush1.msra.mxu0 %v3616
    %4297 = vmatprep.subr.mxu0 0.0
    %4298 = vmatpush1.msra.mxu0 %v3621
    %4299 = vmatprep.subr.mxu0 0.0
    %4300 = vmatpush1.msra.mxu0 %v3626
    %4301 = vmatprep.subr.mxu0 0.0
    %4302 = vmatpush1.msra.mxu0 %v3631
    %4303 = vmatprep.subr.mxu0 0.0
    %4304 = vmatpush1.msra.mxu0 %v3636
    %4305 = vmatprep.subr.mxu0 0.0
    %4306 = vmatpush1.msra.mxu0 %v3641
    %4307 = vmatprep.subr.mxu0 0.0
    %4308 = vmatpush1.msra.mxu0 %v3646
    %4309 = vmatprep.subr.mxu0 0.0
    %4310 = vmatpush1.msra.mxu0 %v3651
    %4311 = vmatprep.subr.mxu0 0.0
    %4312 = vmatpush1.msra.mxu0 %v3656
    %4313 = vmatprep.subr.mxu0 0.0
    %4314 = vmatpush1.msra.mxu0 %v3661
    %4315 = vmatprep.subr.mxu0 0.0
    %4316 = vmatpush1.msra.mxu0 %v3666
    %4317 = vmatprep.subr.mxu0 0.0
    %4318 = vmatpush1.msra.mxu0 %v3671
    %4319 = vmatprep.subr.mxu0 0.0
    %4320 = vmatpush1.msra.mxu0 %v3676
    %4321 = vmatprep.subr.mxu0 0.0
    %4322 = vmatpush1.msra.mxu0 0.0
    %4323 = vmatprep.subr.mxu0 0.0
    %4324 = vmatpush1.msra.mxu0 0.0
    %4325 = vmatprep.subr.mxu0 0.0
    %4326 = vmatpush1.msra.mxu0 0.0
    %4327 = vmatprep.subr.mxu0 0.0
    %4328 = vmatpush1.msra.mxu0 0.0
    %4329 = vmatprep.subr.mxu0 0.0
    %4330 = vmatpush1.msra.mxu0 0.0
    %4331 = vmatprep.subr.mxu0 0.0
    %4332 = vmatpush1.msra.mxu0 0.0
    %4333 = vmatprep.subr.mxu0 0.0
    %4334 = vmatpush1.msra.mxu0 0.0
    %4335 = vmatprep.subr.mxu0 0.0
    %4336 = vmatpush1.msra.mxu0 0.0
    %4337 = vmatprep.subr.mxu0 0.0
    %4338 = vmatpush1.msra.mxu0 0.0
    %4339 = vmatprep.subr.mxu0 0.0
    %4340 = vmatpush1.msra.mxu0 0.0
    %4341 = vmatprep.subr.mxu0 0.0
    %4342 = vmatpush1.msra.mxu0 0.0
    %4343 = vmatprep.subr.mxu0 0.0
    %4344 = vmatpush1.msra.mxu0 0.0
    %4345 = vmatprep.subr.mxu0 0.0
    %4346 = vmatpush1.msra.mxu0 0.0
    %4347 = vmatprep.subr.mxu0 0.0
    %4348 = vmatpush1.msra.mxu0 0.0
    %4349 = vmatprep.subr.mxu0 0.0
    %4350 = vmatpush1.msra.mxu0 0.0
    %4351 = vmatprep.subr.mxu0 0.0
    %4352 = vmatpush1.msra.mxu0 0.0
    %4353 = vmatprep.mubr.f32.mxu0 0.0
    %4354 = vmatmul.mubr.f32.gmra.mrb[0].mxu0 %v48
    %v4355 = vpop.f32.mrb[0].mxu0
    %v4356 = vadd.f32 %v4281, %v4355
    %v4357 = vpop.f32.mrb[0].mxu0
    %4358 = vmatprep.mubr.f32.mxu0 0.0
    %4359 = vmatmul.mubr.f32.gmra.mrb[0].mxu0 %v49
    %v4360 = vpop.f32.mrb[0].mxu0
    %v4361 = vadd.f32 %v4286, %v4360
    %v4362 = vpop.f32.mrb[0].mxu0
    %4363 = vdwg.mxu0
    %vm4364 = vcmask 130048
    %v4366 = vsel %vm4364, %v3277, 0
    %v4369 = vsel %vm4364, %v3282, 0
    %4371 = vmatprep.subr.mxu0 %v3900
    %4372 = vmatpush1.msra.mxu0 %v3898
    %4373 = vmatprep.subr.mxu0 %v3906
    %4374 = vmatpush1.msra.mxu0 %v3904
    %4375 = vmatprep.subr.mxu0 0.0
    %4376 = vmatpush1.msra.mxu0 0.0
    %4377 = vmatprep.subr.mxu0 0.0
    %4378 = vmatpush1.msra.mxu0 0.0
    %4379 = vmatprep.subr.mxu0 0.0
    %4380 = vmatpush1.msra.mxu0 0.0
    %4381 = vmatprep.subr.mxu0 0.0
    %4382 = vmatpush1.msra.mxu0 0.0
    %4383 = vmatprep.subr.mxu0 0.0
    %4384 = vmatpush1.msra.mxu0 0.0
    %4385 = vmatprep.subr.mxu0 0.0
    %4386 = vmatpush1.msra.mxu0 0.0
    %4387 = vmatprep.subr.mxu0 0.0
    %4388 = vmatpush1.msra.mxu0 0.0
    %4389 = vmatprep.subr.mxu0 0.0
    %4390 = vmatpush1.msra.mxu0 0.0
    %4391 = vmatprep.subr.mxu0 0.0
    %4392 = vmatpush1.msra.mxu0 0.0
    %4393 = vmatprep.subr.mxu0 0.0
    %4394 = vmatpush1.msra.mxu0 0.0
    %4395 = vmatprep.subr.mxu0 0.0
    %4396 = vmatpush1.msra.mxu0 0.0
    %4397 = vmatprep.subr.mxu0 0.0
    %4398 = vmatpush1.msra.mxu0 0.0
    %4399 = vmatprep.subr.mxu0 0.0
    %4400 = vmatpush1.msra.mxu0 0.0
    %4401 = vmatprep.subr.mxu0 0.0
    %4402 = vmatpush1.msra.mxu0 0.0
    %4403 = vmatprep.subr.mxu0 0.0
    %4404 = vmatpush1.msra.mxu0 0.0
    %4405 = vmatprep.subr.mxu0 0.0
    %4406 = vmatpush1.msra.mxu0 0.0
    %4407 = vmatprep.subr.mxu0 0.0
    %4408 = vmatpush1.msra.mxu0 0.0
    %4409 = vmatprep.subr.mxu0 0.0
    %4410 = vmatpush1.msra.mxu0 0.0
    %4411 = vmatprep.subr.mxu0 0.0
    %4412 = vmatpush1.msra.mxu0 0.0
    %4413 = vmatprep.subr.mxu0 0.0
    %4414 = vmatpush1.msra.mxu0 0.0
    %4415 = vmatprep.subr.mxu0 0.0
    %4416 = vmatpush1.msra.mxu0 0.0
    %4417 = vmatprep.subr.mxu0 0.0
    %4418 = vmatpush1.msra.mxu0 0.0
    %4419 = vmatprep.subr.mxu0 0.0
    %4420 = vmatpush1.msra.mxu0 0.0
    %4421 = vmatprep.subr.mxu0 0.0
    %4422 = vmatpush1.msra.mxu0 0.0
    %4423 = vmatprep.subr.mxu0 0.0
    %4424 = vmatpush1.msra.mxu0 0.0
    %4425 = vmatprep.subr.mxu0 0.0
    %4426 = vmatpush1.msra.mxu0 0.0
    %4427 = vmatprep.subr.mxu0 0.0
    %4428 = vmatpush1.msra.mxu0 0.0
    %4429 = vmatprep.subr.mxu0 0.0
    %4430 = vmatpush1.msra.mxu0 0.0
    %4431 = vmatprep.subr.mxu0 0.0
    %4432 = vmatpush1.msra.mxu0 0.0
    %4433 = vmatprep.subr.mxu0 0.0
    %4434 = vmatpush1.msra.mxu0 0.0
    %4435 = vmatprep.mubr.f32.mxu0 0.0
    %4436 = vmatmul.mubr.f32.gmra.mrb[0].mxu0 %v4366
    %v4437 = vpop.f32.mrb[0].mxu0
    %v4438 = vadd.f32 0.0, %v4437
    %v4439 = vpop.f32.mrb[0].mxu0
    %v4440 = vadd.f32 0.0, %v4439
    %4441 = vmatprep.mubr.f32.mxu0 0.0
    %4442 = vmatmul.mubr.f32.gmra.mrb[0].mxu0 %v4369
    %v4443 = vpop.f32.mrb[0].mxu0
    %v4444 = vadd.f32 0.0, %v4443
    %v4445 = vpop.f32.mrb[0].mxu0
    %v4446 = vadd.f32 0.0, %v4445
    %4447 = vdwg.mxu0
    %4448 = vmatprep.subr.mxu0 %v4131
    %4449 = vmatpush1.msra.mxu0 %v4129
    %4450 = vmatprep.subr.mxu0 %v4137
    %4451 = vmatpush1.msra.mxu0 %v4135
    %4452 = vmatprep.subr.mxu0 0.0
    %4453 = vmatpush1.msra.mxu0 0.0
    %4454 = vmatprep.subr.mxu0 0.0
    %4455 = vmatpush1.msra.mxu0 0.0
    %4456 = vmatprep.subr.mxu0 0.0
    %4457 = vmatpush1.msra.mxu0 0.0
    %4458 = vmatprep.subr.mxu0 0.0
    %4459 = vmatpush1.msra.mxu0 0.0
    %4460 = vmatprep.subr.mxu0 0.0
    %4461 = vmatpush1.msra.mxu0 0.0
    %4462 = vmatprep.subr.mxu0 0.0
    %4463 = vmatpush1.msra.mxu0 0.0
    %4464 = vmatprep.subr.mxu0 0.0
    %4465 = vmatpush1.msra.mxu0 0.0
    %4466 = vmatprep.subr.mxu0 0.0
    %4467 = vmatpush1.msra.mxu0 0.0
    %4468 = vmatprep.subr.mxu0 0.0
    %4469 = vmatpush1.msra.mxu0 0.0
    %4470 = vmatprep.subr.mxu0 0.0
    %4471 = vmatpush1.msra.mxu0 0.0
    %4472 = vmatprep.subr.mxu0 0.0
    %4473 = vmatpush1.msra.mxu0 0.0
    %4474 = vmatprep.subr.mxu0 0.0
    %4475 = vmatpush1.msra.mxu0 0.0
    %4476 = vmatprep.subr.mxu0 0.0
    %4477 = vmatpush1.msra.mxu0 0.0
    %4478 = vmatprep.subr.mxu0 0.0
    %4479 = vmatpush1.msra.mxu0 0.0
    %4480 = vmatprep.subr.mxu0 0.0
    %4481 = vmatpush1.msra.mxu0 0.0
    %4482 = vmatprep.subr.mxu0 0.0
    %4483 = vmatpush1.msra.mxu0 0.0
    %4484 = vmatprep.subr.mxu0 0.0
    %4485 = vmatpush1.msra.mxu0 0.0
    %4486 = vmatprep.subr.mxu0 0.0
    %4487 = vmatpush1.msra.mxu0 0.0
    %4488 = vmatprep.subr.mxu0 0.0
    %4489 = vmatpush1.msra.mxu0 0.0
    %4490 = vmatprep.subr.mxu0 0.0
    %4491 = vmatpush1.msra.mxu0 0.0
    %4492 = vmatprep.subr.mxu0 0.0
    %4493 = vmatpush1.msra.mxu0 0.0
    %4494 = vmatprep.subr.mxu0 0.0
    %4495 = vmatpush1.msra.mxu0 0.0
    %4496 = vmatprep.subr.mxu0 0.0
    %4497 = vmatpush1.msra.mxu0 0.0
    %4498 = vmatprep.subr.mxu0 0.0
    %4499 = vmatpush1.msra.mxu0 0.0
    %4500 = vmatprep.subr.mxu0 0.0
    %4501 = vmatpush1.msra.mxu0 0.0
    %4502 = vmatprep.subr.mxu0 0.0
    %4503 = vmatpush1.msra.mxu0 0.0
    %4504 = vmatprep.subr.mxu0 0.0
    %4505 = vmatpush1.msra.mxu0 0.0
    %4506 = vmatprep.subr.mxu0 0.0
    %4507 = vmatpush1.msra.mxu0 0.0
    %4508 = vmatprep.subr.mxu0 0.0
    %4509 = vmatpush1.msra.mxu0 0.0
    %4510 = vmatprep.subr.mxu0 0.0
    %4511 = vmatpush1.msra.mxu0 0.0
    %4512 = vmatprep.mubr.f32.mxu0 0.0
    %4513 = vmatmul.mubr.f32.gmra.mrb[0].mxu0 %v4366
    %v4514 = vpop.f32.mrb[0].mxu0
    %v4515 = vadd.f32 0.0, %v4514
    %v4516 = vpop.f32.mrb[0].mxu0
    %v4517 = vadd.f32 0.0, %v4516
    %4518 = vmatprep.mubr.f32.mxu0 0.0
    %4519 = vmatmul.mubr.f32.gmra.mrb[0].mxu0 %v4369
    %v4520 = vpop.f32.mrb[0].mxu0
    %v4521 = vadd.f32 0.0, %v4520
    %v4522 = vpop.f32.mrb[0].mxu0
    %v4523 = vadd.f32 0.0, %v4522
    %4524 = vdwg.mxu0
    %4525 = vmatprep.subr.mxu0 0.0
    %4526 = vmatpush1.msra.mxu0 %v4356
    %4527 = vmatprep.subr.mxu0 0.0
    %4528 = vmatpush1.msra.mxu0 %v4361
    %4529 = vmatprep.subr.mxu0 0.0
    %4530 = vmatpush1.msra.mxu0 0.0
    %4531 = vmatprep.subr.mxu0 0.0
    %4532 = vmatpush1.msra.mxu0 0.0
    %4533 = vmatprep.subr.mxu0 0.0
    %4534 = vmatpush1.msra.mxu0 0.0
    %4535 = vmatprep.subr.mxu0 0.0
    %4536 = vmatpush1.msra.mxu0 0.0
    %4537 = vmatprep.subr.mxu0 0.0
    %4538 = vmatpush1.msra.mxu0 0.0
    %4539 = vmatprep.subr.mxu0 0.0
    %4540 = vmatpush1.msra.mxu0 0.0
    %4541 = vmatprep.subr.mxu0 0.0
    %4542 = vmatpush1.msra.mxu0 0.0
    %4543 = vmatprep.subr.mxu0 0.0
    %4544 = vmatpush1.msra.mxu0 0.0
    %4545 = vmatprep.subr.mxu0 0.0
    %4546 = vmatpush1.msra.mxu0 0.0
    %4547 = vmatprep.subr.mxu0 0.0
    %4548 = vmatpush1.msra.mxu0 0.0
    %4549 = vmatprep.subr.mxu0 0.0
    %4550 = vmatpush1.msra.mxu0 0.0
    %4551 = vmatprep.subr.mxu0 0.0
    %4552 = vmatpush1.msra.mxu0 0.0
    %4553 = vmatprep.subr.mxu0 0.0
    %4554 = vmatpush1.msra.mxu0 0.0
    %4555 = vmatprep.subr.mxu0 0.0
    %4556 = vmatpush1.msra.mxu0 0.0
    %4557 = vmatprep.subr.mxu0 0.0
    %4558 = vmatpush1.msra.mxu0 0.0
    %4559 = vmatprep.subr.mxu0 0.0
    %4560 = vmatpush1.msra.mxu0 0.0
    %4561 = vmatprep.subr.mxu0 0.0
    %4562 = vmatpush1.msra.mxu0 0.0
    %4563 = vmatprep.subr.mxu0 0.0
    %4564 = vmatpush1.msra.mxu0 0.0
    %4565 = vmatprep.subr.mxu0 0.0
    %4566 = vmatpush1.msra.mxu0 0.0
    %4567 = vmatprep.subr.mxu0 0.0
    %4568 = vmatpush1.msra.mxu0 0.0
    %4569 = vmatprep.subr.mxu0 0.0
    %4570 = vmatpush1.msra.mxu0 0.0
    %4571 = vmatprep.subr.mxu0 0.0
    %4572 = vmatpush1.msra.mxu0 0.0
    %4573 = vmatprep.subr.mxu0 0.0
    %4574 = vmatpush1.msra.mxu0 0.0
    %4575 = vmatprep.subr.mxu0 0.0
    %4576 = vmatpush1.msra.mxu0 0.0
    %4577 = vmatprep.subr.mxu0 0.0
    %4578 = vmatpush1.msra.mxu0 0.0
    %4579 = vmatprep.subr.mxu0 0.0
    %4580 = vmatpush1.msra.mxu0 0.0
    %4581 = vmatprep.subr.mxu0 0.0
    %4582 = vmatpush1.msra.mxu0 0.0
    %4583 = vmatprep.subr.mxu0 0.0
    %4584 = vmatpush1.msra.mxu0 0.0
    %4585 = vmatprep.subr.mxu0 0.0
    %4586 = vmatpush1.msra.mxu0 0.0
    %4587 = vmatprep.subr.mxu0 0.0
    %4588 = vmatpush1.msra.mxu0 0.0
    %4589 = vmatprep.mubr.f32.mxu0 0.0
    %4590 = vmatmul.mubr.f32.gmra.mrb[0].mxu0 %v4366
    %v4591 = vpop.f32.mrb[0].mxu0
    %v4592 = vadd.f32 0.0, %v4591
    %v4593 = vpop.f32.mrb[0].mxu0
    %4594 = vmatprep.mubr.f32.mxu0 0.0
    %4595 = vmatmul.mubr.f32.gmra.mrb[0].mxu0 %v4369
    %v4596 = vpop.f32.mrb[0].mxu0
    %v4597 = vadd.f32 0.0, %v4596
    %v4598 = vpop.f32.mrb[0].mxu0
    %4599 = vdwg.mxu0
    %v4600 = vmul.f32 %v4438, %v4440
    %v4601 = vmul.f32 %v4444, %v4446
    %v4602 = vmul.f32 %v4600, 0.020408163
    %v4603 = vmul.f32 %v4601, 0.020408163
    %v4604 = vsub.f32 %v4592, %v4602
    %v4605 = vsub.f32 %v4597, %v4603
    %v4606 = vmul.f32 %v4438, %v4438
    %v4607 = vmul.f32 %v4444, %v4444
    %v4608 = vmul.f32 %v4606, 0.020408163
    %v4609 = vmul.f32 %v4607, 0.020408163
    %v4610 = vsub.f32 %v4515, %v4608
    %v4611 = vsub.f32 %v4521, %v4609
    %v4612 = vmul.f32 %v4440, %v4440
    %v4613 = vmul.f32 %v4446, %v4446
    %v4614 = vmul.f32 %v4612, 0.020408163
    %v4615 = vmul.f32 %v4613, 0.020408163
    %v4616 = vsub.f32 %v4517, %v4614
    %v4617 = vsub.f32 %v4523, %v4615
    %v4618 = vmul.f32 %v4604, %v4604
    %v4619 = vmul.f32 %v4605, %v4605
    %v4620 = vmul.f32 %v4610, %v4616
    %v4621 = vmul.f32 %v4611, %v4617
    %v4622 = vadd.f32 %v4620, 1e-05
    %v4623 = vadd.f32 %v4621, 1e-05
    %v4624 = vrcp.pop %v4622
    %v4625 = vmul.f32 %v4618, %v4624
    %v4626 = vrcp.pop %v4623
    %v4627 = vmul.f32 %v4619, %v4626
    %v4628 = vadd.f32 %v4625, %v4627
    %4629 = vadd.xlane.f32.xlu0 %v4628
    %v4630 = vpop.xlane.xlu0 %4629
    %v4631 = vrot.slane %v4630, 4
    %v4632 = vadd.f32 %v4630, %v4631
    %v4633 = vrot.slane %v4632, 2
    %v4634 = vadd.f32 %v4632, %v4633
    %v4635 = vrot.slane %v4634, 1
    %v4636 = vadd.f32 %v4634, %v4635
    %s4637 = vtos %v4636
    %vm4638 = vcmp.eq.s32.totalorder %v51, 0
    %vm4639 = vcmp.eq.s32.totalorder %v132, 0
    %vm4640 = vmand %vm4638, %vm4639
    %v4641 = vstv %s4637
    %v4642 = vsel %vm4640, %v4641, 0.0
    %4643 = vst [vmem:[#allocation7] sm:$0xff] %v4642
    // Predicated region
    $region18: #{tpu_custom_call.1} parent=1 // pred_check
      _
    $region19: #{tpu_custom_call.1} parent=1 // pred_check_branch
      %4645 = sbr.rel (0) target = $region21
    $region20: #{tpu_custom_call.1} parent=1 // pred_region
      %s4647 = ssub.s32 128, 128
      %4648 = vsyncadd [#allocation4], %s4647
      %s4650 = sshll.u32 [#allocation7], 4
      %s4651 = int_to_ptr.vmem [resolvable:$true] %s4650
      %4653 = dma.vmem_to_hbm [thread:$0]  %s4651, 128, %s2, [#allocation4]
    $region21: #{tpu_custom_call.1} parent=1 // pred_fallthru
      _
    // Predicated region
    $region22: #{tpu_custom_call.1} parent=1 // pred_check
      _
    $region23: #{tpu_custom_call.1} parent=1 // pred_check_branch
      %4655 = sbr.rel (0) target = $region25
    $region24: #{tpu_custom_call.1} parent=1 // pred_region
      %4656 = dma.done [#allocation4], 128
    $region25: #{tpu_custom_call.1} parent=1 // pred_fallthru
      _
    %4657 = vsyncpa [#allocation3], 1
    %4658 = vsyncpa [#allocation6], 1
    %4659 = vsyncpa [#allocation4], 1

</llo_original>
